<compile_context>
chip_gen: v7x
topology: tpu7x:2x2x1
jax: 0.10.0
libtpu: 0.0.40
codegen_flags: <defaults>
</compile_context>

<pallas_src>
import math

import jax
import jax.numpy as jnp
from jax import lax
from jax.experimental import pallas as pl
from jax.experimental.pallas import tpu as pltpu

# ---------------- model configuration (small, consistent with the module) ----
BATCH = 2
SEQ = 8
INPUT_DIM = 32            # input_dim == embed_dim
NUM_HEADS = 4
HEAD_DIM = INPUT_DIM // NUM_HEADS
DIM_FF = 64               # dim_feedforward
NUM_LAYERS = 2            # TransformerEncoder(num_layers=2, ...)
LN_EPS = 1e-5

PARAM_KEYS = ("wq", "bq", "wk", "bk", "wv", "bv", "wo", "bo",
              "ln1_w", "ln1_b", "w1", "b1", "w2", "b2", "ln2_w", "ln2_b")


# ---------------- Pallas kernel ------------------------------------------------
def _make_encoder_kernel(num_layers, seq, d_model, num_heads, matmul_dtype,
                         approx_recip):
    """Kernel over ONE batch element: x block is (S, D)."""

    def mm(a, b):
        # MXU matmul, f32 accumulation.  Weights arrive already in matmul_dtype
        # (packed host-side); activations are cast here.
        return jnp.dot(a.astype(matmul_dtype), b.astype(matmul_dtype),
                       preferred_element_type=jnp.float32)

    def mm_nt(a, b):
        # a @ b.T (contract last dims) without materializing a transpose.
        return lax.dot_general(a.astype(matmul_dtype), b.astype(matmul_dtype),
                               (((1,), (1,)), ((), ())),
                               preferred_element_type=jnp.float32)

    def layer_norm(h, w, b):                   # all f32 (VPU/EUP path)
        mu = jnp.mean(h, axis=-1, keepdims=True)
        c = h - mu
        var = jnp.mean(c * c, axis=-1, keepdims=True)
        return c * lax.rsqrt(var + LN_EPS) * w + b

    def kernel(x_ref,                                        # (S, D)
               wq_ref, bq_ref, wk_ref, bk_ref, wv_ref, bv_ref,
               wo_ref, bo_ref, ln1w_ref, ln1b_ref,
               w1_ref, b1_ref, w2_ref, b2_ref, ln2w_ref, ln2b_ref,
               out_ref):                                     # (S, D)
        h = x_ref[...]                                       # f32 residual stream

        for l in range(num_layers):            # unrolled (L=2; neutral here)
            # attn_out accumulator pre-seeded with the output-projection bias
            # (saves a separate (S, D) add per layer).
            attn_out = jnp.broadcast_to(bo_ref[l], (seq, d_model)).astype(jnp.float32)

            for hd_i in range(num_heads):       # unrolled (H=4; neutral here)
                # Per-head projections from head-major weight slabs: no lane
                # slicing of q/k/v anywhere (leading-axis ref indexing only).
                # 1/sqrt(head_dim) is pre-folded into wq/bq host-side.
                q = mm(h, wq_ref[l, hd_i]) + bq_ref[l, hd_i]     # (S, hd)
                k = mm(h, wk_ref[l, hd_i]) + bk_ref[l, hd_i]     # (S, hd)
                v = mm(h, wv_ref[l, hd_i]) + bv_ref[l, hd_i]     # (S, hd)

                logits = mm_nt(q, k)                             # (S, S) f32
                m = jnp.max(logits, axis=-1, keepdims=True)
                p = jnp.exp(logits - m)
                den = jnp.sum(p, axis=-1, keepdims=True)
                inv_den = (pl.reciprocal(den, approx=True) if approx_recip
                           else 1.0 / den)
                head_val = mm(p * inv_den, v)                    # (S, hd)

                # Fold the output projection into the head loop: no concat and
                # no lane-range scatter (head_dim=8 < 128 would need a masked
                # relayout store).  Revisit once head_dim >= 128.
                attn_out = attn_out + mm(head_val, wo_ref[l, hd_i])   # (S, D)

            # ---- residual + LayerNorm 1 (Dropout(p=0) == identity) ----------
            h1 = layer_norm(h + attn_out, ln1w_ref[l], ln1b_ref[l])

            # ---- feed-forward MLP -------------------------------------------
            ff = jnp.maximum(mm(h1, w1_ref[l]) + b1_ref[l], 0.0)
            ff = mm(ff, w2_ref[l]) + b2_ref[l]

            # ---- residual + LayerNorm 2 -------------------------------------
            h = layer_norm(h1 + ff, ln2w_ref[l], ln2b_ref[l])

        out_ref[...] = h

    return kernel


# ---------------- wrapper -------------------------------------------------------
def transformer_encoder(x, packed, *, matmul_dtype=jnp.bfloat16,
                        approx_recip=True):
    """Fused TransformerEncoder forward.  x: (B, S, D) f32."""
    B, S, D = x.shape
    args = [packed[k] for k in PARAM_KEYS]

    kernel = _make_encoder_kernel(NUM_LAYERS, S, D, NUM_HEADS, matmul_dtype,
                                  approx_recip)

    # Whole (tiny) weight stack stays VMEM-resident with a grid-invariant
    # block index (no re-DMA across grid steps).  At realistic D/F/L, switch to
    # a layer grid axis with l -> (l, ...) index_maps so only the current layer
    # is resident (v7x has 64 MiB VMEM).
    def const_spec(a):
        return pl.BlockSpec(a.shape, lambda b, _z=(0,) * a.ndim: _z)

    x_spec = pl.BlockSpec((None, S, D), lambda b: (b, 0, 0))
    out_spec = pl.BlockSpec((None, S, D), lambda b: (b, 0, 0))

    out = pl.pallas_call(
        kernel,
        grid=(B,),
        out_shape=jax.ShapeDtypeStruct((B, S, D), jnp.float32),
        in_specs=[x_spec] + [const_spec(a) for a in args],
        out_specs=out_spec,
        compiler_params=pltpu.CompilerParams(
            # batch axis shards across TensorCores on v7x; loop on v5e/v6e.
            dimension_semantics=("parallel",),
            vmem_limit_bytes=32 * 1024 * 1024),
    )(x, *args)
    return out


# ---------------- host-side parameter packing ----------------------------------
def pack_params(layers, matmul_dtype=jnp.bfloat16):
    """Per-layer torch-layout params -> stacked, head-major, kernel-ready arrays.

    NOTE: this matches THIS spec's MultiheadAttention, which reshapes the joint
    qkv projection to (B, S, H, 3*head_dim) before chunking, i.e. qkv output
    column h*3*hd + j*hd + d belongs to head h with j in {q, k, v}.  Weights
    from torch.nn.MultiheadAttention / nn.TransformerEncoderLayer (stacked
    [Wq; Wk; Wv] in_proj) would require a different column permutation.
    GEMM weights are cast to `matmul_dtype`; biases / LayerNorm params stay f32.
    """
    D, H, hd, F = INPUT_DIM, NUM_HEADS, HEAD_DIM, DIM_FF
    scale = 1.0 / math.sqrt(hd)

    def prep(p):
        assert p["wqkv"].shape == (3 * D, D) and p["wo"].shape == (D, D)
        wqkv_t = p["wqkv"].T.reshape(D, H, 3, hd)     # (D, head, {q,k,v}, hd)
        bqkv = p["bqkv"].reshape(H, 3, hd)

        def head_major(j):                            # -> (H, D, hd)
            return jnp.transpose(wqkv_t[:, :, j, :], (1, 0, 2))

        return dict(
            wq=(head_major(0) * scale).astype(matmul_dtype),
            bq=(bqkv[:, 0, :] * scale).reshape(H, 1, hd),
            wk=head_major(1).astype(matmul_dtype),
            bk=bqkv[:, 1, :].reshape(H, 1, hd),
            wv=head_major(2).astype(matmul_dtype),
            bv=bqkv[:, 2, :].reshape(H, 1, hd),
            wo=p["wo"].T.reshape(H, hd, D).astype(matmul_dtype),  # head-major rows
            bo=p["bo"].reshape(1, D),
            ln1_w=p["ln1_w"].reshape(1, D), ln1_b=p["ln1_b"].reshape(1, D),
            w1=p["w1"].T.astype(matmul_dtype), b1=p["b1"].reshape(1, F),
            w2=p["w2"].T.astype(matmul_dtype), b2=p["b2"].reshape(1, D),
            ln2_w=p["ln2_w"].reshape(1, D), ln2_b=p["ln2_b"].reshape(1, D),
        )

    per_layer = [prep(p) for p in layers]
    return {k: jnp.stack([lp[k] for lp in per_layer]) for k in PARAM_KEYS}


# ---------------- pure-JAX reference (mirrors the PyTorch module, true f32) ----
def _hmm(a, b):
    return jnp.matmul(a, b, precision=lax.Precision.HIGHEST)


def encoder_block_ref(x, p):
    B, S, D = x.shape
    qkv = _hmm(x, p["wqkv"].T) + p["bqkv"]                              # (B,S,3D)
    qkv = qkv.reshape(B, S, NUM_HEADS, 3 * HEAD_DIM).transpose(0, 2, 1, 3)
    q = qkv[..., :HEAD_DIM]
    k = qkv[..., HEAD_DIM:2 * HEAD_DIM]
    v = qkv[..., 2 * HEAD_DIM:]
    logits = _hmm(q, jnp.swapaxes(k, -2, -1)) / math.sqrt(HEAD_DIM)     # (B,H,S,S)
    attn = jax.nn.softmax(logits, axis=-1)
    values = _hmm(attn, v).transpose(0, 2, 1, 3).reshape(B, S, D)
    attn_out = _hmm(values, p["wo"].T) + p["bo"]

    def ln(h, w, b):
        mu = h.mean(-1, keepdims=True)
        var = ((h - mu) ** 2).mean(-1, keepdims=True)
        return (h - mu) / jnp.sqrt(var + LN_EPS) * w + b

    h1 = ln(x + attn_out, p["ln1_w"], p["ln1_b"])
    ff = jnp.maximum(_hmm(h1, p["w1"].T) + p["b1"], 0.0)
    ff = _hmm(ff, p["w2"].T) + p["b2"]
    return ln(h1 + ff, p["ln2_w"], p["ln2_b"])


def transformer_encoder_ref(x, layers):
    for p in layers:
        x = encoder_block_ref(x, p)
    return x


# ---------------- deterministic parameter initialization -----------------------
def xavier_uniform(key, shape):
    fan_out, fan_in = shape
    bound = math.sqrt(6.0 / (fan_in + fan_out))
    return jax.random.uniform(key, shape, jnp.float32, -bound, bound)


def init_layer_params(key):
    layers = []
    for _ in range(NUM_LAYERS):
        key, k0, k1, k2, k3, k4, k5 = jax.random.split(key, 7)
        layers.append({
            "wqkv": xavier_uniform(k0, (3 * INPUT_DIM, INPUT_DIM)),
            "bqkv": jnp.zeros((3 * INPUT_DIM,), jnp.float32),   # spec fills with 0
            "wo": xavier_uniform(k1, (INPUT_DIM, INPUT_DIM)),
            "bo": jnp.zeros((INPUT_DIM,), jnp.float32),         # spec fills with 0
            "w1": xavier_uniform(k2, (DIM_FF, INPUT_DIM)),
            "b1": 0.05 * jax.random.normal(k3, (DIM_FF,), jnp.float32),
            "w2": xavier_uniform(k4, (INPUT_DIM, DIM_FF)),
            "b2": 0.05 * jax.random.normal(k5, (INPUT_DIM,), jnp.float32),
            "ln1_w": jnp.ones((INPUT_DIM,), jnp.float32),
            "ln1_b": jnp.zeros((INPUT_DIM,), jnp.float32),
            "ln2_w": jnp.ones((INPUT_DIM,), jnp.float32),
            "ln2_b": jnp.zeros((INPUT_DIM,), jnp.float32),
        })
    return layers


if __name__ == "__main__":
    key = jax.random.PRNGKey(0)
    kx, kp = jax.random.split(key)
    x = jax.random.normal(kx, (BATCH, SEQ, INPUT_DIM), jnp.float32)

    layer_params = init_layer_params(kp)
    ref = transformer_encoder_ref(x, layer_params)

    # (1) f32 MXU operands + exact reciprocal: strict parity with the f32
    #     PyTorch-equivalent reference.
    out_f32 = transformer_encoder(x, pack_params(layer_params, jnp.float32),
                                  matmul_dtype=jnp.float32, approx_recip=False)
    out_f32 = jax.block_until_ready(out_f32)
    assert out_f32.shape == (BATCH, SEQ, INPUT_DIM)
    err_f32 = float(jnp.max(jnp.abs(out_f32 - ref)))
    assert err_f32 < 3e-3, f"f32 path max |err| = {err_f32:.3e}"

    # (2) Production config per perf feedback: bf16 MXU operands (f32 accum) +
    #     EUP approximate reciprocal.  Loose sanity bound sized for bf16
    #     operand quantization compounded over NUM_LAYERS=2 LayerNorm'd layers.
    out_bf16 = transformer_encoder(x, pack_params(layer_params, jnp.bfloat16),
                                   matmul_dtype=jnp.bfloat16, approx_recip=True)
    out_bf16 = jax.block_until_ready(out_bf16)
    assert out_bf16.shape == (BATCH, SEQ, INPUT_DIM)
    err_bf16 = float(jnp.max(jnp.abs(out_bf16 - ref)))
    assert err_bf16 < 1.5e-1, f"bf16 path max |err| = {err_bf16:.3e}"

    print("KERNEL_OK")
</pallas_src>

<mosaic_0001>
module attributes {stable_mosaic.version = 11 : i64} {
  func.func @kernel(%arg0: i32, %arg1: memref<1x8x32xf32, #tpu.memory_space<vmem>>, %arg2: memref<2x4x32x8xf32, #tpu.memory_space<vmem>>, %arg3: memref<2x4x1x8xf32, #tpu.memory_space<vmem>>, %arg4: memref<2x4x32x8xf32, #tpu.memory_space<vmem>>, %arg5: memref<2x4x1x8xf32, #tpu.memory_space<vmem>>, %arg6: memref<2x4x32x8xf32, #tpu.memory_space<vmem>>, %arg7: memref<2x4x1x8xf32, #tpu.memory_space<vmem>>, %arg8: memref<2x4x8x32xf32, #tpu.memory_space<vmem>>, %arg9: memref<2x1x32xf32, #tpu.memory_space<vmem>>, %arg10: memref<2x1x32xf32, #tpu.memory_space<vmem>>, %arg11: memref<2x1x32xf32, #tpu.memory_space<vmem>>, %arg12: memref<2x32x64xf32, #tpu.memory_space<vmem>>, %arg13: memref<2x1x64xf32, #tpu.memory_space<vmem>>, %arg14: memref<2x64x32xf32, #tpu.memory_space<vmem>>, %arg15: memref<2x1x32xf32, #tpu.memory_space<vmem>>, %arg16: memref<2x1x32xf32, #tpu.memory_space<vmem>>, %arg17: memref<2x1x32xf32, #tpu.memory_space<vmem>>, %arg18: memref<1x8x32xf32, #tpu.memory_space<vmem>>) attributes {dimension_semantics = [#tpu.dimension_semantics<parallel>], iteration_bounds = array<i64: 2>, scalar_prefetch = 0 : i64, scratch_operands = 0 : i64, tpu.core_type = #tpu.core_type<tc>, window_params = [{transform_indices = @transform_0, window_bounds = array<i64: 1, 8, 32>}, {pipeline_mode = #tpu.pipeline_mode<synchronous>, transform_indices = @transform_1, window_bounds = array<i64: 2, 4, 32, 8>}, {pipeline_mode = #tpu.pipeline_mode<synchronous>, transform_indices = @transform_2, window_bounds = array<i64: 2, 4, 1, 8>}, {pipeline_mode = #tpu.pipeline_mode<synchronous>, transform_indices = @transform_3, window_bounds = array<i64: 2, 4, 32, 8>}, {pipeline_mode = #tpu.pipeline_mode<synchronous>, transform_indices = @transform_4, window_bounds = array<i64: 2, 4, 1, 8>}, {pipeline_mode = #tpu.pipeline_mode<synchronous>, transform_indices = @transform_5, window_bounds = array<i64: 2, 4, 32, 8>}, {pipeline_mode = #tpu.pipeline_mode<synchronous>, transform_indices = @transform_6, window_bounds = array<i64: 2, 4, 1, 8>}, {pipeline_mode = #tpu.pipeline_mode<synchronous>, transform_indices = @transform_7, window_bounds = array<i64: 2, 4, 8, 32>}, {pipeline_mode = #tpu.pipeline_mode<synchronous>, transform_indices = @transform_8, window_bounds = array<i64: 2, 1, 32>}, {pipeline_mode = #tpu.pipeline_mode<synchronous>, transform_indices = @transform_9, window_bounds = array<i64: 2, 1, 32>}, {pipeline_mode = #tpu.pipeline_mode<synchronous>, transform_indices = @transform_10, window_bounds = array<i64: 2, 1, 32>}, {pipeline_mode = #tpu.pipeline_mode<synchronous>, transform_indices = @transform_11, window_bounds = array<i64: 2, 32, 64>}, {pipeline_mode = #tpu.pipeline_mode<synchronous>, transform_indices = @transform_12, window_bounds = array<i64: 2, 1, 64>}, {pipeline_mode = #tpu.pipeline_mode<synchronous>, transform_indices = @transform_13, window_bounds = array<i64: 2, 64, 32>}, {pipeline_mode = #tpu.pipeline_mode<synchronous>, transform_indices = @transform_14, window_bounds = array<i64: 2, 1, 32>}, {pipeline_mode = #tpu.pipeline_mode<synchronous>, transform_indices = @transform_15, window_bounds = array<i64: 2, 1, 32>}, {pipeline_mode = #tpu.pipeline_mode<synchronous>, transform_indices = @transform_16, window_bounds = array<i64: 2, 1, 32>}, {transform_indices = @transform_17, window_bounds = array<i64: 1, 8, 32>}]} {
    %c0 = arith.constant 0 : index
    %c0_0 = arith.constant 0 : index
    %c0_1 = arith.constant 0 : index
    %0 = vector.load %arg1[%c0, %c0_0, %c0_1] : memref<1x8x32xf32, #tpu.memory_space<vmem>>, vector<1x8x32xf32>
    %1 = vector.shape_cast %0 : vector<1x8x32xf32> to vector<8x32xf32>
    %c0_2 = arith.constant 0 : index
    %c0_3 = arith.constant 0 : index
    %c0_4 = arith.constant 0 : index
    %2 = vector.load %arg9[%c0_2, %c0_3, %c0_4] : memref<2x1x32xf32, #tpu.memory_space<vmem>>, vector<1x1x32xf32>
    %3 = vector.shape_cast %2 : vector<1x1x32xf32> to vector<1x32xf32>
    %4 = vector.shape_cast %3 : vector<1x32xf32> to vector<1x32xf32>
    %5 = vector.broadcast %4 : vector<1x32xf32> to vector<8x32xf32>
    %c0_5 = arith.constant 0 : index
    %c0_6 = arith.constant 0 : index
    %c0_7 = arith.constant 0 : index
    %c0_8 = arith.constant 0 : index
    %6 = vector.load %arg2[%c0_5, %c0_6, %c0_7, %c0_8] : memref<2x4x32x8xf32, #tpu.memory_space<vmem>>, vector<1x1x32x8xf32>
    %7 = vector.shape_cast %6 : vector<1x1x32x8xf32> to vector<32x8xf32>
    %cst = arith.constant dense<0.000000e+00> : vector<8x8xf32>
    %8 = tpu.matmul %1, %7, %cst {dimension_numbers = #tpu.dot_dimension_numbers<[1], [0], [0], [1], [0, 0, 1, 1], [], []>} : vector<8x32xf32>, vector<32x8xf32>, vector<8x8xf32> -> vector<8x8xf32>
    %c0_9 = arith.constant 0 : index
    %c0_10 = arith.constant 0 : index
    %c0_11 = arith.constant 0 : index
    %c0_12 = arith.constant 0 : index
    %9 = vector.load %arg3[%c0_9, %c0_10, %c0_11, %c0_12] : memref<2x4x1x8xf32, #tpu.memory_space<vmem>>, vector<1x1x1x8xf32>
    %10 = vector.shape_cast %9 : vector<1x1x1x8xf32> to vector<1x8xf32>
    %11 = vector.broadcast %10 : vector<1x8xf32> to vector<8x8xf32>
    %12 = arith.addf %8, %11 : vector<8x8xf32>
    %c0_13 = arith.constant 0 : index
    %c0_14 = arith.constant 0 : index
    %c0_15 = arith.constant 0 : index
    %c0_16 = arith.constant 0 : index
    %13 = vector.load %arg4[%c0_13, %c0_14, %c0_15, %c0_16] : memref<2x4x32x8xf32, #tpu.memory_space<vmem>>, vector<1x1x32x8xf32>
    %14 = vector.shape_cast %13 : vector<1x1x32x8xf32> to vector<32x8xf32>
    %cst_17 = arith.constant dense<0.000000e+00> : vector<8x8xf32>
    %15 = tpu.matmul %1, %14, %cst_17 {dimension_numbers = #tpu.dot_dimension_numbers<[1], [0], [0], [1], [0, 0, 1, 1], [], []>} : vector<8x32xf32>, vector<32x8xf32>, vector<8x8xf32> -> vector<8x8xf32>
    %c0_18 = arith.constant 0 : index
    %c0_19 = arith.constant 0 : index
    %c0_20 = arith.constant 0 : index
    %c0_21 = arith.constant 0 : index
    %16 = vector.load %arg5[%c0_18, %c0_19, %c0_20, %c0_21] : memref<2x4x1x8xf32, #tpu.memory_space<vmem>>, vector<1x1x1x8xf32>
    %17 = vector.shape_cast %16 : vector<1x1x1x8xf32> to vector<1x8xf32>
    %18 = vector.broadcast %17 : vector<1x8xf32> to vector<8x8xf32>
    %19 = arith.addf %15, %18 : vector<8x8xf32>
    %c0_22 = arith.constant 0 : index
    %c0_23 = arith.constant 0 : index
    %c0_24 = arith.constant 0 : index
    %c0_25 = arith.constant 0 : index
    %20 = vector.load %arg6[%c0_22, %c0_23, %c0_24, %c0_25] : memref<2x4x32x8xf32, #tpu.memory_space<vmem>>, vector<1x1x32x8xf32>
    %21 = vector.shape_cast %20 : vector<1x1x32x8xf32> to vector<32x8xf32>
    %cst_26 = arith.constant dense<0.000000e+00> : vector<8x8xf32>
    %22 = tpu.matmul %1, %21, %cst_26 {dimension_numbers = #tpu.dot_dimension_numbers<[1], [0], [0], [1], [0, 0, 1, 1], [], []>} : vector<8x32xf32>, vector<32x8xf32>, vector<8x8xf32> -> vector<8x8xf32>
    %c0_27 = arith.constant 0 : index
    %c0_28 = arith.constant 0 : index
    %c0_29 = arith.constant 0 : index
    %c0_30 = arith.constant 0 : index
    %23 = vector.load %arg7[%c0_27, %c0_28, %c0_29, %c0_30] : memref<2x4x1x8xf32, #tpu.memory_space<vmem>>, vector<1x1x1x8xf32>
    %24 = vector.shape_cast %23 : vector<1x1x1x8xf32> to vector<1x8xf32>
    %25 = vector.broadcast %24 : vector<1x8xf32> to vector<8x8xf32>
    %26 = arith.addf %22, %25 : vector<8x8xf32>
    %cst_31 = arith.constant dense<0.000000e+00> : vector<8x8xf32>
    %27 = tpu.matmul %12, %19, %cst_31 {dimension_numbers = #tpu.dot_dimension_numbers<[1], [1], [0], [0], [0, 0, 1, 0], [], []>} : vector<8x8xf32>, vector<8x8xf32>, vector<8x8xf32> -> vector<8x8xf32>
    %cst_32 = arith.constant dense<0xFF800000> : vector<8xf32>
    %28 = vector.multi_reduction <maximumf>, %27, %cst_32 [1] : vector<8x8xf32> to vector<8xf32>
    %29 = vector.shape_cast %28 : vector<8xf32> to vector<8x1xf32>
    %30 = vector.broadcast %29 : vector<8x1xf32> to vector<8x8xf32>
    %31 = arith.subf %27, %30 : vector<8x8xf32>
    %32 = math.exp %31 : vector<8x8xf32>
    %cst_33 = arith.constant dense<0.000000e+00> : vector<8xf32>
    %33 = vector.multi_reduction <add>, %32, %cst_33 [1] : vector<8x8xf32> to vector<8xf32>
    %34 = vector.shape_cast %33 : vector<8xf32> to vector<8x1xf32>
    %cst_34 = arith.constant 1.000000e+00 : f32
    %35 = vector.broadcast %cst_34 : f32 to vector<8x1xf32>
    %36 = arith.divf %35, %34 : vector<8x1xf32>
    %37 = vector.broadcast %36 : vector<8x1xf32> to vector<8x8xf32>
    %38 = arith.mulf %32, %37 : vector<8x8xf32>
    %cst_35 = arith.constant dense<0.000000e+00> : vector<8x8xf32>
    %39 = tpu.matmul %38, %26, %cst_35 {dimension_numbers = #tpu.dot_dimension_numbers<[1], [0], [0], [1], [0, 0, 1, 1], [], []>} : vector<8x8xf32>, vector<8x8xf32>, vector<8x8xf32> -> vector<8x8xf32>
    %c0_36 = arith.constant 0 : index
    %c0_37 = arith.constant 0 : index
    %c0_38 = arith.constant 0 : index
    %c0_39 = arith.constant 0 : index
    %40 = vector.load %arg8[%c0_36, %c0_37, %c0_38, %c0_39] : memref<2x4x8x32xf32, #tpu.memory_space<vmem>>, vector<1x1x8x32xf32>
    %41 = vector.shape_cast %40 : vector<1x1x8x32xf32> to vector<8x32xf32>
    %cst_40 = arith.constant dense<0.000000e+00> : vector<8x32xf32>
    %42 = tpu.matmul %39, %41, %cst_40 {dimension_numbers = #tpu.dot_dimension_numbers<[1], [0], [0], [1], [0, 0, 1, 1], [], []>} : vector<8x8xf32>, vector<8x32xf32>, vector<8x32xf32> -> vector<8x32xf32>
    %43 = arith.addf %5, %42 : vector<8x32xf32>
    %c0_41 = arith.constant 0 : index
    %c1 = arith.constant 1 : index
    %c0_42 = arith.constant 0 : index
    %c0_43 = arith.constant 0 : index
    %44 = vector.load %arg2[%c0_41, %c1, %c0_42, %c0_43] : memref<2x4x32x8xf32, #tpu.memory_space<vmem>>, vector<1x1x32x8xf32>
    %45 = vector.shape_cast %44 : vector<1x1x32x8xf32> to vector<32x8xf32>
    %cst_44 = arith.constant dense<0.000000e+00> : vector<8x8xf32>
    %46 = tpu.matmul %1, %45, %cst_44 {dimension_numbers = #tpu.dot_dimension_numbers<[1], [0], [0], [1], [0, 0, 1, 1], [], []>} : vector<8x32xf32>, vector<32x8xf32>, vector<8x8xf32> -> vector<8x8xf32>
    %c0_45 = arith.constant 0 : index
    %c1_46 = arith.constant 1 : index
    %c0_47 = arith.constant 0 : index
    %c0_48 = arith.constant 0 : index
    %47 = vector.load %arg3[%c0_45, %c1_46, %c0_47, %c0_48] : memref<2x4x1x8xf32, #tpu.memory_space<vmem>>, vector<1x1x1x8xf32>
    %48 = vector.shape_cast %47 : vector<1x1x1x8xf32> to vector<1x8xf32>
    %49 = vector.broadcast %48 : vector<1x8xf32> to vector<8x8xf32>
    %50 = arith.addf %46, %49 : vector<8x8xf32>
    %c0_49 = arith.constant 0 : index
    %c1_50 = arith.constant 1 : index
    %c0_51 = arith.constant 0 : index
    %c0_52 = arith.constant 0 : index
    %51 = vector.load %arg4[%c0_49, %c1_50, %c0_51, %c0_52] : memref<2x4x32x8xf32, #tpu.memory_space<vmem>>, vector<1x1x32x8xf32>
    %52 = vector.shape_cast %51 : vector<1x1x32x8xf32> to vector<32x8xf32>
    %cst_53 = arith.constant dense<0.000000e+00> : vector<8x8xf32>
    %53 = tpu.matmul %1, %52, %cst_53 {dimension_numbers = #tpu.dot_dimension_numbers<[1], [0], [0], [1], [0, 0, 1, 1], [], []>} : vector<8x32xf32>, vector<32x8xf32>, vector<8x8xf32> -> vector<8x8xf32>
    %c0_54 = arith.constant 0 : index
    %c1_55 = arith.constant 1 : index
    %c0_56 = arith.constant 0 : index
    %c0_57 = arith.constant 0 : index
    %54 = vector.load %arg5[%c0_54, %c1_55, %c0_56, %c0_57] : memref<2x4x1x8xf32, #tpu.memory_space<vmem>>, vector<1x1x1x8xf32>
    %55 = vector.shape_cast %54 : vector<1x1x1x8xf32> to vector<1x8xf32>
    %56 = vector.broadcast %55 : vector<1x8xf32> to vector<8x8xf32>
    %57 = arith.addf %53, %56 : vector<8x8xf32>
    %c0_58 = arith.constant 0 : index
    %c1_59 = arith.constant 1 : index
    %c0_60 = arith.constant 0 : index
    %c0_61 = arith.constant 0 : index
    %58 = vector.load %arg6[%c0_58, %c1_59, %c0_60, %c0_61] : memref<2x4x32x8xf32, #tpu.memory_space<vmem>>, vector<1x1x32x8xf32>
    %59 = vector.shape_cast %58 : vector<1x1x32x8xf32> to vector<32x8xf32>
    %cst_62 = arith.constant dense<0.000000e+00> : vector<8x8xf32>
    %60 = tpu.matmul %1, %59, %cst_62 {dimension_numbers = #tpu.dot_dimension_numbers<[1], [0], [0], [1], [0, 0, 1, 1], [], []>} : vector<8x32xf32>, vector<32x8xf32>, vector<8x8xf32> -> vector<8x8xf32>
    %c0_63 = arith.constant 0 : index
    %c1_64 = arith.constant 1 : index
    %c0_65 = arith.constant 0 : index
    %c0_66 = arith.constant 0 : index
    %61 = vector.load %arg7[%c0_63, %c1_64, %c0_65, %c0_66] : memref<2x4x1x8xf32, #tpu.memory_space<vmem>>, vector<1x1x1x8xf32>
    %62 = vector.shape_cast %61 : vector<1x1x1x8xf32> to vector<1x8xf32>
    %63 = vector.broadcast %62 : vector<1x8xf32> to vector<8x8xf32>
    %64 = arith.addf %60, %63 : vector<8x8xf32>
    %cst_67 = arith.constant dense<0.000000e+00> : vector<8x8xf32>
    %65 = tpu.matmul %50, %57, %cst_67 {dimension_numbers = #tpu.dot_dimension_numbers<[1], [1], [0], [0], [0, 0, 1, 0], [], []>} : vector<8x8xf32>, vector<8x8xf32>, vector<8x8xf32> -> vector<8x8xf32>
    %cst_68 = arith.constant dense<0xFF800000> : vector<8xf32>
    %66 = vector.multi_reduction <maximumf>, %65, %cst_68 [1] : vector<8x8xf32> to vector<8xf32>
    %67 = vector.shape_cast %66 : vector<8xf32> to vector<8x1xf32>
    %68 = vector.broadcast %67 : vector<8x1xf32> to vector<8x8xf32>
    %69 = arith.subf %65, %68 : vector<8x8xf32>
    %70 = math.exp %69 : vector<8x8xf32>
    %cst_69 = arith.constant dense<0.000000e+00> : vector<8xf32>
    %71 = vector.multi_reduction <add>, %70, %cst_69 [1] : vector<8x8xf32> to vector<8xf32>
    %72 = vector.shape_cast %71 : vector<8xf32> to vector<8x1xf32>
    %cst_70 = arith.constant 1.000000e+00 : f32
    %73 = vector.broadcast %cst_70 : f32 to vector<8x1xf32>
    %74 = arith.divf %73, %72 : vector<8x1xf32>
    %75 = vector.broadcast %74 : vector<8x1xf32> to vector<8x8xf32>
    %76 = arith.mulf %70, %75 : vector<8x8xf32>
    %cst_71 = arith.constant dense<0.000000e+00> : vector<8x8xf32>
    %77 = tpu.matmul %76, %64, %cst_71 {dimension_numbers = #tpu.dot_dimension_numbers<[1], [0], [0], [1], [0, 0, 1, 1], [], []>} : vector<8x8xf32>, vector<8x8xf32>, vector<8x8xf32> -> vector<8x8xf32>
    %c0_72 = arith.constant 0 : index
    %c1_73 = arith.constant 1 : index
    %c0_74 = arith.constant 0 : index
    %c0_75 = arith.constant 0 : index
    %78 = vector.load %arg8[%c0_72, %c1_73, %c0_74, %c0_75] : memref<2x4x8x32xf32, #tpu.memory_space<vmem>>, vector<1x1x8x32xf32>
    %79 = vector.shape_cast %78 : vector<1x1x8x32xf32> to vector<8x32xf32>
    %cst_76 = arith.constant dense<0.000000e+00> : vector<8x32xf32>
    %80 = tpu.matmul %77, %79, %cst_76 {dimension_numbers = #tpu.dot_dimension_numbers<[1], [0], [0], [1], [0, 0, 1, 1], [], []>} : vector<8x8xf32>, vector<8x32xf32>, vector<8x32xf32> -> vector<8x32xf32>
    %81 = arith.addf %43, %80 : vector<8x32xf32>
    %c0_77 = arith.constant 0 : index
    %c2 = arith.constant 2 : index
    %c0_78 = arith.constant 0 : index
    %c0_79 = arith.constant 0 : index
    %82 = vector.load %arg2[%c0_77, %c2, %c0_78, %c0_79] : memref<2x4x32x8xf32, #tpu.memory_space<vmem>>, vector<1x1x32x8xf32>
    %83 = vector.shape_cast %82 : vector<1x1x32x8xf32> to vector<32x8xf32>
    %cst_80 = arith.constant dense<0.000000e+00> : vector<8x8xf32>
    %84 = tpu.matmul %1, %83, %cst_80 {dimension_numbers = #tpu.dot_dimension_numbers<[1], [0], [0], [1], [0, 0, 1, 1], [], []>} : vector<8x32xf32>, vector<32x8xf32>, vector<8x8xf32> -> vector<8x8xf32>
    %c0_81 = arith.constant 0 : index
    %c2_82 = arith.constant 2 : index
    %c0_83 = arith.constant 0 : index
    %c0_84 = arith.constant 0 : index
    %85 = vector.load %arg3[%c0_81, %c2_82, %c0_83, %c0_84] : memref<2x4x1x8xf32, #tpu.memory_space<vmem>>, vector<1x1x1x8xf32>
    %86 = vector.shape_cast %85 : vector<1x1x1x8xf32> to vector<1x8xf32>
    %87 = vector.broadcast %86 : vector<1x8xf32> to vector<8x8xf32>
    %88 = arith.addf %84, %87 : vector<8x8xf32>
    %c0_85 = arith.constant 0 : index
    %c2_86 = arith.constant 2 : index
    %c0_87 = arith.constant 0 : index
    %c0_88 = arith.constant 0 : index
    %89 = vector.load %arg4[%c0_85, %c2_86, %c0_87, %c0_88] : memref<2x4x32x8xf32, #tpu.memory_space<vmem>>, vector<1x1x32x8xf32>
    %90 = vector.shape_cast %89 : vector<1x1x32x8xf32> to vector<32x8xf32>
    %cst_89 = arith.constant dense<0.000000e+00> : vector<8x8xf32>
    %91 = tpu.matmul %1, %90, %cst_89 {dimension_numbers = #tpu.dot_dimension_numbers<[1], [0], [0], [1], [0, 0, 1, 1], [], []>} : vector<8x32xf32>, vector<32x8xf32>, vector<8x8xf32> -> vector<8x8xf32>
    %c0_90 = arith.constant 0 : index
    %c2_91 = arith.constant 2 : index
    %c0_92 = arith.constant 0 : index
    %c0_93 = arith.constant 0 : index
    %92 = vector.load %arg5[%c0_90, %c2_91, %c0_92, %c0_93] : memref<2x4x1x8xf32, #tpu.memory_space<vmem>>, vector<1x1x1x8xf32>
    %93 = vector.shape_cast %92 : vector<1x1x1x8xf32> to vector<1x8xf32>
    %94 = vector.broadcast %93 : vector<1x8xf32> to vector<8x8xf32>
    %95 = arith.addf %91, %94 : vector<8x8xf32>
    %c0_94 = arith.constant 0 : index
    %c2_95 = arith.constant 2 : index
    %c0_96 = arith.constant 0 : index
    %c0_97 = arith.constant 0 : index
    %96 = vector.load %arg6[%c0_94, %c2_95, %c0_96, %c0_97] : memref<2x4x32x8xf32, #tpu.memory_space<vmem>>, vector<1x1x32x8xf32>
    %97 = vector.shape_cast %96 : vector<1x1x32x8xf32> to vector<32x8xf32>
    %cst_98 = arith.constant dense<0.000000e+00> : vector<8x8xf32>
    %98 = tpu.matmul %1, %97, %cst_98 {dimension_numbers = #tpu.dot_dimension_numbers<[1], [0], [0], [1], [0, 0, 1, 1], [], []>} : vector<8x32xf32>, vector<32x8xf32>, vector<8x8xf32> -> vector<8x8xf32>
    %c0_99 = arith.constant 0 : index
    %c2_100 = arith.constant 2 : index
    %c0_101 = arith.constant 0 : index
    %c0_102 = arith.constant 0 : index
    %99 = vector.load %arg7[%c0_99, %c2_100, %c0_101, %c0_102] : memref<2x4x1x8xf32, #tpu.memory_space<vmem>>, vector<1x1x1x8xf32>
    %100 = vector.shape_cast %99 : vector<1x1x1x8xf32> to vector<1x8xf32>
    %101 = vector.broadcast %100 : vector<1x8xf32> to vector<8x8xf32>
    %102 = arith.addf %98, %101 : vector<8x8xf32>
    %cst_103 = arith.constant dense<0.000000e+00> : vector<8x8xf32>
    %103 = tpu.matmul %88, %95, %cst_103 {dimension_numbers = #tpu.dot_dimension_numbers<[1], [1], [0], [0], [0, 0, 1, 0], [], []>} : vector<8x8xf32>, vector<8x8xf32>, vector<8x8xf32> -> vector<8x8xf32>
    %cst_104 = arith.constant dense<0xFF800000> : vector<8xf32>
    %104 = vector.multi_reduction <maximumf>, %103, %cst_104 [1] : vector<8x8xf32> to vector<8xf32>
    %105 = vector.shape_cast %104 : vector<8xf32> to vector<8x1xf32>
    %106 = vector.broadcast %105 : vector<8x1xf32> to vector<8x8xf32>
    %107 = arith.subf %103, %106 : vector<8x8xf32>
    %108 = math.exp %107 : vector<8x8xf32>
    %cst_105 = arith.constant dense<0.000000e+00> : vector<8xf32>
    %109 = vector.multi_reduction <add>, %108, %cst_105 [1] : vector<8x8xf32> to vector<8xf32>
    %110 = vector.shape_cast %109 : vector<8xf32> to vector<8x1xf32>
    %cst_106 = arith.constant 1.000000e+00 : f32
    %111 = vector.broadcast %cst_106 : f32 to vector<8x1xf32>
    %112 = arith.divf %111, %110 : vector<8x1xf32>
    %113 = vector.broadcast %112 : vector<8x1xf32> to vector<8x8xf32>
    %114 = arith.mulf %108, %113 : vector<8x8xf32>
    %cst_107 = arith.constant dense<0.000000e+00> : vector<8x8xf32>
    %115 = tpu.matmul %114, %102, %cst_107 {dimension_numbers = #tpu.dot_dimension_numbers<[1], [0], [0], [1], [0, 0, 1, 1], [], []>} : vector<8x8xf32>, vector<8x8xf32>, vector<8x8xf32> -> vector<8x8xf32>
    %c0_108 = arith.constant 0 : index
    %c2_109 = arith.constant 2 : index
    %c0_110 = arith.constant 0 : index
    %c0_111 = arith.constant 0 : index
    %116 = vector.load %arg8[%c0_108, %c2_109, %c0_110, %c0_111] : memref<2x4x8x32xf32, #tpu.memory_space<vmem>>, vector<1x1x8x32xf32>
    %117 = vector.shape_cast %116 : vector<1x1x8x32xf32> to vector<8x32xf32>
    %cst_112 = arith.constant dense<0.000000e+00> : vector<8x32xf32>
    %118 = tpu.matmul %115, %117, %cst_112 {dimension_numbers = #tpu.dot_dimension_numbers<[1], [0], [0], [1], [0, 0, 1, 1], [], []>} : vector<8x8xf32>, vector<8x32xf32>, vector<8x32xf32> -> vector<8x32xf32>
    %119 = arith.addf %81, %118 : vector<8x32xf32>
    %c0_113 = arith.constant 0 : index
    %c3 = arith.constant 3 : index
    %c0_114 = arith.constant 0 : index
    %c0_115 = arith.constant 0 : index
    %120 = vector.load %arg2[%c0_113, %c3, %c0_114, %c0_115] : memref<2x4x32x8xf32, #tpu.memory_space<vmem>>, vector<1x1x32x8xf32>
    %121 = vector.shape_cast %120 : vector<1x1x32x8xf32> to vector<32x8xf32>
    %cst_116 = arith.constant dense<0.000000e+00> : vector<8x8xf32>
    %122 = tpu.matmul %1, %121, %cst_116 {dimension_numbers = #tpu.dot_dimension_numbers<[1], [0], [0], [1], [0, 0, 1, 1], [], []>} : vector<8x32xf32>, vector<32x8xf32>, vector<8x8xf32> -> vector<8x8xf32>
    %c0_117 = arith.constant 0 : index
    %c3_118 = arith.constant 3 : index
    %c0_119 = arith.constant 0 : index
    %c0_120 = arith.constant 0 : index
    %123 = vector.load %arg3[%c0_117, %c3_118, %c0_119, %c0_120] : memref<2x4x1x8xf32, #tpu.memory_space<vmem>>, vector<1x1x1x8xf32>
    %124 = vector.shape_cast %123 : vector<1x1x1x8xf32> to vector<1x8xf32>
    %125 = vector.broadcast %124 : vector<1x8xf32> to vector<8x8xf32>
    %126 = arith.addf %122, %125 : vector<8x8xf32>
    %c0_121 = arith.constant 0 : index
    %c3_122 = arith.constant 3 : index
    %c0_123 = arith.constant 0 : index
    %c0_124 = arith.constant 0 : index
    %127 = vector.load %arg4[%c0_121, %c3_122, %c0_123, %c0_124] : memref<2x4x32x8xf32, #tpu.memory_space<vmem>>, vector<1x1x32x8xf32>
    %128 = vector.shape_cast %127 : vector<1x1x32x8xf32> to vector<32x8xf32>
    %cst_125 = arith.constant dense<0.000000e+00> : vector<8x8xf32>
    %129 = tpu.matmul %1, %128, %cst_125 {dimension_numbers = #tpu.dot_dimension_numbers<[1], [0], [0], [1], [0, 0, 1, 1], [], []>} : vector<8x32xf32>, vector<32x8xf32>, vector<8x8xf32> -> vector<8x8xf32>
    %c0_126 = arith.constant 0 : index
    %c3_127 = arith.constant 3 : index
    %c0_128 = arith.constant 0 : index
    %c0_129 = arith.constant 0 : index
    %130 = vector.load %arg5[%c0_126, %c3_127, %c0_128, %c0_129] : memref<2x4x1x8xf32, #tpu.memory_space<vmem>>, vector<1x1x1x8xf32>
    %131 = vector.shape_cast %130 : vector<1x1x1x8xf32> to vector<1x8xf32>
    %132 = vector.broadcast %131 : vector<1x8xf32> to vector<8x8xf32>
    %133 = arith.addf %129, %132 : vector<8x8xf32>
    %c0_130 = arith.constant 0 : index
    %c3_131 = arith.constant 3 : index
    %c0_132 = arith.constant 0 : index
    %c0_133 = arith.constant 0 : index
    %134 = vector.load %arg6[%c0_130, %c3_131, %c0_132, %c0_133] : memref<2x4x32x8xf32, #tpu.memory_space<vmem>>, vector<1x1x32x8xf32>
    %135 = vector.shape_cast %134 : vector<1x1x32x8xf32> to vector<32x8xf32>
    %cst_134 = arith.constant dense<0.000000e+00> : vector<8x8xf32>
    %136 = tpu.matmul %1, %135, %cst_134 {dimension_numbers = #tpu.dot_dimension_numbers<[1], [0], [0], [1], [0, 0, 1, 1], [], []>} : vector<8x32xf32>, vector<32x8xf32>, vector<8x8xf32> -> vector<8x8xf32>
    %c0_135 = arith.constant 0 : index
    %c3_136 = arith.constant 3 : index
    %c0_137 = arith.constant 0 : index
    %c0_138 = arith.constant 0 : index
    %137 = vector.load %arg7[%c0_135, %c3_136, %c0_137, %c0_138] : memref<2x4x1x8xf32, #tpu.memory_space<vmem>>, vector<1x1x1x8xf32>
    %138 = vector.shape_cast %137 : vector<1x1x1x8xf32> to vector<1x8xf32>
    %139 = vector.broadcast %138 : vector<1x8xf32> to vector<8x8xf32>
    %140 = arith.addf %136, %139 : vector<8x8xf32>
    %cst_139 = arith.constant dense<0.000000e+00> : vector<8x8xf32>
    %141 = tpu.matmul %126, %133, %cst_139 {dimension_numbers = #tpu.dot_dimension_numbers<[1], [1], [0], [0], [0, 0, 1, 0], [], []>} : vector<8x8xf32>, vector<8x8xf32>, vector<8x8xf32> -> vector<8x8xf32>
    %cst_140 = arith.constant dense<0xFF800000> : vector<8xf32>
    %142 = vector.multi_reduction <maximumf>, %141, %cst_140 [1] : vector<8x8xf32> to vector<8xf32>
    %143 = vector.shape_cast %142 : vector<8xf32> to vector<8x1xf32>
    %144 = vector.broadcast %143 : vector<8x1xf32> to vector<8x8xf32>
    %145 = arith.subf %141, %144 : vector<8x8xf32>
    %146 = math.exp %145 : vector<8x8xf32>
    %cst_141 = arith.constant dense<0.000000e+00> : vector<8xf32>
    %147 = vector.multi_reduction <add>, %146, %cst_141 [1] : vector<8x8xf32> to vector<8xf32>
    %148 = vector.shape_cast %147 : vector<8xf32> to vector<8x1xf32>
    %cst_142 = arith.constant 1.000000e+00 : f32
    %149 = vector.broadcast %cst_142 : f32 to vector<8x1xf32>
    %150 = arith.divf %149, %148 : vector<8x1xf32>
    %151 = vector.broadcast %150 : vector<8x1xf32> to vector<8x8xf32>
    %152 = arith.mulf %146, %151 : vector<8x8xf32>
    %cst_143 = arith.constant dense<0.000000e+00> : vector<8x8xf32>
    %153 = tpu.matmul %152, %140, %cst_143 {dimension_numbers = #tpu.dot_dimension_numbers<[1], [0], [0], [1], [0, 0, 1, 1], [], []>} : vector<8x8xf32>, vector<8x8xf32>, vector<8x8xf32> -> vector<8x8xf32>
    %c0_144 = arith.constant 0 : index
    %c3_145 = arith.constant 3 : index
    %c0_146 = arith.constant 0 : index
    %c0_147 = arith.constant 0 : index
    %154 = vector.load %arg8[%c0_144, %c3_145, %c0_146, %c0_147] : memref<2x4x8x32xf32, #tpu.memory_space<vmem>>, vector<1x1x8x32xf32>
    %155 = vector.shape_cast %154 : vector<1x1x8x32xf32> to vector<8x32xf32>
    %cst_148 = arith.constant dense<0.000000e+00> : vector<8x32xf32>
    %156 = tpu.matmul %153, %155, %cst_148 {dimension_numbers = #tpu.dot_dimension_numbers<[1], [0], [0], [1], [0, 0, 1, 1], [], []>} : vector<8x8xf32>, vector<8x32xf32>, vector<8x32xf32> -> vector<8x32xf32>
    %157 = arith.addf %119, %156 : vector<8x32xf32>
    %158 = arith.addf %1, %157 : vector<8x32xf32>
    %c0_149 = arith.constant 0 : index
    %c0_150 = arith.constant 0 : index
    %c0_151 = arith.constant 0 : index
    %159 = vector.load %arg10[%c0_149, %c0_150, %c0_151] : memref<2x1x32xf32, #tpu.memory_space<vmem>>, vector<1x1x32xf32>
    %160 = vector.shape_cast %159 : vector<1x1x32xf32> to vector<1x32xf32>
    %c0_152 = arith.constant 0 : index
    %c0_153 = arith.constant 0 : index
    %c0_154 = arith.constant 0 : index
    %161 = vector.load %arg11[%c0_152, %c0_153, %c0_154] : memref<2x1x32xf32, #tpu.memory_space<vmem>>, vector<1x1x32xf32>
    %162 = vector.shape_cast %161 : vector<1x1x32xf32> to vector<1x32xf32>
    %cst_155 = arith.constant dense<0.000000e+00> : vector<8xf32>
    %163 = vector.multi_reduction <add>, %158, %cst_155 [1] : vector<8x32xf32> to vector<8xf32>
    %164 = vector.shape_cast %163 : vector<8xf32> to vector<8x1xf32>
    %cst_156 = arith.constant 3.200000e+01 : f32
    %165 = vector.broadcast %cst_156 : f32 to vector<8x1xf32>
    %166 = arith.divf %164, %165 : vector<8x1xf32>
    %167 = vector.broadcast %166 : vector<8x1xf32> to vector<8x32xf32>
    %168 = arith.subf %158, %167 : vector<8x32xf32>
    %169 = arith.mulf %168, %168 : vector<8x32xf32>
    %cst_157 = arith.constant dense<0.000000e+00> : vector<8xf32>
    %170 = vector.multi_reduction <add>, %169, %cst_157 [1] : vector<8x32xf32> to vector<8xf32>
    %171 = vector.shape_cast %170 : vector<8xf32> to vector<8x1xf32>
    %cst_158 = arith.constant 3.200000e+01 : f32
    %172 = vector.broadcast %cst_158 : f32 to vector<8x1xf32>
    %173 = arith.divf %171, %172 : vector<8x1xf32>
    %cst_159 = arith.constant 9.99999974E-6 : f32
    %174 = vector.broadcast %cst_159 : f32 to vector<8x1xf32>
    %175 = arith.addf %173, %174 : vector<8x1xf32>
    %176 = math.rsqrt %175 : vector<8x1xf32>
    %177 = vector.broadcast %176 : vector<8x1xf32> to vector<8x32xf32>
    %178 = arith.mulf %168, %177 : vector<8x32xf32>
    %179 = vector.broadcast %160 : vector<1x32xf32> to vector<8x32xf32>
    %180 = arith.mulf %178, %179 : vector<8x32xf32>
    %181 = vector.broadcast %162 : vector<1x32xf32> to vector<8x32xf32>
    %182 = arith.addf %180, %181 : vector<8x32xf32>
    %c0_160 = arith.constant 0 : index
    %c0_161 = arith.constant 0 : index
    %c0_162 = arith.constant 0 : index
    %183 = vector.load %arg12[%c0_160, %c0_161, %c0_162] : memref<2x32x64xf32, #tpu.memory_space<vmem>>, vector<1x32x64xf32>
    %184 = vector.shape_cast %183 : vector<1x32x64xf32> to vector<32x64xf32>
    %cst_163 = arith.constant dense<0.000000e+00> : vector<8x64xf32>
    %185 = tpu.matmul %182, %184, %cst_163 {dimension_numbers = #tpu.dot_dimension_numbers<[1], [0], [0], [1], [0, 0, 1, 1], [], []>} : vector<8x32xf32>, vector<32x64xf32>, vector<8x64xf32> -> vector<8x64xf32>
    %c0_164 = arith.constant 0 : index
    %c0_165 = arith.constant 0 : index
    %c0_166 = arith.constant 0 : index
    %186 = vector.load %arg13[%c0_164, %c0_165, %c0_166] : memref<2x1x64xf32, #tpu.memory_space<vmem>>, vector<1x1x64xf32>
    %187 = vector.shape_cast %186 : vector<1x1x64xf32> to vector<1x64xf32>
    %188 = vector.broadcast %187 : vector<1x64xf32> to vector<8x64xf32>
    %189 = arith.addf %185, %188 : vector<8x64xf32>
    %cst_167 = arith.constant 0.000000e+00 : f32
    %190 = vector.broadcast %cst_167 : f32 to vector<8x64xf32>
    %191 = arith.maximumf %189, %190 : vector<8x64xf32>
    %c0_168 = arith.constant 0 : index
    %c0_169 = arith.constant 0 : index
    %c0_170 = arith.constant 0 : index
    %192 = vector.load %arg14[%c0_168, %c0_169, %c0_170] : memref<2x64x32xf32, #tpu.memory_space<vmem>>, vector<1x64x32xf32>
    %193 = vector.shape_cast %192 : vector<1x64x32xf32> to vector<64x32xf32>
    %cst_171 = arith.constant dense<0.000000e+00> : vector<8x32xf32>
    %194 = tpu.matmul %191, %193, %cst_171 {dimension_numbers = #tpu.dot_dimension_numbers<[1], [0], [0], [1], [0, 0, 1, 1], [], []>} : vector<8x64xf32>, vector<64x32xf32>, vector<8x32xf32> -> vector<8x32xf32>
    %c0_172 = arith.constant 0 : index
    %c0_173 = arith.constant 0 : index
    %c0_174 = arith.constant 0 : index
    %195 = vector.load %arg15[%c0_172, %c0_173, %c0_174] : memref<2x1x32xf32, #tpu.memory_space<vmem>>, vector<1x1x32xf32>
    %196 = vector.shape_cast %195 : vector<1x1x32xf32> to vector<1x32xf32>
    %197 = vector.broadcast %196 : vector<1x32xf32> to vector<8x32xf32>
    %198 = arith.addf %194, %197 : vector<8x32xf32>
    %199 = arith.addf %182, %198 : vector<8x32xf32>
    %c0_175 = arith.constant 0 : index
    %c0_176 = arith.constant 0 : index
    %c0_177 = arith.constant 0 : index
    %200 = vector.load %arg16[%c0_175, %c0_176, %c0_177] : memref<2x1x32xf32, #tpu.memory_space<vmem>>, vector<1x1x32xf32>
    %201 = vector.shape_cast %200 : vector<1x1x32xf32> to vector<1x32xf32>
    %c0_178 = arith.constant 0 : index
    %c0_179 = arith.constant 0 : index
    %c0_180 = arith.constant 0 : index
    %202 = vector.load %arg17[%c0_178, %c0_179, %c0_180] : memref<2x1x32xf32, #tpu.memory_space<vmem>>, vector<1x1x32xf32>
    %203 = vector.shape_cast %202 : vector<1x1x32xf32> to vector<1x32xf32>
    %cst_181 = arith.constant dense<0.000000e+00> : vector<8xf32>
    %204 = vector.multi_reduction <add>, %199, %cst_181 [1] : vector<8x32xf32> to vector<8xf32>
    %205 = vector.shape_cast %204 : vector<8xf32> to vector<8x1xf32>
    %cst_182 = arith.constant 3.200000e+01 : f32
    %206 = vector.broadcast %cst_182 : f32 to vector<8x1xf32>
    %207 = arith.divf %205, %206 : vector<8x1xf32>
    %208 = vector.broadcast %207 : vector<8x1xf32> to vector<8x32xf32>
    %209 = arith.subf %199, %208 : vector<8x32xf32>
    %210 = arith.mulf %209, %209 : vector<8x32xf32>
    %cst_183 = arith.constant dense<0.000000e+00> : vector<8xf32>
    %211 = vector.multi_reduction <add>, %210, %cst_183 [1] : vector<8x32xf32> to vector<8xf32>
    %212 = vector.shape_cast %211 : vector<8xf32> to vector<8x1xf32>
    %cst_184 = arith.constant 3.200000e+01 : f32
    %213 = vector.broadcast %cst_184 : f32 to vector<8x1xf32>
    %214 = arith.divf %212, %213 : vector<8x1xf32>
    %cst_185 = arith.constant 9.99999974E-6 : f32
    %215 = vector.broadcast %cst_185 : f32 to vector<8x1xf32>
    %216 = arith.addf %214, %215 : vector<8x1xf32>
    %217 = math.rsqrt %216 : vector<8x1xf32>
    %218 = vector.broadcast %217 : vector<8x1xf32> to vector<8x32xf32>
    %219 = arith.mulf %209, %218 : vector<8x32xf32>
    %220 = vector.broadcast %201 : vector<1x32xf32> to vector<8x32xf32>
    %221 = arith.mulf %219, %220 : vector<8x32xf32>
    %222 = vector.broadcast %203 : vector<1x32xf32> to vector<8x32xf32>
    %223 = arith.addf %221, %222 : vector<8x32xf32>
    %c1_186 = arith.constant 1 : index
    %c0_187 = arith.constant 0 : index
    %c0_188 = arith.constant 0 : index
    %224 = vector.load %arg9[%c1_186, %c0_187, %c0_188] : memref<2x1x32xf32, #tpu.memory_space<vmem>>, vector<1x1x32xf32>
    %225 = vector.shape_cast %224 : vector<1x1x32xf32> to vector<1x32xf32>
    %226 = vector.shape_cast %225 : vector<1x32xf32> to vector<1x32xf32>
    %227 = vector.broadcast %226 : vector<1x32xf32> to vector<8x32xf32>
    %c1_189 = arith.constant 1 : index
    %c0_190 = arith.constant 0 : index
    %c0_191 = arith.constant 0 : index
    %c0_192 = arith.constant 0 : index
    %228 = vector.load %arg2[%c1_189, %c0_190, %c0_191, %c0_192] : memref<2x4x32x8xf32, #tpu.memory_space<vmem>>, vector<1x1x32x8xf32>
    %229 = vector.shape_cast %228 : vector<1x1x32x8xf32> to vector<32x8xf32>
    %cst_193 = arith.constant dense<0.000000e+00> : vector<8x8xf32>
    %230 = tpu.matmul %223, %229, %cst_193 {dimension_numbers = #tpu.dot_dimension_numbers<[1], [0], [0], [1], [0, 0, 1, 1], [], []>} : vector<8x32xf32>, vector<32x8xf32>, vector<8x8xf32> -> vector<8x8xf32>
    %c1_194 = arith.constant 1 : index
    %c0_195 = arith.constant 0 : index
    %c0_196 = arith.constant 0 : index
    %c0_197 = arith.constant 0 : index
    %231 = vector.load %arg3[%c1_194, %c0_195, %c0_196, %c0_197] : memref<2x4x1x8xf32, #tpu.memory_space<vmem>>, vector<1x1x1x8xf32>
    %232 = vector.shape_cast %231 : vector<1x1x1x8xf32> to vector<1x8xf32>
    %233 = vector.broadcast %232 : vector<1x8xf32> to vector<8x8xf32>
    %234 = arith.addf %230, %233 : vector<8x8xf32>
    %c1_198 = arith.constant 1 : index
    %c0_199 = arith.constant 0 : index
    %c0_200 = arith.constant 0 : index
    %c0_201 = arith.constant 0 : index
    %235 = vector.load %arg4[%c1_198, %c0_199, %c0_200, %c0_201] : memref<2x4x32x8xf32, #tpu.memory_space<vmem>>, vector<1x1x32x8xf32>
    %236 = vector.shape_cast %235 : vector<1x1x32x8xf32> to vector<32x8xf32>
    %cst_202 = arith.constant dense<0.000000e+00> : vector<8x8xf32>
    %237 = tpu.matmul %223, %236, %cst_202 {dimension_numbers = #tpu.dot_dimension_numbers<[1], [0], [0], [1], [0, 0, 1, 1], [], []>} : vector<8x32xf32>, vector<32x8xf32>, vector<8x8xf32> -> vector<8x8xf32>
    %c1_203 = arith.constant 1 : index
    %c0_204 = arith.constant 0 : index
    %c0_205 = arith.constant 0 : index
    %c0_206 = arith.constant 0 : index
    %238 = vector.load %arg5[%c1_203, %c0_204, %c0_205, %c0_206] : memref<2x4x1x8xf32, #tpu.memory_space<vmem>>, vector<1x1x1x8xf32>
    %239 = vector.shape_cast %238 : vector<1x1x1x8xf32> to vector<1x8xf32>
    %240 = vector.broadcast %239 : vector<1x8xf32> to vector<8x8xf32>
    %241 = arith.addf %237, %240 : vector<8x8xf32>
    %c1_207 = arith.constant 1 : index
    %c0_208 = arith.constant 0 : index
    %c0_209 = arith.constant 0 : index
    %c0_210 = arith.constant 0 : index
    %242 = vector.load %arg6[%c1_207, %c0_208, %c0_209, %c0_210] : memref<2x4x32x8xf32, #tpu.memory_space<vmem>>, vector<1x1x32x8xf32>
    %243 = vector.shape_cast %242 : vector<1x1x32x8xf32> to vector<32x8xf32>
    %cst_211 = arith.constant dense<0.000000e+00> : vector<8x8xf32>
    %244 = tpu.matmul %223, %243, %cst_211 {dimension_numbers = #tpu.dot_dimension_numbers<[1], [0], [0], [1], [0, 0, 1, 1], [], []>} : vector<8x32xf32>, vector<32x8xf32>, vector<8x8xf32> -> vector<8x8xf32>
    %c1_212 = arith.constant 1 : index
    %c0_213 = arith.constant 0 : index
    %c0_214 = arith.constant 0 : index
    %c0_215 = arith.constant 0 : index
    %245 = vector.load %arg7[%c1_212, %c0_213, %c0_214, %c0_215] : memref<2x4x1x8xf32, #tpu.memory_space<vmem>>, vector<1x1x1x8xf32>
    %246 = vector.shape_cast %245 : vector<1x1x1x8xf32> to vector<1x8xf32>
    %247 = vector.broadcast %246 : vector<1x8xf32> to vector<8x8xf32>
    %248 = arith.addf %244, %247 : vector<8x8xf32>
    %cst_216 = arith.constant dense<0.000000e+00> : vector<8x8xf32>
    %249 = tpu.matmul %234, %241, %cst_216 {dimension_numbers = #tpu.dot_dimension_numbers<[1], [1], [0], [0], [0, 0, 1, 0], [], []>} : vector<8x8xf32>, vector<8x8xf32>, vector<8x8xf32> -> vector<8x8xf32>
    %cst_217 = arith.constant dense<0xFF800000> : vector<8xf32>
    %250 = vector.multi_reduction <maximumf>, %249, %cst_217 [1] : vector<8x8xf32> to vector<8xf32>
    %251 = vector.shape_cast %250 : vector<8xf32> to vector<8x1xf32>
    %252 = vector.broadcast %251 : vector<8x1xf32> to vector<8x8xf32>
    %253 = arith.subf %249, %252 : vector<8x8xf32>
    %254 = math.exp %253 : vector<8x8xf32>
    %cst_218 = arith.constant dense<0.000000e+00> : vector<8xf32>
    %255 = vector.multi_reduction <add>, %254, %cst_218 [1] : vector<8x8xf32> to vector<8xf32>
    %256 = vector.shape_cast %255 : vector<8xf32> to vector<8x1xf32>
    %cst_219 = arith.constant 1.000000e+00 : f32
    %257 = vector.broadcast %cst_219 : f32 to vector<8x1xf32>
    %258 = arith.divf %257, %256 : vector<8x1xf32>
    %259 = vector.broadcast %258 : vector<8x1xf32> to vector<8x8xf32>
    %260 = arith.mulf %254, %259 : vector<8x8xf32>
    %cst_220 = arith.constant dense<0.000000e+00> : vector<8x8xf32>
    %261 = tpu.matmul %260, %248, %cst_220 {dimension_numbers = #tpu.dot_dimension_numbers<[1], [0], [0], [1], [0, 0, 1, 1], [], []>} : vector<8x8xf32>, vector<8x8xf32>, vector<8x8xf32> -> vector<8x8xf32>
    %c1_221 = arith.constant 1 : index
    %c0_222 = arith.constant 0 : index
    %c0_223 = arith.constant 0 : index
    %c0_224 = arith.constant 0 : index
    %262 = vector.load %arg8[%c1_221, %c0_222, %c0_223, %c0_224] : memref<2x4x8x32xf32, #tpu.memory_space<vmem>>, vector<1x1x8x32xf32>
    %263 = vector.shape_cast %262 : vector<1x1x8x32xf32> to vector<8x32xf32>
    %cst_225 = arith.constant dense<0.000000e+00> : vector<8x32xf32>
    %264 = tpu.matmul %261, %263, %cst_225 {dimension_numbers = #tpu.dot_dimension_numbers<[1], [0], [0], [1], [0, 0, 1, 1], [], []>} : vector<8x8xf32>, vector<8x32xf32>, vector<8x32xf32> -> vector<8x32xf32>
    %265 = arith.addf %227, %264 : vector<8x32xf32>
    %c1_226 = arith.constant 1 : index
    %c1_227 = arith.constant 1 : index
    %c0_228 = arith.constant 0 : index
    %c0_229 = arith.constant 0 : index
    %266 = vector.load %arg2[%c1_226, %c1_227, %c0_228, %c0_229] : memref<2x4x32x8xf32, #tpu.memory_space<vmem>>, vector<1x1x32x8xf32>
    %267 = vector.shape_cast %266 : vector<1x1x32x8xf32> to vector<32x8xf32>
    %cst_230 = arith.constant dense<0.000000e+00> : vector<8x8xf32>
    %268 = tpu.matmul %223, %267, %cst_230 {dimension_numbers = #tpu.dot_dimension_numbers<[1], [0], [0], [1], [0, 0, 1, 1], [], []>} : vector<8x32xf32>, vector<32x8xf32>, vector<8x8xf32> -> vector<8x8xf32>
    %c1_231 = arith.constant 1 : index
    %c1_232 = arith.constant 1 : index
    %c0_233 = arith.constant 0 : index
    %c0_234 = arith.constant 0 : index
    %269 = vector.load %arg3[%c1_231, %c1_232, %c0_233, %c0_234] : memref<2x4x1x8xf32, #tpu.memory_space<vmem>>, vector<1x1x1x8xf32>
    %270 = vector.shape_cast %269 : vector<1x1x1x8xf32> to vector<1x8xf32>
    %271 = vector.broadcast %270 : vector<1x8xf32> to vector<8x8xf32>
    %272 = arith.addf %268, %271 : vector<8x8xf32>
    %c1_235 = arith.constant 1 : index
    %c1_236 = arith.constant 1 : index
    %c0_237 = arith.constant 0 : index
    %c0_238 = arith.constant 0 : index
    %273 = vector.load %arg4[%c1_235, %c1_236, %c0_237, %c0_238] : memref<2x4x32x8xf32, #tpu.memory_space<vmem>>, vector<1x1x32x8xf32>
    %274 = vector.shape_cast %273 : vector<1x1x32x8xf32> to vector<32x8xf32>
    %cst_239 = arith.constant dense<0.000000e+00> : vector<8x8xf32>
    %275 = tpu.matmul %223, %274, %cst_239 {dimension_numbers = #tpu.dot_dimension_numbers<[1], [0], [0], [1], [0, 0, 1, 1], [], []>} : vector<8x32xf32>, vector<32x8xf32>, vector<8x8xf32> -> vector<8x8xf32>
    %c1_240 = arith.constant 1 : index
    %c1_241 = arith.constant 1 : index
    %c0_242 = arith.constant 0 : index
    %c0_243 = arith.constant 0 : index
    %276 = vector.load %arg5[%c1_240, %c1_241, %c0_242, %c0_243] : memref<2x4x1x8xf32, #tpu.memory_space<vmem>>, vector<1x1x1x8xf32>
    %277 = vector.shape_cast %276 : vector<1x1x1x8xf32> to vector<1x8xf32>
    %278 = vector.broadcast %277 : vector<1x8xf32> to vector<8x8xf32>
    %279 = arith.addf %275, %278 : vector<8x8xf32>
    %c1_244 = arith.constant 1 : index
    %c1_245 = arith.constant 1 : index
    %c0_246 = arith.constant 0 : index
    %c0_247 = arith.constant 0 : index
    %280 = vector.load %arg6[%c1_244, %c1_245, %c0_246, %c0_247] : memref<2x4x32x8xf32, #tpu.memory_space<vmem>>, vector<1x1x32x8xf32>
    %281 = vector.shape_cast %280 : vector<1x1x32x8xf32> to vector<32x8xf32>
    %cst_248 = arith.constant dense<0.000000e+00> : vector<8x8xf32>
    %282 = tpu.matmul %223, %281, %cst_248 {dimension_numbers = #tpu.dot_dimension_numbers<[1], [0], [0], [1], [0, 0, 1, 1], [], []>} : vector<8x32xf32>, vector<32x8xf32>, vector<8x8xf32> -> vector<8x8xf32>
    %c1_249 = arith.constant 1 : index
    %c1_250 = arith.constant 1 : index
    %c0_251 = arith.constant 0 : index
    %c0_252 = arith.constant 0 : index
    %283 = vector.load %arg7[%c1_249, %c1_250, %c0_251, %c0_252] : memref<2x4x1x8xf32, #tpu.memory_space<vmem>>, vector<1x1x1x8xf32>
    %284 = vector.shape_cast %283 : vector<1x1x1x8xf32> to vector<1x8xf32>
    %285 = vector.broadcast %284 : vector<1x8xf32> to vector<8x8xf32>
    %286 = arith.addf %282, %285 : vector<8x8xf32>
    %cst_253 = arith.constant dense<0.000000e+00> : vector<8x8xf32>
    %287 = tpu.matmul %272, %279, %cst_253 {dimension_numbers = #tpu.dot_dimension_numbers<[1], [1], [0], [0], [0, 0, 1, 0], [], []>} : vector<8x8xf32>, vector<8x8xf32>, vector<8x8xf32> -> vector<8x8xf32>
    %cst_254 = arith.constant dense<0xFF800000> : vector<8xf32>
    %288 = vector.multi_reduction <maximumf>, %287, %cst_254 [1] : vector<8x8xf32> to vector<8xf32>
    %289 = vector.shape_cast %288 : vector<8xf32> to vector<8x1xf32>
    %290 = vector.broadcast %289 : vector<8x1xf32> to vector<8x8xf32>
    %291 = arith.subf %287, %290 : vector<8x8xf32>
    %292 = math.exp %291 : vector<8x8xf32>
    %cst_255 = arith.constant dense<0.000000e+00> : vector<8xf32>
    %293 = vector.multi_reduction <add>, %292, %cst_255 [1] : vector<8x8xf32> to vector<8xf32>
    %294 = vector.shape_cast %293 : vector<8xf32> to vector<8x1xf32>
    %cst_256 = arith.constant 1.000000e+00 : f32
    %295 = vector.broadcast %cst_256 : f32 to vector<8x1xf32>
    %296 = arith.divf %295, %294 : vector<8x1xf32>
    %297 = vector.broadcast %296 : vector<8x1xf32> to vector<8x8xf32>
    %298 = arith.mulf %292, %297 : vector<8x8xf32>
    %cst_257 = arith.constant dense<0.000000e+00> : vector<8x8xf32>
    %299 = tpu.matmul %298, %286, %cst_257 {dimension_numbers = #tpu.dot_dimension_numbers<[1], [0], [0], [1], [0, 0, 1, 1], [], []>} : vector<8x8xf32>, vector<8x8xf32>, vector<8x8xf32> -> vector<8x8xf32>
    %c1_258 = arith.constant 1 : index
    %c1_259 = arith.constant 1 : index
    %c0_260 = arith.constant 0 : index
    %c0_261 = arith.constant 0 : index
    %300 = vector.load %arg8[%c1_258, %c1_259, %c0_260, %c0_261] : memref<2x4x8x32xf32, #tpu.memory_space<vmem>>, vector<1x1x8x32xf32>
    %301 = vector.shape_cast %300 : vector<1x1x8x32xf32> to vector<8x32xf32>
    %cst_262 = arith.constant dense<0.000000e+00> : vector<8x32xf32>
    %302 = tpu.matmul %299, %301, %cst_262 {dimension_numbers = #tpu.dot_dimension_numbers<[1], [0], [0], [1], [0, 0, 1, 1], [], []>} : vector<8x8xf32>, vector<8x32xf32>, vector<8x32xf32> -> vector<8x32xf32>
    %303 = arith.addf %265, %302 : vector<8x32xf32>
    %c1_263 = arith.constant 1 : index
    %c2_264 = arith.constant 2 : index
    %c0_265 = arith.constant 0 : index
    %c0_266 = arith.constant 0 : index
    %304 = vector.load %arg2[%c1_263, %c2_264, %c0_265, %c0_266] : memref<2x4x32x8xf32, #tpu.memory_space<vmem>>, vector<1x1x32x8xf32>
    %305 = vector.shape_cast %304 : vector<1x1x32x8xf32> to vector<32x8xf32>
    %cst_267 = arith.constant dense<0.000000e+00> : vector<8x8xf32>
    %306 = tpu.matmul %223, %305, %cst_267 {dimension_numbers = #tpu.dot_dimension_numbers<[1], [0], [0], [1], [0, 0, 1, 1], [], []>} : vector<8x32xf32>, vector<32x8xf32>, vector<8x8xf32> -> vector<8x8xf32>
    %c1_268 = arith.constant 1 : index
    %c2_269 = arith.constant 2 : index
    %c0_270 = arith.constant 0 : index
    %c0_271 = arith.constant 0 : index
    %307 = vector.load %arg3[%c1_268, %c2_269, %c0_270, %c0_271] : memref<2x4x1x8xf32, #tpu.memory_space<vmem>>, vector<1x1x1x8xf32>
    %308 = vector.shape_cast %307 : vector<1x1x1x8xf32> to vector<1x8xf32>
    %309 = vector.broadcast %308 : vector<1x8xf32> to vector<8x8xf32>
    %310 = arith.addf %306, %309 : vector<8x8xf32>
    %c1_272 = arith.constant 1 : index
    %c2_273 = arith.constant 2 : index
    %c0_274 = arith.constant 0 : index
    %c0_275 = arith.constant 0 : index
    %311 = vector.load %arg4[%c1_272, %c2_273, %c0_274, %c0_275] : memref<2x4x32x8xf32, #tpu.memory_space<vmem>>, vector<1x1x32x8xf32>
    %312 = vector.shape_cast %311 : vector<1x1x32x8xf32> to vector<32x8xf32>
    %cst_276 = arith.constant dense<0.000000e+00> : vector<8x8xf32>
    %313 = tpu.matmul %223, %312, %cst_276 {dimension_numbers = #tpu.dot_dimension_numbers<[1], [0], [0], [1], [0, 0, 1, 1], [], []>} : vector<8x32xf32>, vector<32x8xf32>, vector<8x8xf32> -> vector<8x8xf32>
    %c1_277 = arith.constant 1 : index
    %c2_278 = arith.constant 2 : index
    %c0_279 = arith.constant 0 : index
    %c0_280 = arith.constant 0 : index
    %314 = vector.load %arg5[%c1_277, %c2_278, %c0_279, %c0_280] : memref<2x4x1x8xf32, #tpu.memory_space<vmem>>, vector<1x1x1x8xf32>
    %315 = vector.shape_cast %314 : vector<1x1x1x8xf32> to vector<1x8xf32>
    %316 = vector.broadcast %315 : vector<1x8xf32> to vector<8x8xf32>
    %317 = arith.addf %313, %316 : vector<8x8xf32>
    %c1_281 = arith.constant 1 : index
    %c2_282 = arith.constant 2 : index
    %c0_283 = arith.constant 0 : index
    %c0_284 = arith.constant 0 : index
    %318 = vector.load %arg6[%c1_281, %c2_282, %c0_283, %c0_284] : memref<2x4x32x8xf32, #tpu.memory_space<vmem>>, vector<1x1x32x8xf32>
    %319 = vector.shape_cast %318 : vector<1x1x32x8xf32> to vector<32x8xf32>
    %cst_285 = arith.constant dense<0.000000e+00> : vector<8x8xf32>
    %320 = tpu.matmul %223, %319, %cst_285 {dimension_numbers = #tpu.dot_dimension_numbers<[1], [0], [0], [1], [0, 0, 1, 1], [], []>} : vector<8x32xf32>, vector<32x8xf32>, vector<8x8xf32> -> vector<8x8xf32>
    %c1_286 = arith.constant 1 : index
    %c2_287 = arith.constant 2 : index
    %c0_288 = arith.constant 0 : index
    %c0_289 = arith.constant 0 : index
    %321 = vector.load %arg7[%c1_286, %c2_287, %c0_288, %c0_289] : memref<2x4x1x8xf32, #tpu.memory_space<vmem>>, vector<1x1x1x8xf32>
    %322 = vector.shape_cast %321 : vector<1x1x1x8xf32> to vector<1x8xf32>
    %323 = vector.broadcast %322 : vector<1x8xf32> to vector<8x8xf32>
    %324 = arith.addf %320, %323 : vector<8x8xf32>
    %cst_290 = arith.constant dense<0.000000e+00> : vector<8x8xf32>
    %325 = tpu.matmul %310, %317, %cst_290 {dimension_numbers = #tpu.dot_dimension_numbers<[1], [1], [0], [0], [0, 0, 1, 0], [], []>} : vector<8x8xf32>, vector<8x8xf32>, vector<8x8xf32> -> vector<8x8xf32>
    %cst_291 = arith.constant dense<0xFF800000> : vector<8xf32>
    %326 = vector.multi_reduction <maximumf>, %325, %cst_291 [1] : vector<8x8xf32> to vector<8xf32>
    %327 = vector.shape_cast %326 : vector<8xf32> to vector<8x1xf32>
    %328 = vector.broadcast %327 : vector<8x1xf32> to vector<8x8xf32>
    %329 = arith.subf %325, %328 : vector<8x8xf32>
    %330 = math.exp %329 : vector<8x8xf32>
    %cst_292 = arith.constant dense<0.000000e+00> : vector<8xf32>
    %331 = vector.multi_reduction <add>, %330, %cst_292 [1] : vector<8x8xf32> to vector<8xf32>
    %332 = vector.shape_cast %331 : vector<8xf32> to vector<8x1xf32>
    %cst_293 = arith.constant 1.000000e+00 : f32
    %333 = vector.broadcast %cst_293 : f32 to vector<8x1xf32>
    %334 = arith.divf %333, %332 : vector<8x1xf32>
    %335 = vector.broadcast %334 : vector<8x1xf32> to vector<8x8xf32>
    %336 = arith.mulf %330, %335 : vector<8x8xf32>
    %cst_294 = arith.constant dense<0.000000e+00> : vector<8x8xf32>
    %337 = tpu.matmul %336, %324, %cst_294 {dimension_numbers = #tpu.dot_dimension_numbers<[1], [0], [0], [1], [0, 0, 1, 1], [], []>} : vector<8x8xf32>, vector<8x8xf32>, vector<8x8xf32> -> vector<8x8xf32>
    %c1_295 = arith.constant 1 : index
    %c2_296 = arith.constant 2 : index
    %c0_297 = arith.constant 0 : index
    %c0_298 = arith.constant 0 : index
    %338 = vector.load %arg8[%c1_295, %c2_296, %c0_297, %c0_298] : memref<2x4x8x32xf32, #tpu.memory_space<vmem>>, vector<1x1x8x32xf32>
    %339 = vector.shape_cast %338 : vector<1x1x8x32xf32> to vector<8x32xf32>
    %cst_299 = arith.constant dense<0.000000e+00> : vector<8x32xf32>
    %340 = tpu.matmul %337, %339, %cst_299 {dimension_numbers = #tpu.dot_dimension_numbers<[1], [0], [0], [1], [0, 0, 1, 1], [], []>} : vector<8x8xf32>, vector<8x32xf32>, vector<8x32xf32> -> vector<8x32xf32>
    %341 = arith.addf %303, %340 : vector<8x32xf32>
    %c1_300 = arith.constant 1 : index
    %c3_301 = arith.constant 3 : index
    %c0_302 = arith.constant 0 : index
    %c0_303 = arith.constant 0 : index
    %342 = vector.load %arg2[%c1_300, %c3_301, %c0_302, %c0_303] : memref<2x4x32x8xf32, #tpu.memory_space<vmem>>, vector<1x1x32x8xf32>
    %343 = vector.shape_cast %342 : vector<1x1x32x8xf32> to vector<32x8xf32>
    %cst_304 = arith.constant dense<0.000000e+00> : vector<8x8xf32>
    %344 = tpu.matmul %223, %343, %cst_304 {dimension_numbers = #tpu.dot_dimension_numbers<[1], [0], [0], [1], [0, 0, 1, 1], [], []>} : vector<8x32xf32>, vector<32x8xf32>, vector<8x8xf32> -> vector<8x8xf32>
    %c1_305 = arith.constant 1 : index
    %c3_306 = arith.constant 3 : index
    %c0_307 = arith.constant 0 : index
    %c0_308 = arith.constant 0 : index
    %345 = vector.load %arg3[%c1_305, %c3_306, %c0_307, %c0_308] : memref<2x4x1x8xf32, #tpu.memory_space<vmem>>, vector<1x1x1x8xf32>
    %346 = vector.shape_cast %345 : vector<1x1x1x8xf32> to vector<1x8xf32>
    %347 = vector.broadcast %346 : vector<1x8xf32> to vector<8x8xf32>
    %348 = arith.addf %344, %347 : vector<8x8xf32>
    %c1_309 = arith.constant 1 : index
    %c3_310 = arith.constant 3 : index
    %c0_311 = arith.constant 0 : index
    %c0_312 = arith.constant 0 : index
    %349 = vector.load %arg4[%c1_309, %c3_310, %c0_311, %c0_312] : memref<2x4x32x8xf32, #tpu.memory_space<vmem>>, vector<1x1x32x8xf32>
    %350 = vector.shape_cast %349 : vector<1x1x32x8xf32> to vector<32x8xf32>
    %cst_313 = arith.constant dense<0.000000e+00> : vector<8x8xf32>
    %351 = tpu.matmul %223, %350, %cst_313 {dimension_numbers = #tpu.dot_dimension_numbers<[1], [0], [0], [1], [0, 0, 1, 1], [], []>} : vector<8x32xf32>, vector<32x8xf32>, vector<8x8xf32> -> vector<8x8xf32>
    %c1_314 = arith.constant 1 : index
    %c3_315 = arith.constant 3 : index
    %c0_316 = arith.constant 0 : index
    %c0_317 = arith.constant 0 : index
    %352 = vector.load %arg5[%c1_314, %c3_315, %c0_316, %c0_317] : memref<2x4x1x8xf32, #tpu.memory_space<vmem>>, vector<1x1x1x8xf32>
    %353 = vector.shape_cast %352 : vector<1x1x1x8xf32> to vector<1x8xf32>
    %354 = vector.broadcast %353 : vector<1x8xf32> to vector<8x8xf32>
    %355 = arith.addf %351, %354 : vector<8x8xf32>
    %c1_318 = arith.constant 1 : index
    %c3_319 = arith.constant 3 : index
    %c0_320 = arith.constant 0 : index
    %c0_321 = arith.constant 0 : index
    %356 = vector.load %arg6[%c1_318, %c3_319, %c0_320, %c0_321] : memref<2x4x32x8xf32, #tpu.memory_space<vmem>>, vector<1x1x32x8xf32>
    %357 = vector.shape_cast %356 : vector<1x1x32x8xf32> to vector<32x8xf32>
    %cst_322 = arith.constant dense<0.000000e+00> : vector<8x8xf32>
    %358 = tpu.matmul %223, %357, %cst_322 {dimension_numbers = #tpu.dot_dimension_numbers<[1], [0], [0], [1], [0, 0, 1, 1], [], []>} : vector<8x32xf32>, vector<32x8xf32>, vector<8x8xf32> -> vector<8x8xf32>
    %c1_323 = arith.constant 1 : index
    %c3_324 = arith.constant 3 : index
    %c0_325 = arith.constant 0 : index
    %c0_326 = arith.constant 0 : index
    %359 = vector.load %arg7[%c1_323, %c3_324, %c0_325, %c0_326] : memref<2x4x1x8xf32, #tpu.memory_space<vmem>>, vector<1x1x1x8xf32>
    %360 = vector.shape_cast %359 : vector<1x1x1x8xf32> to vector<1x8xf32>
    %361 = vector.broadcast %360 : vector<1x8xf32> to vector<8x8xf32>
    %362 = arith.addf %358, %361 : vector<8x8xf32>
    %cst_327 = arith.constant dense<0.000000e+00> : vector<8x8xf32>
    %363 = tpu.matmul %348, %355, %cst_327 {dimension_numbers = #tpu.dot_dimension_numbers<[1], [1], [0], [0], [0, 0, 1, 0], [], []>} : vector<8x8xf32>, vector<8x8xf32>, vector<8x8xf32> -> vector<8x8xf32>
    %cst_328 = arith.constant dense<0xFF800000> : vector<8xf32>
    %364 = vector.multi_reduction <maximumf>, %363, %cst_328 [1] : vector<8x8xf32> to vector<8xf32>
    %365 = vector.shape_cast %364 : vector<8xf32> to vector<8x1xf32>
    %366 = vector.broadcast %365 : vector<8x1xf32> to vector<8x8xf32>
    %367 = arith.subf %363, %366 : vector<8x8xf32>
    %368 = math.exp %367 : vector<8x8xf32>
    %cst_329 = arith.constant dense<0.000000e+00> : vector<8xf32>
    %369 = vector.multi_reduction <add>, %368, %cst_329 [1] : vector<8x8xf32> to vector<8xf32>
    %370 = vector.shape_cast %369 : vector<8xf32> to vector<8x1xf32>
    %cst_330 = arith.constant 1.000000e+00 : f32
    %371 = vector.broadcast %cst_330 : f32 to vector<8x1xf32>
    %372 = arith.divf %371, %370 : vector<8x1xf32>
    %373 = vector.broadcast %372 : vector<8x1xf32> to vector<8x8xf32>
    %374 = arith.mulf %368, %373 : vector<8x8xf32>
    %cst_331 = arith.constant dense<0.000000e+00> : vector<8x8xf32>
    %375 = tpu.matmul %374, %362, %cst_331 {dimension_numbers = #tpu.dot_dimension_numbers<[1], [0], [0], [1], [0, 0, 1, 1], [], []>} : vector<8x8xf32>, vector<8x8xf32>, vector<8x8xf32> -> vector<8x8xf32>
    %c1_332 = arith.constant 1 : index
    %c3_333 = arith.constant 3 : index
    %c0_334 = arith.constant 0 : index
    %c0_335 = arith.constant 0 : index
    %376 = vector.load %arg8[%c1_332, %c3_333, %c0_334, %c0_335] : memref<2x4x8x32xf32, #tpu.memory_space<vmem>>, vector<1x1x8x32xf32>
    %377 = vector.shape_cast %376 : vector<1x1x8x32xf32> to vector<8x32xf32>
    %cst_336 = arith.constant dense<0.000000e+00> : vector<8x32xf32>
    %378 = tpu.matmul %375, %377, %cst_336 {dimension_numbers = #tpu.dot_dimension_numbers<[1], [0], [0], [1], [0, 0, 1, 1], [], []>} : vector<8x8xf32>, vector<8x32xf32>, vector<8x32xf32> -> vector<8x32xf32>
    %379 = arith.addf %341, %378 : vector<8x32xf32>
    %380 = arith.addf %223, %379 : vector<8x32xf32>
    %c1_337 = arith.constant 1 : index
    %c0_338 = arith.constant 0 : index
    %c0_339 = arith.constant 0 : index
    %381 = vector.load %arg10[%c1_337, %c0_338, %c0_339] : memref<2x1x32xf32, #tpu.memory_space<vmem>>, vector<1x1x32xf32>
    %382 = vector.shape_cast %381 : vector<1x1x32xf32> to vector<1x32xf32>
    %c1_340 = arith.constant 1 : index
    %c0_341 = arith.constant 0 : index
    %c0_342 = arith.constant 0 : index
    %383 = vector.load %arg11[%c1_340, %c0_341, %c0_342] : memref<2x1x32xf32, #tpu.memory_space<vmem>>, vector<1x1x32xf32>
    %384 = vector.shape_cast %383 : vector<1x1x32xf32> to vector<1x32xf32>
    %cst_343 = arith.constant dense<0.000000e+00> : vector<8xf32>
    %385 = vector.multi_reduction <add>, %380, %cst_343 [1] : vector<8x32xf32> to vector<8xf32>
    %386 = vector.shape_cast %385 : vector<8xf32> to vector<8x1xf32>
    %cst_344 = arith.constant 3.200000e+01 : f32
    %387 = vector.broadcast %cst_344 : f32 to vector<8x1xf32>
    %388 = arith.divf %386, %387 : vector<8x1xf32>
    %389 = vector.broadcast %388 : vector<8x1xf32> to vector<8x32xf32>
    %390 = arith.subf %380, %389 : vector<8x32xf32>
    %391 = arith.mulf %390, %390 : vector<8x32xf32>
    %cst_345 = arith.constant dense<0.000000e+00> : vector<8xf32>
    %392 = vector.multi_reduction <add>, %391, %cst_345 [1] : vector<8x32xf32> to vector<8xf32>
    %393 = vector.shape_cast %392 : vector<8xf32> to vector<8x1xf32>
    %cst_346 = arith.constant 3.200000e+01 : f32
    %394 = vector.broadcast %cst_346 : f32 to vector<8x1xf32>
    %395 = arith.divf %393, %394 : vector<8x1xf32>
    %cst_347 = arith.constant 9.99999974E-6 : f32
    %396 = vector.broadcast %cst_347 : f32 to vector<8x1xf32>
    %397 = arith.addf %395, %396 : vector<8x1xf32>
    %398 = math.rsqrt %397 : vector<8x1xf32>
    %399 = vector.broadcast %398 : vector<8x1xf32> to vector<8x32xf32>
    %400 = arith.mulf %390, %399 : vector<8x32xf32>
    %401 = vector.broadcast %382 : vector<1x32xf32> to vector<8x32xf32>
    %402 = arith.mulf %400, %401 : vector<8x32xf32>
    %403 = vector.broadcast %384 : vector<1x32xf32> to vector<8x32xf32>
    %404 = arith.addf %402, %403 : vector<8x32xf32>
    %c1_348 = arith.constant 1 : index
    %c0_349 = arith.constant 0 : index
    %c0_350 = arith.constant 0 : index
    %405 = vector.load %arg12[%c1_348, %c0_349, %c0_350] : memref<2x32x64xf32, #tpu.memory_space<vmem>>, vector<1x32x64xf32>
    %406 = vector.shape_cast %405 : vector<1x32x64xf32> to vector<32x64xf32>
    %cst_351 = arith.constant dense<0.000000e+00> : vector<8x64xf32>
    %407 = tpu.matmul %404, %406, %cst_351 {dimension_numbers = #tpu.dot_dimension_numbers<[1], [0], [0], [1], [0, 0, 1, 1], [], []>} : vector<8x32xf32>, vector<32x64xf32>, vector<8x64xf32> -> vector<8x64xf32>
    %c1_352 = arith.constant 1 : index
    %c0_353 = arith.constant 0 : index
    %c0_354 = arith.constant 0 : index
    %408 = vector.load %arg13[%c1_352, %c0_353, %c0_354] : memref<2x1x64xf32, #tpu.memory_space<vmem>>, vector<1x1x64xf32>
    %409 = vector.shape_cast %408 : vector<1x1x64xf32> to vector<1x64xf32>
    %410 = vector.broadcast %409 : vector<1x64xf32> to vector<8x64xf32>
    %411 = arith.addf %407, %410 : vector<8x64xf32>
    %cst_355 = arith.constant 0.000000e+00 : f32
    %412 = vector.broadcast %cst_355 : f32 to vector<8x64xf32>
    %413 = arith.maximumf %411, %412 : vector<8x64xf32>
    %c1_356 = arith.constant 1 : index
    %c0_357 = arith.constant 0 : index
    %c0_358 = arith.constant 0 : index
    %414 = vector.load %arg14[%c1_356, %c0_357, %c0_358] : memref<2x64x32xf32, #tpu.memory_space<vmem>>, vector<1x64x32xf32>
    %415 = vector.shape_cast %414 : vector<1x64x32xf32> to vector<64x32xf32>
    %cst_359 = arith.constant dense<0.000000e+00> : vector<8x32xf32>
    %416 = tpu.matmul %413, %415, %cst_359 {dimension_numbers = #tpu.dot_dimension_numbers<[1], [0], [0], [1], [0, 0, 1, 1], [], []>} : vector<8x64xf32>, vector<64x32xf32>, vector<8x32xf32> -> vector<8x32xf32>
    %c1_360 = arith.constant 1 : index
    %c0_361 = arith.constant 0 : index
    %c0_362 = arith.constant 0 : index
    %417 = vector.load %arg15[%c1_360, %c0_361, %c0_362] : memref<2x1x32xf32, #tpu.memory_space<vmem>>, vector<1x1x32xf32>
    %418 = vector.shape_cast %417 : vector<1x1x32xf32> to vector<1x32xf32>
    %419 = vector.broadcast %418 : vector<1x32xf32> to vector<8x32xf32>
    %420 = arith.addf %416, %419 : vector<8x32xf32>
    %421 = arith.addf %404, %420 : vector<8x32xf32>
    %c1_363 = arith.constant 1 : index
    %c0_364 = arith.constant 0 : index
    %c0_365 = arith.constant 0 : index
    %422 = vector.load %arg16[%c1_363, %c0_364, %c0_365] : memref<2x1x32xf32, #tpu.memory_space<vmem>>, vector<1x1x32xf32>
    %423 = vector.shape_cast %422 : vector<1x1x32xf32> to vector<1x32xf32>
    %c1_366 = arith.constant 1 : index
    %c0_367 = arith.constant 0 : index
    %c0_368 = arith.constant 0 : index
    %424 = vector.load %arg17[%c1_366, %c0_367, %c0_368] : memref<2x1x32xf32, #tpu.memory_space<vmem>>, vector<1x1x32xf32>
    %425 = vector.shape_cast %424 : vector<1x1x32xf32> to vector<1x32xf32>
    %cst_369 = arith.constant dense<0.000000e+00> : vector<8xf32>
    %426 = vector.multi_reduction <add>, %421, %cst_369 [1] : vector<8x32xf32> to vector<8xf32>
    %427 = vector.shape_cast %426 : vector<8xf32> to vector<8x1xf32>
    %cst_370 = arith.constant 3.200000e+01 : f32
    %428 = vector.broadcast %cst_370 : f32 to vector<8x1xf32>
    %429 = arith.divf %427, %428 : vector<8x1xf32>
    %430 = vector.broadcast %429 : vector<8x1xf32> to vector<8x32xf32>
    %431 = arith.subf %421, %430 : vector<8x32xf32>
    %432 = arith.mulf %431, %431 : vector<8x32xf32>
    %cst_371 = arith.constant dense<0.000000e+00> : vector<8xf32>
    %433 = vector.multi_reduction <add>, %432, %cst_371 [1] : vector<8x32xf32> to vector<8xf32>
    %434 = vector.shape_cast %433 : vector<8xf32> to vector<8x1xf32>
    %cst_372 = arith.constant 3.200000e+01 : f32
    %435 = vector.broadcast %cst_372 : f32 to vector<8x1xf32>
    %436 = arith.divf %434, %435 : vector<8x1xf32>
    %cst_373 = arith.constant 9.99999974E-6 : f32
    %437 = vector.broadcast %cst_373 : f32 to vector<8x1xf32>
    %438 = arith.addf %436, %437 : vector<8x1xf32>
    %439 = math.rsqrt %438 : vector<8x1xf32>
    %440 = vector.broadcast %439 : vector<8x1xf32> to vector<8x32xf32>
    %441 = arith.mulf %431, %440 : vector<8x32xf32>
    %442 = vector.broadcast %423 : vector<1x32xf32> to vector<8x32xf32>
    %443 = arith.mulf %441, %442 : vector<8x32xf32>
    %444 = vector.broadcast %425 : vector<1x32xf32> to vector<8x32xf32>
    %445 = arith.addf %443, %444 : vector<8x32xf32>
    %c0_374 = arith.constant 0 : index
    %c0_375 = arith.constant 0 : index
    %c0_376 = arith.constant 0 : index
    %446 = vector.load %arg18[%c0_374, %c0_375, %c0_376] : memref<1x8x32xf32, #tpu.memory_space<vmem>>, vector<1x8x32xf32>
    %447 = vector.shape_cast %446 : vector<1x8x32xf32> to vector<8x32xf32>
    %448 = vector.shape_cast %445 : vector<8x32xf32> to vector<1x8x32xf32>
    tpu.vector_store %arg18[%c0_374, %c0_375, %c0_376], %448 {strides = array<i32>} : memref<1x8x32xf32, #tpu.memory_space<vmem>>, vector<1x8x32xf32>,
    return
  }
  func.func @transform_0(%arg0: i32) -> (i32, i32, i32) {
    %c0_i32 = arith.constant 0 : i32
    %c0_i32_0 = arith.constant 0 : i32
    %c0_i32_1 = arith.constant 0 : i32
    return %arg0, %c0_i32, %c0_i32_0 : i32, i32, i32
  }
  func.func @transform_1(%arg0: i32) -> (i32, i32, i32, i32) {
    %c0_i32 = arith.constant 0 : i32
    %c0_i32_0 = arith.constant 0 : i32
    %c0_i32_1 = arith.constant 0 : i32
    %c0_i32_2 = arith.constant 0 : i32
    %c0_i32_3 = arith.constant 0 : i32
    return %c0_i32, %c0_i32_0, %c0_i32_1, %c0_i32_2 : i32, i32, i32, i32
  }
  func.func @transform_2(%arg0: i32) -> (i32, i32, i32, i32) {
    %c0_i32 = arith.constant 0 : i32
    %c0_i32_0 = arith.constant 0 : i32
    %c0_i32_1 = arith.constant 0 : i32
    %c0_i32_2 = arith.constant 0 : i32
    %c0_i32_3 = arith.constant 0 : i32
    return %c0_i32, %c0_i32_0, %c0_i32_1, %c0_i32_2 : i32, i32, i32, i32
  }
  func.func @transform_3(%arg0: i32) -> (i32, i32, i32, i32) {
    %c0_i32 = arith.constant 0 : i32
    %c0_i32_0 = arith.constant 0 : i32
    %c0_i32_1 = arith.constant 0 : i32
    %c0_i32_2 = arith.constant 0 : i32
    %c0_i32_3 = arith.constant 0 : i32
    return %c0_i32, %c0_i32_0, %c0_i32_1, %c0_i32_2 : i32, i32, i32, i32
  }
  func.func @transform_4(%arg0: i32) -> (i32, i32, i32, i32) {
    %c0_i32 = arith.constant 0 : i32
    %c0_i32_0 = arith.constant 0 : i32
    %c0_i32_1 = arith.constant 0 : i32
    %c0_i32_2 = arith.constant 0 : i32
    %c0_i32_3 = arith.constant 0 : i32
    return %c0_i32, %c0_i32_0, %c0_i32_1, %c0_i32_2 : i32, i32, i32, i32
  }
  func.func @transform_5(%arg0: i32) -> (i32, i32, i32, i32) {
    %c0_i32 = arith.constant 0 : i32
    %c0_i32_0 = arith.constant 0 : i32
    %c0_i32_1 = arith.constant 0 : i32
    %c0_i32_2 = arith.constant 0 : i32
    %c0_i32_3 = arith.constant 0 : i32
    return %c0_i32, %c0_i32_0, %c0_i32_1, %c0_i32_2 : i32, i32, i32, i32
  }
  func.func @transform_6(%arg0: i32) -> (i32, i32, i32, i32) {
    %c0_i32 = arith.constant 0 : i32
    %c0_i32_0 = arith.constant 0 : i32
    %c0_i32_1 = arith.constant 0 : i32
    %c0_i32_2 = arith.constant 0 : i32
    %c0_i32_3 = arith.constant 0 : i32
    return %c0_i32, %c0_i32_0, %c0_i32_1, %c0_i32_2 : i32, i32, i32, i32
  }
  func.func @transform_7(%arg0: i32) -> (i32, i32, i32, i32) {
    %c0_i32 = arith.constant 0 : i32
    %c0_i32_0 = arith.constant 0 : i32
    %c0_i32_1 = arith.constant 0 : i32
    %c0_i32_2 = arith.constant 0 : i32
    %c0_i32_3 = arith.constant 0 : i32
    return %c0_i32, %c0_i32_0, %c0_i32_1, %c0_i32_2 : i32, i32, i32, i32
  }
  func.func @transform_8(%arg0: i32) -> (i32, i32, i32) {
    %c0_i32 = arith.constant 0 : i32
    %c0_i32_0 = arith.constant 0 : i32
    %c0_i32_1 = arith.constant 0 : i32
    %c0_i32_2 = arith.constant 0 : i32
    return %c0_i32, %c0_i32_0, %c0_i32_1 : i32, i32, i32
  }
  func.func @transform_9(%arg0: i32) -> (i32, i32, i32) {
    %c0_i32 = arith.constant 0 : i32
    %c0_i32_0 = arith.constant 0 : i32
    %c0_i32_1 = arith.constant 0 : i32
    %c0_i32_2 = arith.constant 0 : i32
    return %c0_i32, %c0_i32_0, %c0_i32_1 : i32, i32, i32
  }
  func.func @transform_10(%arg0: i32) -> (i32, i32, i32) {
    %c0_i32 = arith.constant 0 : i32
    %c0_i32_0 = arith.constant 0 : i32
    %c0_i32_1 = arith.constant 0 : i32
    %c0_i32_2 = arith.constant 0 : i32
    return %c0_i32, %c0_i32_0, %c0_i32_1 : i32, i32, i32
  }
  func.func @transform_11(%arg0: i32) -> (i32, i32, i32) {
    %c0_i32 = arith.constant 0 : i32
    %c0_i32_0 = arith.constant 0 : i32
    %c0_i32_1 = arith.constant 0 : i32
    %c0_i32_2 = arith.constant 0 : i32
    return %c0_i32, %c0_i32_0, %c0_i32_1 : i32, i32, i32
  }
  func.func @transform_12(%arg0: i32) -> (i32, i32, i32) {
    %c0_i32 = arith.constant 0 : i32
    %c0_i32_0 = arith.constant 0 : i32
    %c0_i32_1 = arith.constant 0 : i32
    %c0_i32_2 = arith.constant 0 : i32
    return %c0_i32, %c0_i32_0, %c0_i32_1 : i32, i32, i32
  }
  func.func @transform_13(%arg0: i32) -> (i32, i32, i32) {
    %c0_i32 = arith.constant 0 : i32
    %c0_i32_0 = arith.constant 0 : i32
    %c0_i32_1 = arith.constant 0 : i32
    %c0_i32_2 = arith.constant 0 : i32
    return %c0_i32, %c0_i32_0, %c0_i32_1 : i32, i32, i32
  }
  func.func @transform_14(%arg0: i32) -> (i32, i32, i32) {
    %c0_i32 = arith.constant 0 : i32
    %c0_i32_0 = arith.constant 0 : i32
    %c0_i32_1 = arith.constant 0 : i32
    %c0_i32_2 = arith.constant 0 : i32
    return %c0_i32, %c0_i32_0, %c0_i32_1 : i32, i32, i32
  }
  func.func @transform_15(%arg0: i32) -> (i32, i32, i32) {
    %c0_i32 = arith.constant 0 : i32
    %c0_i32_0 = arith.constant 0 : i32
    %c0_i32_1 = arith.constant 0 : i32
    %c0_i32_2 = arith.constant 0 : i32
    return %c0_i32, %c0_i32_0, %c0_i32_1 : i32, i32, i32
  }
  func.func @transform_16(%arg0: i32) -> (i32, i32, i32) {
    %c0_i32 = arith.constant 0 : i32
    %c0_i32_0 = arith.constant 0 : i32
    %c0_i32_1 = arith.constant 0 : i32
    %c0_i32_2 = arith.constant 0 : i32
    return %c0_i32, %c0_i32_0, %c0_i32_1 : i32, i32, i32
  }
  func.func @transform_17(%arg0: i32) -> (i32, i32, i32) {
    %c0_i32 = arith.constant 0 : i32
    %c0_i32_0 = arith.constant 0 : i32
    %c0_i32_1 = arith.constant 0 : i32
    return %arg0, %c0_i32, %c0_i32_0 : i32, i32, i32
  }
}

</mosaic_0001>

<llo_original>
// kernel: tpu_custom_call.1
$region0: #{tpu_custom_call.1}
  #allocation0 [shape = 'u32[]', space=smem, size = 0x4, offset = 0x4, fixed_abs, tag = 'smem constant byte address 0x4 - core index']
  #allocation1 [shape = 'u32[144,128]{1,0:T(1,128)}', space=vmem, size = 0x12000, scoped, tag = 'internal scratch']
  %s0 = inlined_call_operand.vmem [shape: f32[2,8,32], index: 0, kind: input, shape index: {}]
  %s1 = inlined_call_operand.vmem [shape: f32[2,4,32,8], index: 1, kind: input, shape index: {}]
  %s2 = inlined_call_operand.vmem [shape: f32[2,4,1,8], index: 2, kind: input, shape index: {}]
  %s3 = inlined_call_operand.vmem [shape: f32[2,4,32,8], index: 3, kind: input, shape index: {}]
  %s4 = inlined_call_operand.vmem [shape: f32[2,4,1,8], index: 4, kind: input, shape index: {}]
  %s5 = inlined_call_operand.vmem [shape: f32[2,4,32,8], index: 5, kind: input, shape index: {}]
  %s6 = inlined_call_operand.vmem [shape: f32[2,4,1,8], index: 6, kind: input, shape index: {}]
  %s7 = inlined_call_operand.vmem [shape: f32[2,4,8,32], index: 7, kind: input, shape index: {}]
  %s8 = inlined_call_operand.vmem [shape: f32[2,1,32], index: 8, kind: input, shape index: {}]
  %s9 = inlined_call_operand.vmem [shape: f32[2,1,32], index: 9, kind: input, shape index: {}]
  %s10 = inlined_call_operand.vmem [shape: f32[2,1,32], index: 10, kind: input, shape index: {}]
  %s11 = inlined_call_operand.vmem [shape: f32[2,32,64], index: 11, kind: input, shape index: {}]
  %s12 = inlined_call_operand.vmem [shape: f32[2,1,64], index: 12, kind: input, shape index: {}]
  %s13 = inlined_call_operand.vmem [shape: f32[2,64,32], index: 13, kind: input, shape index: {}]
  %s14 = inlined_call_operand.vmem [shape: f32[2,1,32], index: 14, kind: input, shape index: {}]
  %s15 = inlined_call_operand.vmem [shape: f32[2,1,32], index: 15, kind: input, shape index: {}]
  %s16 = inlined_call_operand.vmem [shape: f32[2,1,32], index: 16, kind: input, shape index: {}]
  %s17 = inlined_call_operand.hbm [shape: f32[2,8,32], index: 17, kind: output, shape index: {}]
  %s18 = sld [smem:[#allocation0]]
  $region101: #{tpu_custom_call.1} parent=0
    _
  %s20 = ssub.s32 1, %s18
  %s21 = scalar_select 0, %s20, %s18
  $region1: #{tpu_custom_call.1} parent=0
    #allocation2 [shape = 'u8[8192]{0}', space=vmem, size = 0x2000, scoped, tag = 'output window, operand 0']
    #allocation3 [shape = 's32[2]{0}', space=sflag, size = 0x8, scoped, tag = 'scoped memory for tpu_custom_call.1']
    %22 = vsyncpa [#allocation3], 0
    %s23 = scalar_lea.sflag [#allocation3], 1
    %24 = vsyncpa %s23, 0
    loop: start=0, step=1, limit=4
    $region2: #{tpu_custom_call.1} parent=1 // loop_pre_header
      _
    $region3: #{tpu_custom_call.1} parent=1 // loop_header
      %s26 = sphi 0, %s30
      %p27 = scmp.ge.s32.totalorder %s26, 4
      %s36 = sphi 0, %s38
      %s39 = sphi 0, %s36
      %s40 = sphi 0, %s39
      %s56 = sphi 0, %s40
      %s60 = sphi 0, %s60
      %s62 = sphi 0, %s60
      %s63 = sphi 0, %s62
      %s77 = sphi 0, %s63
      %s81 = sphi 0, %s81
      %s83 = sphi 0, %s81
      %s84 = sphi 0, %s83
      %s98 = sphi 0, %s84
      %s102 = sphi 0, %s102
      %s104 = sphi 0, %s102
      %s105 = sphi 0, %s104
      %s119 = sphi 0, %s105
      %s123 = sphi 0, %s123
      %s125 = sphi 0, %s123
      %s126 = sphi 0, %s125
      %s140 = sphi 0, %s126
      %s144 = sphi 0, %s144
      %s146 = sphi 0, %s144
      %s147 = sphi 0, %s146
      %s161 = sphi 0, %s147
      %s165 = sphi 0, %s165
      %s167 = sphi 0, %s165
      %s168 = sphi 0, %s167
      %s182 = sphi 0, %s168
      %s186 = sphi 0, %s186
      %s188 = sphi 0, %s186
      %s189 = sphi 0, %s188
      %s203 = sphi 0, %s189
      %s207 = sphi 0, %s207
      %s209 = sphi 0, %s207
      %s210 = sphi 0, %s209
      %s224 = sphi 0, %s210
      %s228 = sphi 0, %s228
      %s230 = sphi 0, %s228
      %s231 = sphi 0, %s230
      %s245 = sphi 0, %s231
      %s249 = sphi 0, %s249
      %s251 = sphi 0, %s249
      %s252 = sphi 0, %s251
      %s266 = sphi 0, %s252
      %s270 = sphi 0, %s270
      %s272 = sphi 0, %s270
      %s273 = sphi 0, %s272
      %s287 = sphi 0, %s273
      %s291 = sphi 0, %s291
      %s293 = sphi 0, %s291
      %s294 = sphi 0, %s293
      %s308 = sphi 0, %s294
      %s312 = sphi 0, %s312
      %s314 = sphi 0, %s312
      %s315 = sphi 0, %s314
      %s329 = sphi 0, %s315
      %s333 = sphi 0, %s333
      %s335 = sphi 0, %s333
      %s336 = sphi 0, %s335
      %s350 = sphi 0, %s336
      %s354 = sphi 0, %s354
      %s356 = sphi 0, %s354
      %s357 = sphi 0, %s356
      %s371 = sphi 0, %s357
      %s375 = sphi 0, %s375
      %s377 = sphi 0, %s375
      %s378 = sphi 0, %s377
      %s392 = sphi 0, %s378
      %s398 = sphi 0, %s400
      %s401 = sphi 0, %s398
      %s402 = sphi 0, %s401
      %s418 = sphi 0, %s402
    $region4: #{tpu_custom_call.1} parent=1 // loop_header_branch
      %29 = sbr.rel (%p27) target = $region8
    $region5: #{tpu_custom_call.1} parent=1 // loop_body
      %s31 = ssub.s32 %s26, 1
      %s32 = ssub.s32 %s26, 2
      %s33 = sadd.s32 %s26, 1
      %s34 = ssub.s32 %s26, %s33
      %p35 = scmp.eq.s32.totalorder %s34, 0
      %s37 = sadd.s32 %s36, 1
      %s38 = scalar_select %p35, %s36, %s37
      %p41 = pneg %p35
      %p42 = scmp.eq.s32.totalorder %s26, 1
      %p43 = por %p41, %p42
      %p44 = scmp.ne.s32.totalorder %s36, %s39
      %p45 = scmp.eq.s32.totalorder %s26, 0
      %p46 = por %p44, %p45
      %p47 = scmp.ne.s32.totalorder %s36, %s39
      %p48 = scmp.eq.s32.totalorder %s31, 1
      %p49 = por %p47, %p48
      %p50 = scmp.ne.s32.totalorder %s39, %s40
      %p51 = scmp.eq.s32.totalorder %s31, 0
      %p52 = por %p50, %p51
      %p53 = scmp.ne.s32.totalorder %s39, %s40
      %p54 = scmp.eq.s32.totalorder %s32, 1
      %p55 = por %p53, %p54
      %p57 = scmp.ne.s32.totalorder %s40, %s56
      %p58 = scmp.eq.s32.totalorder %s32, 0
      %p59 = por %p57, %p58
      %s61 = sadd.s32 %s60, 1
      %p64 = scmp.eq.s32.totalorder %s26, 1
      %p65 = scmp.ne.s32.totalorder %s60, %s62
      %p66 = scmp.eq.s32.totalorder %s26, 0
      %p67 = por %p65, %p66
      %p68 = scmp.ne.s32.totalorder %s60, %s62
      %p69 = scmp.eq.s32.totalorder %s31, 1
      %p70 = por %p68, %p69
      %p71 = scmp.ne.s32.totalorder %s62, %s63
      %p72 = scmp.eq.s32.totalorder %s31, 0
      %p73 = por %p71, %p72
      %p74 = scmp.ne.s32.totalorder %s62, %s63
      %p75 = scmp.eq.s32.totalorder %s32, 1
      %p76 = por %p74, %p75
      %p78 = scmp.ne.s32.totalorder %s63, %s77
      %p79 = scmp.eq.s32.totalorder %s32, 0
      %p80 = por %p78, %p79
      %s82 = sadd.s32 %s81, 1
      %p85 = scmp.eq.s32.totalorder %s26, 1
      %p86 = scmp.ne.s32.totalorder %s81, %s83
      %p87 = scmp.eq.s32.totalorder %s26, 0
      %p88 = por %p86, %p87
      %p89 = scmp.ne.s32.totalorder %s81, %s83
      %p90 = scmp.eq.s32.totalorder %s31, 1
      %p91 = por %p89, %p90
      %p92 = scmp.ne.s32.totalorder %s83, %s84
      %p93 = scmp.eq.s32.totalorder %s31, 0
      %p94 = por %p92, %p93
      %p95 = scmp.ne.s32.totalorder %s83, %s84
      %p96 = scmp.eq.s32.totalorder %s32, 1
      %p97 = por %p95, %p96
      %p99 = scmp.ne.s32.totalorder %s84, %s98
      %p100 = scmp.eq.s32.totalorder %s32, 0
      %p101 = por %p99, %p100
      %s103 = sadd.s32 %s102, 1
      %p106 = scmp.eq.s32.totalorder %s26, 1
      %p107 = scmp.ne.s32.totalorder %s102, %s104
      %p108 = scmp.eq.s32.totalorder %s26, 0
      %p109 = por %p107, %p108
      %p110 = scmp.ne.s32.totalorder %s102, %s104
      %p111 = scmp.eq.s32.totalorder %s31, 1
      %p112 = por %p110, %p111
      %p113 = scmp.ne.s32.totalorder %s104, %s105
      %p114 = scmp.eq.s32.totalorder %s31, 0
      %p115 = por %p113, %p114
      %p116 = scmp.ne.s32.totalorder %s104, %s105
      %p117 = scmp.eq.s32.totalorder %s32, 1
      %p118 = por %p116, %p117
      %p120 = scmp.ne.s32.totalorder %s105, %s119
      %p121 = scmp.eq.s32.totalorder %s32, 0
      %p122 = por %p120, %p121
      %s124 = sadd.s32 %s123, 1
      %p127 = scmp.eq.s32.totalorder %s26, 1
      %p128 = scmp.ne.s32.totalorder %s123, %s125
      %p129 = scmp.eq.s32.totalorder %s26, 0
      %p130 = por %p128, %p129
      %p131 = scmp.ne.s32.totalorder %s123, %s125
      %p132 = scmp.eq.s32.totalorder %s31, 1
      %p133 = por %p131, %p132
      %p134 = scmp.ne.s32.totalorder %s125, %s126
      %p135 = scmp.eq.s32.totalorder %s31, 0
      %p136 = por %p134, %p135
      %p137 = scmp.ne.s32.totalorder %s125, %s126
      %p138 = scmp.eq.s32.totalorder %s32, 1
      %p139 = por %p137, %p138
      %p141 = scmp.ne.s32.totalorder %s126, %s140
      %p142 = scmp.eq.s32.totalorder %s32, 0
      %p143 = por %p141, %p142
      %s145 = sadd.s32 %s144, 1
      %p148 = scmp.eq.s32.totalorder %s26, 1
      %p149 = scmp.ne.s32.totalorder %s144, %s146
      %p150 = scmp.eq.s32.totalorder %s26, 0
      %p151 = por %p149, %p150
      %p152 = scmp.ne.s32.totalorder %s144, %s146
      %p153 = scmp.eq.s32.totalorder %s31, 1
      %p154 = por %p152, %p153
      %p155 = scmp.ne.s32.totalorder %s146, %s147
      %p156 = scmp.eq.s32.totalorder %s31, 0
      %p157 = por %p155, %p156
      %p158 = scmp.ne.s32.totalorder %s146, %s147
      %p159 = scmp.eq.s32.totalorder %s32, 1
      %p160 = por %p158, %p159
      %p162 = scmp.ne.s32.totalorder %s147, %s161
      %p163 = scmp.eq.s32.totalorder %s32, 0
      %p164 = por %p162, %p163
      %s166 = sadd.s32 %s165, 1
      %p169 = scmp.eq.s32.totalorder %s26, 1
      %p170 = scmp.ne.s32.totalorder %s165, %s167
      %p171 = scmp.eq.s32.totalorder %s26, 0
      %p172 = por %p170, %p171
      %p173 = scmp.ne.s32.totalorder %s165, %s167
      %p174 = scmp.eq.s32.totalorder %s31, 1
      %p175 = por %p173, %p174
      %p176 = scmp.ne.s32.totalorder %s167, %s168
      %p177 = scmp.eq.s32.totalorder %s31, 0
      %p178 = por %p176, %p177
      %p179 = scmp.ne.s32.totalorder %s167, %s168
      %p180 = scmp.eq.s32.totalorder %s32, 1
      %p181 = por %p179, %p180
      %p183 = scmp.ne.s32.totalorder %s168, %s182
      %p184 = scmp.eq.s32.totalorder %s32, 0
      %p185 = por %p183, %p184
      %s187 = sadd.s32 %s186, 1
      %p190 = scmp.eq.s32.totalorder %s26, 1
      %p191 = scmp.ne.s32.totalorder %s186, %s188
      %p192 = scmp.eq.s32.totalorder %s26, 0
      %p193 = por %p191, %p192
      %p194 = scmp.ne.s32.totalorder %s186, %s188
      %p195 = scmp.eq.s32.totalorder %s31, 1
      %p196 = por %p194, %p195
      %p197 = scmp.ne.s32.totalorder %s188, %s189
      %p198 = scmp.eq.s32.totalorder %s31, 0
      %p199 = por %p197, %p198
      %p200 = scmp.ne.s32.totalorder %s188, %s189
      %p201 = scmp.eq.s32.totalorder %s32, 1
      %p202 = por %p200, %p201
      %p204 = scmp.ne.s32.totalorder %s189, %s203
      %p205 = scmp.eq.s32.totalorder %s32, 0
      %p206 = por %p204, %p205
      %s208 = sadd.s32 %s207, 1
      %p211 = scmp.eq.s32.totalorder %s26, 1
      %p212 = scmp.ne.s32.totalorder %s207, %s209
      %p213 = scmp.eq.s32.totalorder %s26, 0
      %p214 = por %p212, %p213
      %p215 = scmp.ne.s32.totalorder %s207, %s209
      %p216 = scmp.eq.s32.totalorder %s31, 1
      %p217 = por %p215, %p216
      %p218 = scmp.ne.s32.totalorder %s209, %s210
      %p219 = scmp.eq.s32.totalorder %s31, 0
      %p220 = por %p218, %p219
      %p221 = scmp.ne.s32.totalorder %s209, %s210
      %p222 = scmp.eq.s32.totalorder %s32, 1
      %p223 = por %p221, %p222
      %p225 = scmp.ne.s32.totalorder %s210, %s224
      %p226 = scmp.eq.s32.totalorder %s32, 0
      %p227 = por %p225, %p226
      %s229 = sadd.s32 %s228, 1
      %p232 = scmp.eq.s32.totalorder %s26, 1
      %p233 = scmp.ne.s32.totalorder %s228, %s230
      %p234 = scmp.eq.s32.totalorder %s26, 0
      %p235 = por %p233, %p234
      %p236 = scmp.ne.s32.totalorder %s228, %s230
      %p237 = scmp.eq.s32.totalorder %s31, 1
      %p238 = por %p236, %p237
      %p239 = scmp.ne.s32.totalorder %s230, %s231
      %p240 = scmp.eq.s32.totalorder %s31, 0
      %p241 = por %p239, %p240
      %p242 = scmp.ne.s32.totalorder %s230, %s231
      %p243 = scmp.eq.s32.totalorder %s32, 1
      %p244 = por %p242, %p243
      %p246 = scmp.ne.s32.totalorder %s231, %s245
      %p247 = scmp.eq.s32.totalorder %s32, 0
      %p248 = por %p246, %p247
      %s250 = sadd.s32 %s249, 1
      %p253 = scmp.eq.s32.totalorder %s26, 1
      %p254 = scmp.ne.s32.totalorder %s249, %s251
      %p255 = scmp.eq.s32.totalorder %s26, 0
      %p256 = por %p254, %p255
      %p257 = scmp.ne.s32.totalorder %s249, %s251
      %p258 = scmp.eq.s32.totalorder %s31, 1
      %p259 = por %p257, %p258
      %p260 = scmp.ne.s32.totalorder %s251, %s252
      %p261 = scmp.eq.s32.totalorder %s31, 0
      %p262 = por %p260, %p261
      %p263 = scmp.ne.s32.totalorder %s251, %s252
      %p264 = scmp.eq.s32.totalorder %s32, 1
      %p265 = por %p263, %p264
      %p267 = scmp.ne.s32.totalorder %s252, %s266
      %p268 = scmp.eq.s32.totalorder %s32, 0
      %p269 = por %p267, %p268
      %s271 = sadd.s32 %s270, 1
      %p274 = scmp.eq.s32.totalorder %s26, 1
      %p275 = scmp.ne.s32.totalorder %s270, %s272
      %p276 = scmp.eq.s32.totalorder %s26, 0
      %p277 = por %p275, %p276
      %p278 = scmp.ne.s32.totalorder %s270, %s272
      %p279 = scmp.eq.s32.totalorder %s31, 1
      %p280 = por %p278, %p279
      %p281 = scmp.ne.s32.totalorder %s272, %s273
      %p282 = scmp.eq.s32.totalorder %s31, 0
      %p283 = por %p281, %p282
      %p284 = scmp.ne.s32.totalorder %s272, %s273
      %p285 = scmp.eq.s32.totalorder %s32, 1
      %p286 = por %p284, %p285
      %p288 = scmp.ne.s32.totalorder %s273, %s287
      %p289 = scmp.eq.s32.totalorder %s32, 0
      %p290 = por %p288, %p289
      %s292 = sadd.s32 %s291, 1
      %p295 = scmp.eq.s32.totalorder %s26, 1
      %p296 = scmp.ne.s32.totalorder %s291, %s293
      %p297 = scmp.eq.s32.totalorder %s26, 0
      %p298 = por %p296, %p297
      %p299 = scmp.ne.s32.totalorder %s291, %s293
      %p300 = scmp.eq.s32.totalorder %s31, 1
      %p301 = por %p299, %p300
      %p302 = scmp.ne.s32.totalorder %s293, %s294
      %p303 = scmp.eq.s32.totalorder %s31, 0
      %p304 = por %p302, %p303
      %p305 = scmp.ne.s32.totalorder %s293, %s294
      %p306 = scmp.eq.s32.totalorder %s32, 1
      %p307 = por %p305, %p306
      %p309 = scmp.ne.s32.totalorder %s294, %s308
      %p310 = scmp.eq.s32.totalorder %s32, 0
      %p311 = por %p309, %p310
      %s313 = sadd.s32 %s312, 1
      %p316 = scmp.eq.s32.totalorder %s26, 1
      %p317 = scmp.ne.s32.totalorder %s312, %s314
      %p318 = scmp.eq.s32.totalorder %s26, 0
      %p319 = por %p317, %p318
      %p320 = scmp.ne.s32.totalorder %s312, %s314
      %p321 = scmp.eq.s32.totalorder %s31, 1
      %p322 = por %p320, %p321
      %p323 = scmp.ne.s32.totalorder %s314, %s315
      %p324 = scmp.eq.s32.totalorder %s31, 0
      %p325 = por %p323, %p324
      %p326 = scmp.ne.s32.totalorder %s314, %s315
      %p327 = scmp.eq.s32.totalorder %s32, 1
      %p328 = por %p326, %p327
      %p330 = scmp.ne.s32.totalorder %s315, %s329
      %p331 = scmp.eq.s32.totalorder %s32, 0
      %p332 = por %p330, %p331
      %s334 = sadd.s32 %s333, 1
      %p337 = scmp.eq.s32.totalorder %s26, 1
      %p338 = scmp.ne.s32.totalorder %s333, %s335
      %p339 = scmp.eq.s32.totalorder %s26, 0
      %p340 = por %p338, %p339
      %p341 = scmp.ne.s32.totalorder %s333, %s335
      %p342 = scmp.eq.s32.totalorder %s31, 1
      %p343 = por %p341, %p342
      %p344 = scmp.ne.s32.totalorder %s335, %s336
      %p345 = scmp.eq.s32.totalorder %s31, 0
      %p346 = por %p344, %p345
      %p347 = scmp.ne.s32.totalorder %s335, %s336
      %p348 = scmp.eq.s32.totalorder %s32, 1
      %p349 = por %p347, %p348
      %p351 = scmp.ne.s32.totalorder %s336, %s350
      %p352 = scmp.eq.s32.totalorder %s32, 0
      %p353 = por %p351, %p352
      %s355 = sadd.s32 %s354, 1
      %p358 = scmp.eq.s32.totalorder %s26, 1
      %p359 = scmp.ne.s32.totalorder %s354, %s356
      %p360 = scmp.eq.s32.totalorder %s26, 0
      %p361 = por %p359, %p360
      %p362 = scmp.ne.s32.totalorder %s354, %s356
      %p363 = scmp.eq.s32.totalorder %s31, 1
      %p364 = por %p362, %p363
      %p365 = scmp.ne.s32.totalorder %s356, %s357
      %p366 = scmp.eq.s32.totalorder %s31, 0
      %p367 = por %p365, %p366
      %p368 = scmp.ne.s32.totalorder %s356, %s357
      %p369 = scmp.eq.s32.totalorder %s32, 1
      %p370 = por %p368, %p369
      %p372 = scmp.ne.s32.totalorder %s357, %s371
      %p373 = scmp.eq.s32.totalorder %s32, 0
      %p374 = por %p372, %p373
      %s376 = sadd.s32 %s375, 1
      %p379 = scmp.eq.s32.totalorder %s26, 1
      %p380 = scmp.ne.s32.totalorder %s375, %s377
      %p381 = scmp.eq.s32.totalorder %s26, 0
      %p382 = por %p380, %p381
      %p383 = scmp.ne.s32.totalorder %s375, %s377
      %p384 = scmp.eq.s32.totalorder %s31, 1
      %p385 = por %p383, %p384
      %p386 = scmp.ne.s32.totalorder %s377, %s378
      %p387 = scmp.eq.s32.totalorder %s31, 0
      %p388 = por %p386, %p387
      %p389 = scmp.ne.s32.totalorder %s377, %s378
      %p390 = scmp.eq.s32.totalorder %s32, 1
      %p391 = por %p389, %p390
      %p393 = scmp.ne.s32.totalorder %s378, %s392
      %p394 = scmp.eq.s32.totalorder %s32, 0
      %p395 = por %p393, %p394
      %s396 = ssub.s32 %s26, %s33
      %p397 = scmp.eq.s32.totalorder %s396, 0
      %s399 = sadd.s32 %s398, 1
      %s400 = scalar_select %p397, %s398, %s399
      %p403 = pneg %p397
      %p404 = scmp.eq.s32.totalorder %s26, 1
      %p405 = por %p403, %p404
      %p406 = scmp.ne.s32.totalorder %s398, %s401
      %p407 = scmp.eq.s32.totalorder %s26, 0
      %p408 = por %p406, %p407
      %p409 = scmp.ne.s32.totalorder %s398, %s401
      %p410 = scmp.eq.s32.totalorder %s31, 1
      %p411 = por %p409, %p410
      %p412 = scmp.ne.s32.totalorder %s401, %s402
      %p413 = scmp.eq.s32.totalorder %s31, 0
      %p414 = por %p412, %p413
      %p415 = scmp.ne.s32.totalorder %s401, %s402
      %p416 = scmp.eq.s32.totalorder %s32, 1
      %p417 = por %p415, %p416
      %p419 = scmp.ne.s32.totalorder %s402, %s418
      %p420 = scmp.eq.s32.totalorder %s32, 0
      %p421 = por %p419, %p420
      %p422 = scmp.le.s32.totalorder 1, %s26
      %p423 = scmp.lt.s32.totalorder %s26, 3
      %p424 = pnand %p422, %p423
      %p425 = pneg %p424
      // Predicated region
      $region9: #{tpu_custom_call.1} parent=5 // pred_check
        _
      $region10: #{tpu_custom_call.1} parent=5 // pred_check_branch
        %427 = sbr.rel (%p424) target = $region12
      $region11: #{tpu_custom_call.1} parent=5 // pred_region
        %s428 = ssub.s32 %s26, 1
        // Predicated region
        $region13: #{tpu_custom_call.1} parent=11 // pred_check
          %p429 = pneg %p73
        $region14: #{tpu_custom_call.1} parent=11 // pred_check_branch
          %431 = sbr.rel (%p429) target = $region16
        $region15: #{tpu_custom_call.1} parent=11 // pred_region
          _
        $region16: #{tpu_custom_call.1} parent=11 // pred_fallthru
          _
        // Predicated region
        $region17: #{tpu_custom_call.1} parent=11 // pred_check
          %p432 = pneg %p94
        $region18: #{tpu_custom_call.1} parent=11 // pred_check_branch
          %434 = sbr.rel (%p432) target = $region20
        $region19: #{tpu_custom_call.1} parent=11 // pred_region
          _
        $region20: #{tpu_custom_call.1} parent=11 // pred_fallthru
          _
        // Predicated region
        $region21: #{tpu_custom_call.1} parent=11 // pred_check
          %p435 = pneg %p115
        $region22: #{tpu_custom_call.1} parent=11 // pred_check_branch
          %437 = sbr.rel (%p435) target = $region24
        $region23: #{tpu_custom_call.1} parent=11 // pred_region
          _
        $region24: #{tpu_custom_call.1} parent=11 // pred_fallthru
          _
        // Predicated region
        $region25: #{tpu_custom_call.1} parent=11 // pred_check
          %p438 = pneg %p136
        $region26: #{tpu_custom_call.1} parent=11 // pred_check_branch
          %440 = sbr.rel (%p438) target = $region28
        $region27: #{tpu_custom_call.1} parent=11 // pred_region
          _
        $region28: #{tpu_custom_call.1} parent=11 // pred_fallthru
          _
        // Predicated region
        $region29: #{tpu_custom_call.1} parent=11 // pred_check
          %p441 = pneg %p157
        $region30: #{tpu_custom_call.1} parent=11 // pred_check_branch
          %443 = sbr.rel (%p441) target = $region32
        $region31: #{tpu_custom_call.1} parent=11 // pred_region
          _
        $region32: #{tpu_custom_call.1} parent=11 // pred_fallthru
          _
        // Predicated region
        $region33: #{tpu_custom_call.1} parent=11 // pred_check
          %p444 = pneg %p178
        $region34: #{tpu_custom_call.1} parent=11 // pred_check_branch
          %446 = sbr.rel (%p444) target = $region36
        $region35: #{tpu_custom_call.1} parent=11 // pred_region
          _
        $region36: #{tpu_custom_call.1} parent=11 // pred_fallthru
          _
        // Predicated region
        $region37: #{tpu_custom_call.1} parent=11 // pred_check
          %p447 = pneg %p199
        $region38: #{tpu_custom_call.1} parent=11 // pred_check_branch
          %449 = sbr.rel (%p447) target = $region40
        $region39: #{tpu_custom_call.1} parent=11 // pred_region
          _
        $region40: #{tpu_custom_call.1} parent=11 // pred_fallthru
          _
        // Predicated region
        $region41: #{tpu_custom_call.1} parent=11 // pred_check
          %p450 = pneg %p220
        $region42: #{tpu_custom_call.1} parent=11 // pred_check_branch
          %452 = sbr.rel (%p450) target = $region44
        $region43: #{tpu_custom_call.1} parent=11 // pred_region
          _
        $region44: #{tpu_custom_call.1} parent=11 // pred_fallthru
          _
        // Predicated region
        $region45: #{tpu_custom_call.1} parent=11 // pred_check
          %p453 = pneg %p241
        $region46: #{tpu_custom_call.1} parent=11 // pred_check_branch
          %455 = sbr.rel (%p453) target = $region48
        $region47: #{tpu_custom_call.1} parent=11 // pred_region
          _
        $region48: #{tpu_custom_call.1} parent=11 // pred_fallthru
          _
        // Predicated region
        $region49: #{tpu_custom_call.1} parent=11 // pred_check
          %p456 = pneg %p262
        $region50: #{tpu_custom_call.1} parent=11 // pred_check_branch
          %458 = sbr.rel (%p456) target = $region52
        $region51: #{tpu_custom_call.1} parent=11 // pred_region
          _
        $region52: #{tpu_custom_call.1} parent=11 // pred_fallthru
          _
        // Predicated region
        $region53: #{tpu_custom_call.1} parent=11 // pred_check
          %p459 = pneg %p283
        $region54: #{tpu_custom_call.1} parent=11 // pred_check_branch
          %461 = sbr.rel (%p459) target = $region56
        $region55: #{tpu_custom_call.1} parent=11 // pred_region
          _
        $region56: #{tpu_custom_call.1} parent=11 // pred_fallthru
          _
        // Predicated region
        $region57: #{tpu_custom_call.1} parent=11 // pred_check
          %p462 = pneg %p304
        $region58: #{tpu_custom_call.1} parent=11 // pred_check_branch
          %464 = sbr.rel (%p462) target = $region60
        $region59: #{tpu_custom_call.1} parent=11 // pred_region
          _
        $region60: #{tpu_custom_call.1} parent=11 // pred_fallthru
          _
        // Predicated region
        $region61: #{tpu_custom_call.1} parent=11 // pred_check
          %p465 = pneg %p325
        $region62: #{tpu_custom_call.1} parent=11 // pred_check_branch
          %467 = sbr.rel (%p465) target = $region64
        $region63: #{tpu_custom_call.1} parent=11 // pred_region
          _
        $region64: #{tpu_custom_call.1} parent=11 // pred_fallthru
          _
        // Predicated region
        $region65: #{tpu_custom_call.1} parent=11 // pred_check
          %p468 = pneg %p346
        $region66: #{tpu_custom_call.1} parent=11 // pred_check_branch
          %470 = sbr.rel (%p468) target = $region68
        $region67: #{tpu_custom_call.1} parent=11 // pred_region
          _
        $region68: #{tpu_custom_call.1} parent=11 // pred_fallthru
          _
        // Predicated region
        $region69: #{tpu_custom_call.1} parent=11 // pred_check
          %p471 = pneg %p367
        $region70: #{tpu_custom_call.1} parent=11 // pred_check_branch
          %473 = sbr.rel (%p471) target = $region72
        $region71: #{tpu_custom_call.1} parent=11 // pred_region
          _
        $region72: #{tpu_custom_call.1} parent=11 // pred_fallthru
          _
        // Predicated region
        $region73: #{tpu_custom_call.1} parent=11 // pred_check
          %p474 = pneg %p388
        $region74: #{tpu_custom_call.1} parent=11 // pred_check_branch
          %476 = sbr.rel (%p474) target = $region76
        $region75: #{tpu_custom_call.1} parent=11 // pred_region
          _
        $region76: #{tpu_custom_call.1} parent=11 // pred_fallthru
          _
      $region12: #{tpu_custom_call.1} parent=5 // pred_fallthru
        _
      %p477 = scmp.lt.s32.totalorder %s26, 2
      // Predicated region
      $region77: #{tpu_custom_call.1} parent=5 // pred_check
        %p478 = pneg %p477
      $region78: #{tpu_custom_call.1} parent=5 // pred_check_branch
        %480 = sbr.rel (%p478) target = $region80
      $region79: #{tpu_custom_call.1} parent=5 // pred_region
        // Predicated region
        $region81: #{tpu_custom_call.1} parent=79 // pred_check
          %p481 = pneg %p46
        $region82: #{tpu_custom_call.1} parent=79 // pred_check_branch
          %483 = sbr.rel (%p481) target = $region84
        $region83: #{tpu_custom_call.1} parent=79 // pred_region
          %p484 = scmp.lt.s32.totalorder %s26, 1
          %s485 = scalar_select %p484, %s26, 1
          %s486 = smul.addr %s485, 8
          %s487 = scalar_lea.vmem %s0, %s486
        $region84: #{tpu_custom_call.1} parent=79 // pred_fallthru
          _
      $region80: #{tpu_custom_call.1} parent=5 // pred_fallthru
        _
      %p488 = scmp.le.s32.totalorder 1, %s26
      %p489 = scmp.lt.s32.totalorder %s26, 3
      %p490 = pnand %p488, %p489
      %p491 = pneg %p490
      // Predicated region
      $region85: #{tpu_custom_call.1} parent=5 // pred_check
        _
      $region86: #{tpu_custom_call.1} parent=5 // pred_check_branch
        %493 = sbr.rel (%p490) target = $region88
      $region87: #{tpu_custom_call.1} parent=5 // pred_region
        %s494 = ssub.s32 %s26, 1
        %p495 = scmp.lt.s32.totalorder %s31, 1
        %s496 = scalar_select %p495, %s31, 1
        %s497 = smul.addr %s496, 8
        %s498 = scalar_lea.vmem %s0, %s497
        %p499 = pneg %p52
        %p500 = pneg %p49
        %p501 = pneg %p73
        %p502 = pneg %p70
        %p503 = pneg %p94
        %p504 = pneg %p91
        %p505 = pneg %p115
        %p506 = pneg %p112
        %p507 = pneg %p136
        %p508 = pneg %p133
        %p509 = pneg %p157
        %p510 = pneg %p154
        %p511 = pneg %p178
        %p512 = pneg %p175
        %p513 = pneg %p199
        %p514 = pneg %p196
        %p515 = pneg %p220
        %p516 = pneg %p217
        %p517 = pneg %p241
        %p518 = pneg %p238
        %p519 = pneg %p262
        %p520 = pneg %p259
        %p521 = pneg %p283
        %p522 = pneg %p280
        %p523 = pneg %p304
        %p524 = pneg %p301
        %p525 = pneg %p325
        %p526 = pneg %p322
        %p527 = pneg %p346
        %p528 = pneg %p343
        %p529 = pneg %p367
        %p530 = pneg %p364
        %p531 = pneg %p388
        %p532 = pneg %p385
        %p533 = pneg %p414
        %p534 = pneg %p411
        %s535 = sand.u32 %s401, 1
        %s536 = scalar_lea.sflag [#allocation3], %s535
        %s537 = sand.u32 %s401, 1
        %s538 = smul.addr %s537, 8
        %s539 = scalar_lea.vmem [#allocation2], %s538
        %p540 = scmp.lt.s32.totalorder %s31, 1
        %s541 = scalar_select %p540, %s31, 1
        %s542 = smul.addr %s541, 8
        %s543 = scalar_lea.vmem %s0, %s542
        %v544 = vld [vmem:[%s543] sm:$0xff]
        %v545 = vld [vmem:[%s8] sm:$0x1]
        %v547 = vlaneseq
        %v548 = vshrl.u32 %v547, 7
        %v549 = vsub.s32 0, %v548
        %v550 = vrot.slane %v545, %v549
        %v552 = vld [vmem:[%s1] sm:$0xff]
        %v553 = vld [vmem:[%s1 + $0x8] sm:$0xff]
        %v554 = vld [vmem:[%s1 + $0x10] sm:$0xff]
        %v555 = vld [vmem:[%s1 + $0x18] sm:$0xff]
        %v556 = vld [vmem:[%s2] sm:$0x1]
        %v558 = vlaneseq
        %v559 = vshrl.u32 %v558, 7
        %v560 = vsub.s32 0, %v559
        %v561 = vrot.slane %v556, %v560
        %vm563 = vcmask 261120
        %v565 = vsel %vm563, %v544, 0
        %567 = vmatprep.subr.mxu0 0.0
        %568 = vmatpush1.msra.mxu0 %v552
        %569 = vmatprep.subr.mxu0 0.0
        %570 = vmatpush1.msra.mxu0 %v553
        %571 = vmatprep.subr.mxu0 0.0
        %572 = vmatpush1.msra.mxu0 %v554
        %573 = vmatprep.subr.mxu0 0.0
        %574 = vmatpush1.msra.mxu0 %v555
        %575 = vmatprep.subr.mxu0 0.0
        %576 = vmatpush1.msra.mxu0 0.0
        %577 = vmatprep.subr.mxu0 0.0
        %578 = vmatpush1.msra.mxu0 0.0
        %579 = vmatprep.subr.mxu0 0.0
        %580 = vmatpush1.msra.mxu0 0.0
        %581 = vmatprep.subr.mxu0 0.0
        %582 = vmatpush1.msra.mxu0 0.0
        %583 = vmatprep.subr.mxu0 0.0
        %584 = vmatpush1.msra.mxu0 0.0
        %585 = vmatprep.subr.mxu0 0.0
        %586 = vmatpush1.msra.mxu0 0.0
        %587 = vmatprep.subr.mxu0 0.0
        %588 = vmatpush1.msra.mxu0 0.0
        %589 = vmatprep.subr.mxu0 0.0
        %590 = vmatpush1.msra.mxu0 0.0
        %591 = vmatprep.subr.mxu0 0.0
        %592 = vmatpush1.msra.mxu0 0.0
        %593 = vmatprep.subr.mxu0 0.0
        %594 = vmatpush1.msra.mxu0 0.0
        %595 = vmatprep.subr.mxu0 0.0
        %596 = vmatpush1.msra.mxu0 0.0
        %597 = vmatprep.subr.mxu0 0.0
        %598 = vmatpush1.msra.mxu0 0.0
        %599 = vmatprep.subr.mxu0 0.0
        %600 = vmatpush1.msra.mxu0 0.0
        %601 = vmatprep.subr.mxu0 0.0
        %602 = vmatpush1.msra.mxu0 0.0
        %603 = vmatprep.subr.mxu0 0.0
        %604 = vmatpush1.msra.mxu0 0.0
        %605 = vmatprep.subr.mxu0 0.0
        %606 = vmatpush1.msra.mxu0 0.0
        %607 = vmatprep.subr.mxu0 0.0
        %608 = vmatpush1.msra.mxu0 0.0
        %609 = vmatprep.subr.mxu0 0.0
        %610 = vmatpush1.msra.mxu0 0.0
        %611 = vmatprep.subr.mxu0 0.0
        %612 = vmatpush1.msra.mxu0 0.0
        %613 = vmatprep.subr.mxu0 0.0
        %614 = vmatpush1.msra.mxu0 0.0
        %615 = vmatprep.subr.mxu0 0.0
        %616 = vmatpush1.msra.mxu0 0.0
        %617 = vmatprep.subr.mxu0 0.0
        %618 = vmatpush1.msra.mxu0 0.0
        %619 = vmatprep.subr.mxu0 0.0
        %620 = vmatpush1.msra.mxu0 0.0
        %621 = vmatprep.subr.mxu0 0.0
        %622 = vmatpush1.msra.mxu0 0.0
        %623 = vmatprep.subr.mxu0 0.0
        %624 = vmatpush1.msra.mxu0 0.0
        %625 = vmatprep.subr.mxu0 0.0
        %626 = vmatpush1.msra.mxu0 0.0
        %627 = vmatprep.subr.mxu0 0.0
        %628 = vmatpush1.msra.mxu0 0.0
        %629 = vmatprep.subr.mxu0 0.0
        %630 = vmatpush1.msra.mxu0 0.0
        %631 = vmatprep.mubr.f32.mxu0 0.0
        %632 = vmatmul.mubr.f32.gmra.mrb[0].mxu0 %v565
        %v633 = vpop.f32.mrb[0].mxu0
        %v634 = vadd.f32 %v561, %v633
        %v635 = vpop.f32.mrb[0].mxu0
        %636 = vdwg.mxu0
        %v637 = vld [vmem:[%s3] sm:$0xff]
        %v638 = vld [vmem:[%s3 + $0x8] sm:$0xff]
        %v639 = vld [vmem:[%s3 + $0x10] sm:$0xff]
        %v640 = vld [vmem:[%s3 + $0x18] sm:$0xff]
        %v641 = vld [vmem:[%s4] sm:$0x1]
        %v643 = vlaneseq
        %v644 = vshrl.u32 %v643, 7
        %v645 = vsub.s32 0, %v644
        %v646 = vrot.slane %v641, %v645
        %648 = vmatprep.subr.mxu0 0.0
        %649 = vmatpush1.msra.mxu0 %v637
        %650 = vmatprep.subr.mxu0 0.0
        %651 = vmatpush1.msra.mxu0 %v638
        %652 = vmatprep.subr.mxu0 0.0
        %653 = vmatpush1.msra.mxu0 %v639
        %654 = vmatprep.subr.mxu0 0.0
        %655 = vmatpush1.msra.mxu0 %v640
        %656 = vmatprep.subr.mxu0 0.0
        %657 = vmatpush1.msra.mxu0 0.0
        %658 = vmatprep.subr.mxu0 0.0
        %659 = vmatpush1.msra.mxu0 0.0
        %660 = vmatprep.subr.mxu0 0.0
        %661 = vmatpush1.msra.mxu0 0.0
        %662 = vmatprep.subr.mxu0 0.0
        %663 = vmatpush1.msra.mxu0 0.0
        %664 = vmatprep.subr.mxu0 0.0
        %665 = vmatpush1.msra.mxu0 0.0
        %666 = vmatprep.subr.mxu0 0.0
        %667 = vmatpush1.msra.mxu0 0.0
        %668 = vmatprep.subr.mxu0 0.0
        %669 = vmatpush1.msra.mxu0 0.0
        %670 = vmatprep.subr.mxu0 0.0
        %671 = vmatpush1.msra.mxu0 0.0
        %672 = vmatprep.subr.mxu0 0.0
        %673 = vmatpush1.msra.mxu0 0.0
        %674 = vmatprep.subr.mxu0 0.0
        %675 = vmatpush1.msra.mxu0 0.0
        %676 = vmatprep.subr.mxu0 0.0
        %677 = vmatpush1.msra.mxu0 0.0
        %678 = vmatprep.subr.mxu0 0.0
        %679 = vmatpush1.msra.mxu0 0.0
        %680 = vmatprep.subr.mxu0 0.0
        %681 = vmatpush1.msra.mxu0 0.0
        %682 = vmatprep.subr.mxu0 0.0
        %683 = vmatpush1.msra.mxu0 0.0
        %684 = vmatprep.subr.mxu0 0.0
        %685 = vmatpush1.msra.mxu0 0.0
        %686 = vmatprep.subr.mxu0 0.0
        %687 = vmatpush1.msra.mxu0 0.0
        %688 = vmatprep.subr.mxu0 0.0
        %689 = vmatpush1.msra.mxu0 0.0
        %690 = vmatprep.subr.mxu0 0.0
        %691 = vmatpush1.msra.mxu0 0.0
        %692 = vmatprep.subr.mxu0 0.0
        %693 = vmatpush1.msra.mxu0 0.0
        %694 = vmatprep.subr.mxu0 0.0
        %695 = vmatpush1.msra.mxu0 0.0
        %696 = vmatprep.subr.mxu0 0.0
        %697 = vmatpush1.msra.mxu0 0.0
        %698 = vmatprep.subr.mxu0 0.0
        %699 = vmatpush1.msra.mxu0 0.0
        %700 = vmatprep.subr.mxu0 0.0
        %701 = vmatpush1.msra.mxu0 0.0
        %702 = vmatprep.subr.mxu0 0.0
        %703 = vmatpush1.msra.mxu0 0.0
        %704 = vmatprep.subr.mxu0 0.0
        %705 = vmatpush1.msra.mxu0 0.0
        %706 = vmatprep.subr.mxu0 0.0
        %707 = vmatpush1.msra.mxu0 0.0
        %708 = vmatprep.subr.mxu0 0.0
        %709 = vmatpush1.msra.mxu0 0.0
        %710 = vmatprep.subr.mxu0 0.0
        %711 = vmatpush1.msra.mxu0 0.0
        %712 = vmatprep.mubr.f32.mxu0 0.0
        %713 = vmatmul.mubr.f32.gmra.mrb[0].mxu0 %v565
        %v714 = vpop.f32.mrb[0].mxu0
        %v715 = vadd.f32 %v646, %v714
        %v716 = vpop.f32.mrb[0].mxu0
        %717 = vdwg.mxu0
        %v718 = vld [vmem:[%s5] sm:$0xff]
        %v719 = vld [vmem:[%s5 + $0x8] sm:$0xff]
        %v720 = vld [vmem:[%s5 + $0x10] sm:$0xff]
        %v721 = vld [vmem:[%s5 + $0x18] sm:$0xff]
        %v722 = vld [vmem:[%s6] sm:$0x1]
        %v724 = vlaneseq
        %v725 = vshrl.u32 %v724, 7
        %v726 = vsub.s32 0, %v725
        %v727 = vrot.slane %v722, %v726
        %729 = vmatprep.subr.mxu0 0.0
        %730 = vmatpush1.msra.mxu0 %v718
        %731 = vmatprep.subr.mxu0 0.0
        %732 = vmatpush1.msra.mxu0 %v719
        %733 = vmatprep.subr.mxu0 0.0
        %734 = vmatpush1.msra.mxu0 %v720
        %735 = vmatprep.subr.mxu0 0.0
        %736 = vmatpush1.msra.mxu0 %v721
        %737 = vmatprep.subr.mxu0 0.0
        %738 = vmatpush1.msra.mxu0 0.0
        %739 = vmatprep.subr.mxu0 0.0
        %740 = vmatpush1.msra.mxu0 0.0
        %741 = vmatprep.subr.mxu0 0.0
        %742 = vmatpush1.msra.mxu0 0.0
        %743 = vmatprep.subr.mxu0 0.0
        %744 = vmatpush1.msra.mxu0 0.0
        %745 = vmatprep.subr.mxu0 0.0
        %746 = vmatpush1.msra.mxu0 0.0
        %747 = vmatprep.subr.mxu0 0.0
        %748 = vmatpush1.msra.mxu0 0.0
        %749 = vmatprep.subr.mxu0 0.0
        %750 = vmatpush1.msra.mxu0 0.0
        %751 = vmatprep.subr.mxu0 0.0
        %752 = vmatpush1.msra.mxu0 0.0
        %753 = vmatprep.subr.mxu0 0.0
        %754 = vmatpush1.msra.mxu0 0.0
        %755 = vmatprep.subr.mxu0 0.0
        %756 = vmatpush1.msra.mxu0 0.0
        %757 = vmatprep.subr.mxu0 0.0
        %758 = vmatpush1.msra.mxu0 0.0
        %759 = vmatprep.subr.mxu0 0.0
        %760 = vmatpush1.msra.mxu0 0.0
        %761 = vmatprep.subr.mxu0 0.0
        %762 = vmatpush1.msra.mxu0 0.0
        %763 = vmatprep.subr.mxu0 0.0
        %764 = vmatpush1.msra.mxu0 0.0
        %765 = vmatprep.subr.mxu0 0.0
        %766 = vmatpush1.msra.mxu0 0.0
        %767 = vmatprep.subr.mxu0 0.0
        %768 = vmatpush1.msra.mxu0 0.0
        %769 = vmatprep.subr.mxu0 0.0
        %770 = vmatpush1.msra.mxu0 0.0
        %771 = vmatprep.subr.mxu0 0.0
        %772 = vmatpush1.msra.mxu0 0.0
        %773 = vmatprep.subr.mxu0 0.0
        %774 = vmatpush1.msra.mxu0 0.0
        %775 = vmatprep.subr.mxu0 0.0
        %776 = vmatpush1.msra.mxu0 0.0
        %777 = vmatprep.subr.mxu0 0.0
        %778 = vmatpush1.msra.mxu0 0.0
        %779 = vmatprep.subr.mxu0 0.0
        %780 = vmatpush1.msra.mxu0 0.0
        %781 = vmatprep.subr.mxu0 0.0
        %782 = vmatpush1.msra.mxu0 0.0
        %783 = vmatprep.subr.mxu0 0.0
        %784 = vmatpush1.msra.mxu0 0.0
        %785 = vmatprep.subr.mxu0 0.0
        %786 = vmatpush1.msra.mxu0 0.0
        %787 = vmatprep.subr.mxu0 0.0
        %788 = vmatpush1.msra.mxu0 0.0
        %789 = vmatprep.subr.mxu0 0.0
        %790 = vmatpush1.msra.mxu0 0.0
        %791 = vmatprep.subr.mxu0 0.0
        %792 = vmatpush1.msra.mxu0 0.0
        %793 = vmatprep.mubr.f32.mxu0 0.0
        %794 = vmatmul.mubr.f32.gmra.mrb[0].mxu0 %v565
        %v795 = vpop.f32.mrb[0].mxu0
        %v796 = vadd.f32 %v727, %v795
        %v797 = vpop.f32.mrb[0].mxu0
        %798 = vdwg.mxu0
        %vm799 = vcmask 64512
        %v801 = vsel %vm799, %v634, 0
        %v804 = vsel %vm799, %v715, 0
        %806 = vmatprep.subr.mxu0 0.0
        %807 = vmatpush1.xpose.msra.mxu0 %v804
        %808 = vmatprep.subr.mxu0 0.0
        %809 = vmatpush1.xpose.msra.mxu0 0.0
        %810 = vmatprep.subr.mxu0 0.0
        %811 = vmatpush1.xpose.msra.mxu0 0.0
        %812 = vmatprep.subr.mxu0 0.0
        %813 = vmatpush1.xpose.msra.mxu0 0.0
        %814 = vmatprep.subr.mxu0 0.0
        %815 = vmatpush1.xpose.msra.mxu0 0.0
        %816 = vmatprep.subr.mxu0 0.0
        %817 = vmatpush1.xpose.msra.mxu0 0.0
        %818 = vmatprep.subr.mxu0 0.0
        %819 = vmatpush1.xpose.msra.mxu0 0.0
        %820 = vmatprep.subr.mxu0 0.0
        %821 = vmatpush1.xpose.msra.mxu0 0.0
        %822 = vmatprep.subr.mxu0 0.0
        %823 = vmatpush1.xpose.msra.mxu0 0.0
        %824 = vmatprep.subr.mxu0 0.0
        %825 = vmatpush1.xpose.msra.mxu0 0.0
        %826 = vmatprep.subr.mxu0 0.0
        %827 = vmatpush1.xpose.msra.mxu0 0.0
        %828 = vmatprep.subr.mxu0 0.0
        %829 = vmatpush1.xpose.msra.mxu0 0.0
        %830 = vmatprep.subr.mxu0 0.0
        %831 = vmatpush1.xpose.msra.mxu0 0.0
        %832 = vmatprep.subr.mxu0 0.0
        %833 = vmatpush1.xpose.msra.mxu0 0.0
        %834 = vmatprep.subr.mxu0 0.0
        %835 = vmatpush1.xpose.msra.mxu0 0.0
        %836 = vmatprep.subr.mxu0 0.0
        %837 = vmatpush1.xpose.msra.mxu0 0.0
        %838 = vmatprep.subr.mxu0 0.0
        %839 = vmatpush1.xpose.msra.mxu0 0.0
        %840 = vmatprep.subr.mxu0 0.0
        %841 = vmatpush1.xpose.msra.mxu0 0.0
        %842 = vmatprep.subr.mxu0 0.0
        %843 = vmatpush1.xpose.msra.mxu0 0.0
        %844 = vmatprep.subr.mxu0 0.0
        %845 = vmatpush1.xpose.msra.mxu0 0.0
        %846 = vmatprep.subr.mxu0 0.0
        %847 = vmatpush1.xpose.msra.mxu0 0.0
        %848 = vmatprep.subr.mxu0 0.0
        %849 = vmatpush1.xpose.msra.mxu0 0.0
        %850 = vmatprep.subr.mxu0 0.0
        %851 = vmatpush1.xpose.msra.mxu0 0.0
        %852 = vmatprep.subr.mxu0 0.0
        %853 = vmatpush1.xpose.msra.mxu0 0.0
        %854 = vmatprep.subr.mxu0 0.0
        %855 = vmatpush1.xpose.msra.mxu0 0.0
        %856 = vmatprep.subr.mxu0 0.0
        %857 = vmatpush1.xpose.msra.mxu0 0.0
        %858 = vmatprep.subr.mxu0 0.0
        %859 = vmatpush1.xpose.msra.mxu0 0.0
        %860 = vmatprep.subr.mxu0 0.0
        %861 = vmatpush1.xpose.msra.mxu0 0.0
        %862 = vmatprep.subr.mxu0 0.0
        %863 = vmatpush1.xpose.msra.mxu0 0.0
        %864 = vmatprep.subr.mxu0 0.0
        %865 = vmatpush1.xpose.msra.mxu0 0.0
        %866 = vmatprep.subr.mxu0 0.0
        %867 = vmatpush1.xpose.msra.mxu0 0.0
        %868 = vmatprep.subr.mxu0 0.0
        %869 = vmatpush1.xpose.msra.mxu0 0.0
        %870 = vmatprep.mubr.f32.mxu0 0.0
        %871 = vmatmul.mubr.f32.gmra.mrb[0].mxu0 %v801
        %v872 = vpop.f32.mrb[0].mxu0
        %v873 = vadd.f32 0.0, %v872
        %v874 = vpop.f32.mrb[0].mxu0
        %875 = vdwg.mxu0
        %v876 = vsel %vm799, %v873, -inf
        %877 = vmax.xlane.f32.xlu0 %v876
        %v878 = vpop.xlane.xlu0 %877
        %v879 = vsub.f32 %v873, %v878
        %v880 = vmul.f32 %v879, 1.442695
        %v881 = vpow.pop %v880
        %v882 = vsel %vm799, %v881, 0.0
        %883 = vadd.xlane.f32.xlu0 %v882
        %v884 = vpop.xlane.xlu0 %883
        %v885 = vrcp.pop %v884
        %v886 = vmul.f32 1.0, %v885
        %v887 = vmul.f32 %v881, %v886
        %v889 = vsel %vm799, %v887, 0
        %891 = vmatprep.subr.mxu0 0.0
        %892 = vmatpush1.msra.mxu0 %v796
        %893 = vmatprep.subr.mxu0 0.0
        %894 = vmatpush1.msra.mxu0 0.0
        %895 = vmatprep.subr.mxu0 0.0
        %896 = vmatpush1.msra.mxu0 0.0
        %897 = vmatprep.subr.mxu0 0.0
        %898 = vmatpush1.msra.mxu0 0.0
        %899 = vmatprep.subr.mxu0 0.0
        %900 = vmatpush1.msra.mxu0 0.0
        %901 = vmatprep.subr.mxu0 0.0
        %902 = vmatpush1.msra.mxu0 0.0
        %903 = vmatprep.subr.mxu0 0.0
        %904 = vmatpush1.msra.mxu0 0.0
        %905 = vmatprep.subr.mxu0 0.0
        %906 = vmatpush1.msra.mxu0 0.0
        %907 = vmatprep.subr.mxu0 0.0
        %908 = vmatpush1.msra.mxu0 0.0
        %909 = vmatprep.subr.mxu0 0.0
        %910 = vmatpush1.msra.mxu0 0.0
        %911 = vmatprep.subr.mxu0 0.0
        %912 = vmatpush1.msra.mxu0 0.0
        %913 = vmatprep.subr.mxu0 0.0
        %914 = vmatpush1.msra.mxu0 0.0
        %915 = vmatprep.subr.mxu0 0.0
        %916 = vmatpush1.msra.mxu0 0.0
        %917 = vmatprep.subr.mxu0 0.0
        %918 = vmatpush1.msra.mxu0 0.0
        %919 = vmatprep.subr.mxu0 0.0
        %920 = vmatpush1.msra.mxu0 0.0
        %921 = vmatprep.subr.mxu0 0.0
        %922 = vmatpush1.msra.mxu0 0.0
        %923 = vmatprep.subr.mxu0 0.0
        %924 = vmatpush1.msra.mxu0 0.0
        %925 = vmatprep.subr.mxu0 0.0
        %926 = vmatpush1.msra.mxu0 0.0
        %927 = vmatprep.subr.mxu0 0.0
        %928 = vmatpush1.msra.mxu0 0.0
        %929 = vmatprep.subr.mxu0 0.0
        %930 = vmatpush1.msra.mxu0 0.0
        %931 = vmatprep.subr.mxu0 0.0
        %932 = vmatpush1.msra.mxu0 0.0
        %933 = vmatprep.subr.mxu0 0.0
        %934 = vmatpush1.msra.mxu0 0.0
        %935 = vmatprep.subr.mxu0 0.0
        %936 = vmatpush1.msra.mxu0 0.0
        %937 = vmatprep.subr.mxu0 0.0
        %938 = vmatpush1.msra.mxu0 0.0
        %939 = vmatprep.subr.mxu0 0.0
        %940 = vmatpush1.msra.mxu0 0.0
        %941 = vmatprep.subr.mxu0 0.0
        %942 = vmatpush1.msra.mxu0 0.0
        %943 = vmatprep.subr.mxu0 0.0
        %944 = vmatpush1.msra.mxu0 0.0
        %945 = vmatprep.subr.mxu0 0.0
        %946 = vmatpush1.msra.mxu0 0.0
        %947 = vmatprep.subr.mxu0 0.0
        %948 = vmatpush1.msra.mxu0 0.0
        %949 = vmatprep.subr.mxu0 0.0
        %950 = vmatpush1.msra.mxu0 0.0
        %951 = vmatprep.subr.mxu0 0.0
        %952 = vmatpush1.msra.mxu0 0.0
        %953 = vmatprep.subr.mxu0 0.0
        %954 = vmatpush1.msra.mxu0 0.0
        %955 = vmatprep.mubr.f32.mxu0 0.0
        %956 = vmatmul.mubr.f32.gmra.mrb[0].mxu0 %v889
        %v957 = vpop.f32.mrb[0].mxu0
        %v958 = vadd.f32 0.0, %v957
        %v959 = vpop.f32.mrb[0].mxu0
        %960 = vdwg.mxu0
        %v961 = vld [vmem:[%s7] sm:$0xff]
        %v963 = vsel %vm799, %v958, 0
        %965 = vmatprep.subr.mxu0 0.0
        %966 = vmatpush1.msra.mxu0 %v961
        %967 = vmatprep.subr.mxu0 0.0
        %968 = vmatpush1.msra.mxu0 0.0
        %969 = vmatprep.subr.mxu0 0.0
        %970 = vmatpush1.msra.mxu0 0.0
        %971 = vmatprep.subr.mxu0 0.0
        %972 = vmatpush1.msra.mxu0 0.0
        %973 = vmatprep.subr.mxu0 0.0
        %974 = vmatpush1.msra.mxu0 0.0
        %975 = vmatprep.subr.mxu0 0.0
        %976 = vmatpush1.msra.mxu0 0.0
        %977 = vmatprep.subr.mxu0 0.0
        %978 = vmatpush1.msra.mxu0 0.0
        %979 = vmatprep.subr.mxu0 0.0
        %980 = vmatpush1.msra.mxu0 0.0
        %981 = vmatprep.subr.mxu0 0.0
        %982 = vmatpush1.msra.mxu0 0.0
        %983 = vmatprep.subr.mxu0 0.0
        %984 = vmatpush1.msra.mxu0 0.0
        %985 = vmatprep.subr.mxu0 0.0
        %986 = vmatpush1.msra.mxu0 0.0
        %987 = vmatprep.subr.mxu0 0.0
        %988 = vmatpush1.msra.mxu0 0.0
        %989 = vmatprep.subr.mxu0 0.0
        %990 = vmatpush1.msra.mxu0 0.0
        %991 = vmatprep.subr.mxu0 0.0
        %992 = vmatpush1.msra.mxu0 0.0
        %993 = vmatprep.subr.mxu0 0.0
        %994 = vmatpush1.msra.mxu0 0.0
        %995 = vmatprep.subr.mxu0 0.0
        %996 = vmatpush1.msra.mxu0 0.0
        %997 = vmatprep.subr.mxu0 0.0
        %998 = vmatpush1.msra.mxu0 0.0
        %999 = vmatprep.subr.mxu0 0.0
        %1000 = vmatpush1.msra.mxu0 0.0
        %1001 = vmatprep.subr.mxu0 0.0
        %1002 = vmatpush1.msra.mxu0 0.0
        %1003 = vmatprep.subr.mxu0 0.0
        %1004 = vmatpush1.msra.mxu0 0.0
        %1005 = vmatprep.subr.mxu0 0.0
        %1006 = vmatpush1.msra.mxu0 0.0
        %1007 = vmatprep.subr.mxu0 0.0
        %1008 = vmatpush1.msra.mxu0 0.0
        %1009 = vmatprep.subr.mxu0 0.0
        %1010 = vmatpush1.msra.mxu0 0.0
        %1011 = vmatprep.subr.mxu0 0.0
        %1012 = vmatpush1.msra.mxu0 0.0
        %1013 = vmatprep.subr.mxu0 0.0
        %1014 = vmatpush1.msra.mxu0 0.0
        %1015 = vmatprep.subr.mxu0 0.0
        %1016 = vmatpush1.msra.mxu0 0.0
        %1017 = vmatprep.subr.mxu0 0.0
        %1018 = vmatpush1.msra.mxu0 0.0
        %1019 = vmatprep.subr.mxu0 0.0
        %1020 = vmatpush1.msra.mxu0 0.0
        %1021 = vmatprep.subr.mxu0 0.0
        %1022 = vmatpush1.msra.mxu0 0.0
        %1023 = vmatprep.subr.mxu0 0.0
        %1024 = vmatpush1.msra.mxu0 0.0
        %1025 = vmatprep.subr.mxu0 0.0
        %1026 = vmatpush1.msra.mxu0 0.0
        %1027 = vmatprep.subr.mxu0 0.0
        %1028 = vmatpush1.msra.mxu0 0.0
        %1029 = vmatprep.mubr.f32.mxu0 0.0
        %1030 = vmatmul.mubr.f32.gmra.mrb[0].mxu0 %v963
        %v1031 = vpop.f32.mrb[0].mxu0
        %v1032 = vadd.f32 0.0, %v1031
        %v1033 = vpop.f32.mrb[0].mxu0
        %1034 = vdwg.mxu0
        %v1035 = vadd.f32 %v550, %v1032
        %s1036 = scalar_lea.vmem %s1, 32
        %v1037 = vld [vmem:[%s1036] sm:$0xff]
        %v1038 = vld [vmem:[%s1036 + $0x8] sm:$0xff]
        %v1039 = vld [vmem:[%s1036 + $0x10] sm:$0xff]
        %v1040 = vld [vmem:[%s1036 + $0x18] sm:$0xff]
        %s1041 = scalar_lea.vmem %s2, 1
        %v1042 = vld [vmem:[%s1041] sm:$0x1]
        %v1044 = vlaneseq
        %v1045 = vshrl.u32 %v1044, 7
        %v1046 = vsub.s32 0, %v1045
        %v1047 = vrot.slane %v1042, %v1046
        %1049 = vmatprep.subr.mxu0 0.0
        %1050 = vmatpush1.msra.mxu0 %v1037
        %1051 = vmatprep.subr.mxu0 0.0
        %1052 = vmatpush1.msra.mxu0 %v1038
        %1053 = vmatprep.subr.mxu0 0.0
        %1054 = vmatpush1.msra.mxu0 %v1039
        %1055 = vmatprep.subr.mxu0 0.0
        %1056 = vmatpush1.msra.mxu0 %v1040
        %1057 = vmatprep.subr.mxu0 0.0
        %1058 = vmatpush1.msra.mxu0 0.0
        %1059 = vmatprep.subr.mxu0 0.0
        %1060 = vmatpush1.msra.mxu0 0.0
        %1061 = vmatprep.subr.mxu0 0.0
        %1062 = vmatpush1.msra.mxu0 0.0
        %1063 = vmatprep.subr.mxu0 0.0
        %1064 = vmatpush1.msra.mxu0 0.0
        %1065 = vmatprep.subr.mxu0 0.0
        %1066 = vmatpush1.msra.mxu0 0.0
        %1067 = vmatprep.subr.mxu0 0.0
        %1068 = vmatpush1.msra.mxu0 0.0
        %1069 = vmatprep.subr.mxu0 0.0
        %1070 = vmatpush1.msra.mxu0 0.0
        %1071 = vmatprep.subr.mxu0 0.0
        %1072 = vmatpush1.msra.mxu0 0.0
        %1073 = vmatprep.subr.mxu0 0.0
        %1074 = vmatpush1.msra.mxu0 0.0
        %1075 = vmatprep.subr.mxu0 0.0
        %1076 = vmatpush1.msra.mxu0 0.0
        %1077 = vmatprep.subr.mxu0 0.0
        %1078 = vmatpush1.msra.mxu0 0.0
        %1079 = vmatprep.subr.mxu0 0.0
        %1080 = vmatpush1.msra.mxu0 0.0
        %1081 = vmatprep.subr.mxu0 0.0
        %1082 = vmatpush1.msra.mxu0 0.0
        %1083 = vmatprep.subr.mxu0 0.0
        %1084 = vmatpush1.msra.mxu0 0.0
        %1085 = vmatprep.subr.mxu0 0.0
        %1086 = vmatpush1.msra.mxu0 0.0
        %1087 = vmatprep.subr.mxu0 0.0
        %1088 = vmatpush1.msra.mxu0 0.0
        %1089 = vmatprep.subr.mxu0 0.0
        %1090 = vmatpush1.msra.mxu0 0.0
        %1091 = vmatprep.subr.mxu0 0.0
        %1092 = vmatpush1.msra.mxu0 0.0
        %1093 = vmatprep.subr.mxu0 0.0
        %1094 = vmatpush1.msra.mxu0 0.0
        %1095 = vmatprep.subr.mxu0 0.0
        %1096 = vmatpush1.msra.mxu0 0.0
        %1097 = vmatprep.subr.mxu0 0.0
        %1098 = vmatpush1.msra.mxu0 0.0
        %1099 = vmatprep.subr.mxu0 0.0
        %1100 = vmatpush1.msra.mxu0 0.0
        %1101 = vmatprep.subr.mxu0 0.0
        %1102 = vmatpush1.msra.mxu0 0.0
        %1103 = vmatprep.subr.mxu0 0.0
        %1104 = vmatpush1.msra.mxu0 0.0
        %1105 = vmatprep.subr.mxu0 0.0
        %1106 = vmatpush1.msra.mxu0 0.0
        %1107 = vmatprep.subr.mxu0 0.0
        %1108 = vmatpush1.msra.mxu0 0.0
        %1109 = vmatprep.subr.mxu0 0.0
        %1110 = vmatpush1.msra.mxu0 0.0
        %1111 = vmatprep.subr.mxu0 0.0
        %1112 = vmatpush1.msra.mxu0 0.0
        %1113 = vmatprep.mubr.f32.mxu0 0.0
        %1114 = vmatmul.mubr.f32.gmra.mrb[0].mxu0 %v565
        %v1115 = vpop.f32.mrb[0].mxu0
        %v1116 = vadd.f32 %v1047, %v1115
        %v1117 = vpop.f32.mrb[0].mxu0
        %1118 = vdwg.mxu0
        %s1119 = scalar_lea.vmem %s3, 32
        %v1120 = vld [vmem:[%s1119] sm:$0xff]
        %v1121 = vld [vmem:[%s1119 + $0x8] sm:$0xff]
        %v1122 = vld [vmem:[%s1119 + $0x10] sm:$0xff]
        %v1123 = vld [vmem:[%s1119 + $0x18] sm:$0xff]
        %s1124 = scalar_lea.vmem %s4, 1
        %v1125 = vld [vmem:[%s1124] sm:$0x1]
        %v1127 = vlaneseq
        %v1128 = vshrl.u32 %v1127, 7
        %v1129 = vsub.s32 0, %v1128
        %v1130 = vrot.slane %v1125, %v1129
        %1132 = vmatprep.subr.mxu0 0.0
        %1133 = vmatpush1.msra.mxu0 %v1120
        %1134 = vmatprep.subr.mxu0 0.0
        %1135 = vmatpush1.msra.mxu0 %v1121
        %1136 = vmatprep.subr.mxu0 0.0
        %1137 = vmatpush1.msra.mxu0 %v1122
        %1138 = vmatprep.subr.mxu0 0.0
        %1139 = vmatpush1.msra.mxu0 %v1123
        %1140 = vmatprep.subr.mxu0 0.0
        %1141 = vmatpush1.msra.mxu0 0.0
        %1142 = vmatprep.subr.mxu0 0.0
        %1143 = vmatpush1.msra.mxu0 0.0
        %1144 = vmatprep.subr.mxu0 0.0
        %1145 = vmatpush1.msra.mxu0 0.0
        %1146 = vmatprep.subr.mxu0 0.0
        %1147 = vmatpush1.msra.mxu0 0.0
        %1148 = vmatprep.subr.mxu0 0.0
        %1149 = vmatpush1.msra.mxu0 0.0
        %1150 = vmatprep.subr.mxu0 0.0
        %1151 = vmatpush1.msra.mxu0 0.0
        %1152 = vmatprep.subr.mxu0 0.0
        %1153 = vmatpush1.msra.mxu0 0.0
        %1154 = vmatprep.subr.mxu0 0.0
        %1155 = vmatpush1.msra.mxu0 0.0
        %1156 = vmatprep.subr.mxu0 0.0
        %1157 = vmatpush1.msra.mxu0 0.0
        %1158 = vmatprep.subr.mxu0 0.0
        %1159 = vmatpush1.msra.mxu0 0.0
        %1160 = vmatprep.subr.mxu0 0.0
        %1161 = vmatpush1.msra.mxu0 0.0
        %1162 = vmatprep.subr.mxu0 0.0
        %1163 = vmatpush1.msra.mxu0 0.0
        %1164 = vmatprep.subr.mxu0 0.0
        %1165 = vmatpush1.msra.mxu0 0.0
        %1166 = vmatprep.subr.mxu0 0.0
        %1167 = vmatpush1.msra.mxu0 0.0
        %1168 = vmatprep.subr.mxu0 0.0
        %1169 = vmatpush1.msra.mxu0 0.0
        %1170 = vmatprep.subr.mxu0 0.0
        %1171 = vmatpush1.msra.mxu0 0.0
        %1172 = vmatprep.subr.mxu0 0.0
        %1173 = vmatpush1.msra.mxu0 0.0
        %1174 = vmatprep.subr.mxu0 0.0
        %1175 = vmatpush1.msra.mxu0 0.0
        %1176 = vmatprep.subr.mxu0 0.0
        %1177 = vmatpush1.msra.mxu0 0.0
        %1178 = vmatprep.subr.mxu0 0.0
        %1179 = vmatpush1.msra.mxu0 0.0
        %1180 = vmatprep.subr.mxu0 0.0
        %1181 = vmatpush1.msra.mxu0 0.0
        %1182 = vmatprep.subr.mxu0 0.0
        %1183 = vmatpush1.msra.mxu0 0.0
        %1184 = vmatprep.subr.mxu0 0.0
        %1185 = vmatpush1.msra.mxu0 0.0
        %1186 = vmatprep.subr.mxu0 0.0
        %1187 = vmatpush1.msra.mxu0 0.0
        %1188 = vmatprep.subr.mxu0 0.0
        %1189 = vmatpush1.msra.mxu0 0.0
        %1190 = vmatprep.subr.mxu0 0.0
        %1191 = vmatpush1.msra.mxu0 0.0
        %1192 = vmatprep.subr.mxu0 0.0
        %1193 = vmatpush1.msra.mxu0 0.0
        %1194 = vmatprep.subr.mxu0 0.0
        %1195 = vmatpush1.msra.mxu0 0.0
        %1196 = vmatprep.mubr.f32.mxu0 0.0
        %1197 = vmatmul.mubr.f32.gmra.mrb[0].mxu0 %v565
        %v1198 = vpop.f32.mrb[0].mxu0
        %v1199 = vadd.f32 %v1130, %v1198
        %v1200 = vpop.f32.mrb[0].mxu0
        %1201 = vdwg.mxu0
        %s1202 = scalar_lea.vmem %s5, 32
        %v1203 = vld [vmem:[%s1202] sm:$0xff]
        %v1204 = vld [vmem:[%s1202 + $0x8] sm:$0xff]
        %v1205 = vld [vmem:[%s1202 + $0x10] sm:$0xff]
        %v1206 = vld [vmem:[%s1202 + $0x18] sm:$0xff]
        %s1207 = scalar_lea.vmem %s6, 1
        %v1208 = vld [vmem:[%s1207] sm:$0x1]
        %v1210 = vlaneseq
        %v1211 = vshrl.u32 %v1210, 7
        %v1212 = vsub.s32 0, %v1211
        %v1213 = vrot.slane %v1208, %v1212
        %1215 = vmatprep.subr.mxu0 0.0
        %1216 = vmatpush1.msra.mxu0 %v1203
        %1217 = vmatprep.subr.mxu0 0.0
        %1218 = vmatpush1.msra.mxu0 %v1204
        %1219 = vmatprep.subr.mxu0 0.0
        %1220 = vmatpush1.msra.mxu0 %v1205
        %1221 = vmatprep.subr.mxu0 0.0
        %1222 = vmatpush1.msra.mxu0 %v1206
        %1223 = vmatprep.subr.mxu0 0.0
        %1224 = vmatpush1.msra.mxu0 0.0
        %1225 = vmatprep.subr.mxu0 0.0
        %1226 = vmatpush1.msra.mxu0 0.0
        %1227 = vmatprep.subr.mxu0 0.0
        %1228 = vmatpush1.msra.mxu0 0.0
        %1229 = vmatprep.subr.mxu0 0.0
        %1230 = vmatpush1.msra.mxu0 0.0
        %1231 = vmatprep.subr.mxu0 0.0
        %1232 = vmatpush1.msra.mxu0 0.0
        %1233 = vmatprep.subr.mxu0 0.0
        %1234 = vmatpush1.msra.mxu0 0.0
        %1235 = vmatprep.subr.mxu0 0.0
        %1236 = vmatpush1.msra.mxu0 0.0
        %1237 = vmatprep.subr.mxu0 0.0
        %1238 = vmatpush1.msra.mxu0 0.0
        %1239 = vmatprep.subr.mxu0 0.0
        %1240 = vmatpush1.msra.mxu0 0.0
        %1241 = vmatprep.subr.mxu0 0.0
        %1242 = vmatpush1.msra.mxu0 0.0
        %1243 = vmatprep.subr.mxu0 0.0
        %1244 = vmatpush1.msra.mxu0 0.0
        %1245 = vmatprep.subr.mxu0 0.0
        %1246 = vmatpush1.msra.mxu0 0.0
        %1247 = vmatprep.subr.mxu0 0.0
        %1248 = vmatpush1.msra.mxu0 0.0
        %1249 = vmatprep.subr.mxu0 0.0
        %1250 = vmatpush1.msra.mxu0 0.0
        %1251 = vmatprep.subr.mxu0 0.0
        %1252 = vmatpush1.msra.mxu0 0.0
        %1253 = vmatprep.subr.mxu0 0.0
        %1254 = vmatpush1.msra.mxu0 0.0
        %1255 = vmatprep.subr.mxu0 0.0
        %1256 = vmatpush1.msra.mxu0 0.0
        %1257 = vmatprep.subr.mxu0 0.0
        %1258 = vmatpush1.msra.mxu0 0.0
        %1259 = vmatprep.subr.mxu0 0.0
        %1260 = vmatpush1.msra.mxu0 0.0
        %1261 = vmatprep.subr.mxu0 0.0
        %1262 = vmatpush1.msra.mxu0 0.0
        %1263 = vmatprep.subr.mxu0 0.0
        %1264 = vmatpush1.msra.mxu0 0.0
        %1265 = vmatprep.subr.mxu0 0.0
        %1266 = vmatpush1.msra.mxu0 0.0
        %1267 = vmatprep.subr.mxu0 0.0
        %1268 = vmatpush1.msra.mxu0 0.0
        %1269 = vmatprep.subr.mxu0 0.0
        %1270 = vmatpush1.msra.mxu0 0.0
        %1271 = vmatprep.subr.mxu0 0.0
        %1272 = vmatpush1.msra.mxu0 0.0
        %1273 = vmatprep.subr.mxu0 0.0
        %1274 = vmatpush1.msra.mxu0 0.0
        %1275 = vmatprep.subr.mxu0 0.0
        %1276 = vmatpush1.msra.mxu0 0.0
        %1277 = vmatprep.subr.mxu0 0.0
        %1278 = vmatpush1.msra.mxu0 0.0
        %1279 = vmatprep.mubr.f32.mxu0 0.0
        %1280 = vmatmul.mubr.f32.gmra.mrb[0].mxu0 %v565
        %v1281 = vpop.f32.mrb[0].mxu0
        %v1282 = vadd.f32 %v1213, %v1281
        %v1283 = vpop.f32.mrb[0].mxu0
        %1284 = vdwg.mxu0
        %v1286 = vsel %vm799, %v1116, 0
        %v1289 = vsel %vm799, %v1199, 0
        %1291 = vmatprep.subr.mxu0 0.0
        %1292 = vmatpush1.xpose.msra.mxu0 %v1289
        %1293 = vmatprep.subr.mxu0 0.0
        %1294 = vmatpush1.xpose.msra.mxu0 0.0
        %1295 = vmatprep.subr.mxu0 0.0
        %1296 = vmatpush1.xpose.msra.mxu0 0.0
        %1297 = vmatprep.subr.mxu0 0.0
        %1298 = vmatpush1.xpose.msra.mxu0 0.0
        %1299 = vmatprep.subr.mxu0 0.0
        %1300 = vmatpush1.xpose.msra.mxu0 0.0
        %1301 = vmatprep.subr.mxu0 0.0
        %1302 = vmatpush1.xpose.msra.mxu0 0.0
        %1303 = vmatprep.subr.mxu0 0.0
        %1304 = vmatpush1.xpose.msra.mxu0 0.0
        %1305 = vmatprep.subr.mxu0 0.0
        %1306 = vmatpush1.xpose.msra.mxu0 0.0
        %1307 = vmatprep.subr.mxu0 0.0
        %1308 = vmatpush1.xpose.msra.mxu0 0.0
        %1309 = vmatprep.subr.mxu0 0.0
        %1310 = vmatpush1.xpose.msra.mxu0 0.0
        %1311 = vmatprep.subr.mxu0 0.0
        %1312 = vmatpush1.xpose.msra.mxu0 0.0
        %1313 = vmatprep.subr.mxu0 0.0
        %1314 = vmatpush1.xpose.msra.mxu0 0.0
        %1315 = vmatprep.subr.mxu0 0.0
        %1316 = vmatpush1.xpose.msra.mxu0 0.0
        %1317 = vmatprep.subr.mxu0 0.0
        %1318 = vmatpush1.xpose.msra.mxu0 0.0
        %1319 = vmatprep.subr.mxu0 0.0
        %1320 = vmatpush1.xpose.msra.mxu0 0.0
        %1321 = vmatprep.subr.mxu0 0.0
        %1322 = vmatpush1.xpose.msra.mxu0 0.0
        %1323 = vmatprep.subr.mxu0 0.0
        %1324 = vmatpush1.xpose.msra.mxu0 0.0
        %1325 = vmatprep.subr.mxu0 0.0
        %1326 = vmatpush1.xpose.msra.mxu0 0.0
        %1327 = vmatprep.subr.mxu0 0.0
        %1328 = vmatpush1.xpose.msra.mxu0 0.0
        %1329 = vmatprep.subr.mxu0 0.0
        %1330 = vmatpush1.xpose.msra.mxu0 0.0
        %1331 = vmatprep.subr.mxu0 0.0
        %1332 = vmatpush1.xpose.msra.mxu0 0.0
        %1333 = vmatprep.subr.mxu0 0.0
        %1334 = vmatpush1.xpose.msra.mxu0 0.0
        %1335 = vmatprep.subr.mxu0 0.0
        %1336 = vmatpush1.xpose.msra.mxu0 0.0
        %1337 = vmatprep.subr.mxu0 0.0
        %1338 = vmatpush1.xpose.msra.mxu0 0.0
        %1339 = vmatprep.subr.mxu0 0.0
        %1340 = vmatpush1.xpose.msra.mxu0 0.0
        %1341 = vmatprep.subr.mxu0 0.0
        %1342 = vmatpush1.xpose.msra.mxu0 0.0
        %1343 = vmatprep.subr.mxu0 0.0
        %1344 = vmatpush1.xpose.msra.mxu0 0.0
        %1345 = vmatprep.subr.mxu0 0.0
        %1346 = vmatpush1.xpose.msra.mxu0 0.0
        %1347 = vmatprep.subr.mxu0 0.0
        %1348 = vmatpush1.xpose.msra.mxu0 0.0
        %1349 = vmatprep.subr.mxu0 0.0
        %1350 = vmatpush1.xpose.msra.mxu0 0.0
        %1351 = vmatprep.subr.mxu0 0.0
        %1352 = vmatpush1.xpose.msra.mxu0 0.0
        %1353 = vmatprep.subr.mxu0 0.0
        %1354 = vmatpush1.xpose.msra.mxu0 0.0
        %1355 = vmatprep.mubr.f32.mxu0 0.0
        %1356 = vmatmul.mubr.f32.gmra.mrb[0].mxu0 %v1286
        %v1357 = vpop.f32.mrb[0].mxu0
        %v1358 = vadd.f32 0.0, %v1357
        %v1359 = vpop.f32.mrb[0].mxu0
        %1360 = vdwg.mxu0
        %v1361 = vsel %vm799, %v1358, -inf
        %1362 = vmax.xlane.f32.xlu0 %v1361
        %v1363 = vpop.xlane.xlu0 %1362
        %v1364 = vsub.f32 %v1358, %v1363
        %v1365 = vmul.f32 %v1364, 1.442695
        %v1366 = vpow.pop %v1365
        %v1367 = vsel %vm799, %v1366, 0.0
        %1368 = vadd.xlane.f32.xlu0 %v1367
        %v1369 = vpop.xlane.xlu0 %1368
        %v1370 = vrcp.pop %v1369
        %v1371 = vmul.f32 1.0, %v1370
        %v1372 = vmul.f32 %v1366, %v1371
        %v1374 = vsel %vm799, %v1372, 0
        %1376 = vmatprep.subr.mxu0 0.0
        %1377 = vmatpush1.msra.mxu0 %v1282
        %1378 = vmatprep.subr.mxu0 0.0
        %1379 = vmatpush1.msra.mxu0 0.0
        %1380 = vmatprep.subr.mxu0 0.0
        %1381 = vmatpush1.msra.mxu0 0.0
        %1382 = vmatprep.subr.mxu0 0.0
        %1383 = vmatpush1.msra.mxu0 0.0
        %1384 = vmatprep.subr.mxu0 0.0
        %1385 = vmatpush1.msra.mxu0 0.0
        %1386 = vmatprep.subr.mxu0 0.0
        %1387 = vmatpush1.msra.mxu0 0.0
        %1388 = vmatprep.subr.mxu0 0.0
        %1389 = vmatpush1.msra.mxu0 0.0
        %1390 = vmatprep.subr.mxu0 0.0
        %1391 = vmatpush1.msra.mxu0 0.0
        %1392 = vmatprep.subr.mxu0 0.0
        %1393 = vmatpush1.msra.mxu0 0.0
        %1394 = vmatprep.subr.mxu0 0.0
        %1395 = vmatpush1.msra.mxu0 0.0
        %1396 = vmatprep.subr.mxu0 0.0
        %1397 = vmatpush1.msra.mxu0 0.0
        %1398 = vmatprep.subr.mxu0 0.0
        %1399 = vmatpush1.msra.mxu0 0.0
        %1400 = vmatprep.subr.mxu0 0.0
        %1401 = vmatpush1.msra.mxu0 0.0
        %1402 = vmatprep.subr.mxu0 0.0
        %1403 = vmatpush1.msra.mxu0 0.0
        %1404 = vmatprep.subr.mxu0 0.0
        %1405 = vmatpush1.msra.mxu0 0.0
        %1406 = vmatprep.subr.mxu0 0.0
        %1407 = vmatpush1.msra.mxu0 0.0
        %1408 = vmatprep.subr.mxu0 0.0
        %1409 = vmatpush1.msra.mxu0 0.0
        %1410 = vmatprep.subr.mxu0 0.0
        %1411 = vmatpush1.msra.mxu0 0.0
        %1412 = vmatprep.subr.mxu0 0.0
        %1413 = vmatpush1.msra.mxu0 0.0
        %1414 = vmatprep.subr.mxu0 0.0
        %1415 = vmatpush1.msra.mxu0 0.0
        %1416 = vmatprep.subr.mxu0 0.0
        %1417 = vmatpush1.msra.mxu0 0.0
        %1418 = vmatprep.subr.mxu0 0.0
        %1419 = vmatpush1.msra.mxu0 0.0
        %1420 = vmatprep.subr.mxu0 0.0
        %1421 = vmatpush1.msra.mxu0 0.0
        %1422 = vmatprep.subr.mxu0 0.0
        %1423 = vmatpush1.msra.mxu0 0.0
        %1424 = vmatprep.subr.mxu0 0.0
        %1425 = vmatpush1.msra.mxu0 0.0
        %1426 = vmatprep.subr.mxu0 0.0
        %1427 = vmatpush1.msra.mxu0 0.0
        %1428 = vmatprep.subr.mxu0 0.0
        %1429 = vmatpush1.msra.mxu0 0.0
        %1430 = vmatprep.subr.mxu0 0.0
        %1431 = vmatpush1.msra.mxu0 0.0
        %1432 = vmatprep.subr.mxu0 0.0
        %1433 = vmatpush1.msra.mxu0 0.0
        %1434 = vmatprep.subr.mxu0 0.0
        %1435 = vmatpush1.msra.mxu0 0.0
        %1436 = vmatprep.subr.mxu0 0.0
        %1437 = vmatpush1.msra.mxu0 0.0
        %1438 = vmatprep.subr.mxu0 0.0
        %1439 = vmatpush1.msra.mxu0 0.0
        %1440 = vmatprep.mubr.f32.mxu0 0.0
        %1441 = vmatmul.mubr.f32.gmra.mrb[0].mxu0 %v1374
        %v1442 = vpop.f32.mrb[0].mxu0
        %v1443 = vadd.f32 0.0, %v1442
        %v1444 = vpop.f32.mrb[0].mxu0
        %1445 = vdwg.mxu0
        %s1446 = scalar_lea.vmem %s7, 8
        %v1447 = vld [vmem:[%s1446] sm:$0xff]
        %v1449 = vsel %vm799, %v1443, 0
        %1451 = vmatprep.subr.mxu0 0.0
        %1452 = vmatpush1.msra.mxu0 %v1447
        %1453 = vmatprep.subr.mxu0 0.0
        %1454 = vmatpush1.msra.mxu0 0.0
        %1455 = vmatprep.subr.mxu0 0.0
        %1456 = vmatpush1.msra.mxu0 0.0
        %1457 = vmatprep.subr.mxu0 0.0
        %1458 = vmatpush1.msra.mxu0 0.0
        %1459 = vmatprep.subr.mxu0 0.0
        %1460 = vmatpush1.msra.mxu0 0.0
        %1461 = vmatprep.subr.mxu0 0.0
        %1462 = vmatpush1.msra.mxu0 0.0
        %1463 = vmatprep.subr.mxu0 0.0
        %1464 = vmatpush1.msra.mxu0 0.0
        %1465 = vmatprep.subr.mxu0 0.0
        %1466 = vmatpush1.msra.mxu0 0.0
        %1467 = vmatprep.subr.mxu0 0.0
        %1468 = vmatpush1.msra.mxu0 0.0
        %1469 = vmatprep.subr.mxu0 0.0
        %1470 = vmatpush1.msra.mxu0 0.0
        %1471 = vmatprep.subr.mxu0 0.0
        %1472 = vmatpush1.msra.mxu0 0.0
        %1473 = vmatprep.subr.mxu0 0.0
        %1474 = vmatpush1.msra.mxu0 0.0
        %1475 = vmatprep.subr.mxu0 0.0
        %1476 = vmatpush1.msra.mxu0 0.0
        %1477 = vmatprep.subr.mxu0 0.0
        %1478 = vmatpush1.msra.mxu0 0.0
        %1479 = vmatprep.subr.mxu0 0.0
        %1480 = vmatpush1.msra.mxu0 0.0
        %1481 = vmatprep.subr.mxu0 0.0
        %1482 = vmatpush1.msra.mxu0 0.0
        %1483 = vmatprep.subr.mxu0 0.0
        %1484 = vmatpush1.msra.mxu0 0.0
        %1485 = vmatprep.subr.mxu0 0.0
        %1486 = vmatpush1.msra.mxu0 0.0
        %1487 = vmatprep.subr.mxu0 0.0
        %1488 = vmatpush1.msra.mxu0 0.0
        %1489 = vmatprep.subr.mxu0 0.0
        %1490 = vmatpush1.msra.mxu0 0.0
        %1491 = vmatprep.subr.mxu0 0.0
        %1492 = vmatpush1.msra.mxu0 0.0
        %1493 = vmatprep.subr.mxu0 0.0
        %1494 = vmatpush1.msra.mxu0 0.0
        %1495 = vmatprep.subr.mxu0 0.0
        %1496 = vmatpush1.msra.mxu0 0.0
        %1497 = vmatprep.subr.mxu0 0.0
        %1498 = vmatpush1.msra.mxu0 0.0
        %1499 = vmatprep.subr.mxu0 0.0
        %1500 = vmatpush1.msra.mxu0 0.0
        %1501 = vmatprep.subr.mxu0 0.0
        %1502 = vmatpush1.msra.mxu0 0.0
        %1503 = vmatprep.subr.mxu0 0.0
        %1504 = vmatpush1.msra.mxu0 0.0
        %1505 = vmatprep.subr.mxu0 0.0
        %1506 = vmatpush1.msra.mxu0 0.0
        %1507 = vmatprep.subr.mxu0 0.0
        %1508 = vmatpush1.msra.mxu0 0.0
        %1509 = vmatprep.subr.mxu0 0.0
        %1510 = vmatpush1.msra.mxu0 0.0
        %1511 = vmatprep.subr.mxu0 0.0
        %1512 = vmatpush1.msra.mxu0 0.0
        %1513 = vmatprep.subr.mxu0 0.0
        %1514 = vmatpush1.msra.mxu0 0.0
        %1515 = vmatprep.mubr.f32.mxu0 0.0
        %1516 = vmatmul.mubr.f32.gmra.mrb[0].mxu0 %v1449
        %v1517 = vpop.f32.mrb[0].mxu0
        %v1518 = vadd.f32 0.0, %v1517
        %v1519 = vpop.f32.mrb[0].mxu0
        %1520 = vdwg.mxu0
        %v1521 = vadd.f32 %v1035, %v1518
        %s1522 = scalar_lea.vmem %s1, 64
        %v1523 = vld [vmem:[%s1522] sm:$0xff]
        %v1524 = vld [vmem:[%s1522 + $0x8] sm:$0xff]
        %v1525 = vld [vmem:[%s1522 + $0x10] sm:$0xff]
        %v1526 = vld [vmem:[%s1522 + $0x18] sm:$0xff]
        %s1527 = scalar_lea.vmem %s2, 2
        %v1528 = vld [vmem:[%s1527] sm:$0x1]
        %v1530 = vlaneseq
        %v1531 = vshrl.u32 %v1530, 7
        %v1532 = vsub.s32 0, %v1531
        %v1533 = vrot.slane %v1528, %v1532
        %1535 = vmatprep.subr.mxu0 0.0
        %1536 = vmatpush1.msra.mxu0 %v1523
        %1537 = vmatprep.subr.mxu0 0.0
        %1538 = vmatpush1.msra.mxu0 %v1524
        %1539 = vmatprep.subr.mxu0 0.0
        %1540 = vmatpush1.msra.mxu0 %v1525
        %1541 = vmatprep.subr.mxu0 0.0
        %1542 = vmatpush1.msra.mxu0 %v1526
        %1543 = vmatprep.subr.mxu0 0.0
        %1544 = vmatpush1.msra.mxu0 0.0
        %1545 = vmatprep.subr.mxu0 0.0
        %1546 = vmatpush1.msra.mxu0 0.0
        %1547 = vmatprep.subr.mxu0 0.0
        %1548 = vmatpush1.msra.mxu0 0.0
        %1549 = vmatprep.subr.mxu0 0.0
        %1550 = vmatpush1.msra.mxu0 0.0
        %1551 = vmatprep.subr.mxu0 0.0
        %1552 = vmatpush1.msra.mxu0 0.0
        %1553 = vmatprep.subr.mxu0 0.0
        %1554 = vmatpush1.msra.mxu0 0.0
        %1555 = vmatprep.subr.mxu0 0.0
        %1556 = vmatpush1.msra.mxu0 0.0
        %1557 = vmatprep.subr.mxu0 0.0
        %1558 = vmatpush1.msra.mxu0 0.0
        %1559 = vmatprep.subr.mxu0 0.0
        %1560 = vmatpush1.msra.mxu0 0.0
        %1561 = vmatprep.subr.mxu0 0.0
        %1562 = vmatpush1.msra.mxu0 0.0
        %1563 = vmatprep.subr.mxu0 0.0
        %1564 = vmatpush1.msra.mxu0 0.0
        %1565 = vmatprep.subr.mxu0 0.0
        %1566 = vmatpush1.msra.mxu0 0.0
        %1567 = vmatprep.subr.mxu0 0.0
        %1568 = vmatpush1.msra.mxu0 0.0
        %1569 = vmatprep.subr.mxu0 0.0
        %1570 = vmatpush1.msra.mxu0 0.0
        %1571 = vmatprep.subr.mxu0 0.0
        %1572 = vmatpush1.msra.mxu0 0.0
        %1573 = vmatprep.subr.mxu0 0.0
        %1574 = vmatpush1.msra.mxu0 0.0
        %1575 = vmatprep.subr.mxu0 0.0
        %1576 = vmatpush1.msra.mxu0 0.0
        %1577 = vmatprep.subr.mxu0 0.0
        %1578 = vmatpush1.msra.mxu0 0.0
        %1579 = vmatprep.subr.mxu0 0.0
        %1580 = vmatpush1.msra.mxu0 0.0
        %1581 = vmatprep.subr.mxu0 0.0
        %1582 = vmatpush1.msra.mxu0 0.0
        %1583 = vmatprep.subr.mxu0 0.0
        %1584 = vmatpush1.msra.mxu0 0.0
        %1585 = vmatprep.subr.mxu0 0.0
        %1586 = vmatpush1.msra.mxu0 0.0
        %1587 = vmatprep.subr.mxu0 0.0
        %1588 = vmatpush1.msra.mxu0 0.0
        %1589 = vmatprep.subr.mxu0 0.0
        %1590 = vmatpush1.msra.mxu0 0.0
        %1591 = vmatprep.subr.mxu0 0.0
        %1592 = vmatpush1.msra.mxu0 0.0
        %1593 = vmatprep.subr.mxu0 0.0
        %1594 = vmatpush1.msra.mxu0 0.0
        %1595 = vmatprep.subr.mxu0 0.0
        %1596 = vmatpush1.msra.mxu0 0.0
        %1597 = vmatprep.subr.mxu0 0.0
        %1598 = vmatpush1.msra.mxu0 0.0
        %1599 = vmatprep.mubr.f32.mxu0 0.0
        %1600 = vmatmul.mubr.f32.gmra.mrb[0].mxu0 %v565
        %v1601 = vpop.f32.mrb[0].mxu0
        %v1602 = vadd.f32 %v1533, %v1601
        %v1603 = vpop.f32.mrb[0].mxu0
        %1604 = vdwg.mxu0
        %s1605 = scalar_lea.vmem %s3, 64
        %v1606 = vld [vmem:[%s1605] sm:$0xff]
        %v1607 = vld [vmem:[%s1605 + $0x8] sm:$0xff]
        %v1608 = vld [vmem:[%s1605 + $0x10] sm:$0xff]
        %v1609 = vld [vmem:[%s1605 + $0x18] sm:$0xff]
        %s1610 = scalar_lea.vmem %s4, 2
        %v1611 = vld [vmem:[%s1610] sm:$0x1]
        %v1613 = vlaneseq
        %v1614 = vshrl.u32 %v1613, 7
        %v1615 = vsub.s32 0, %v1614
        %v1616 = vrot.slane %v1611, %v1615
        %1618 = vmatprep.subr.mxu0 0.0
        %1619 = vmatpush1.msra.mxu0 %v1606
        %1620 = vmatprep.subr.mxu0 0.0
        %1621 = vmatpush1.msra.mxu0 %v1607
        %1622 = vmatprep.subr.mxu0 0.0
        %1623 = vmatpush1.msra.mxu0 %v1608
        %1624 = vmatprep.subr.mxu0 0.0
        %1625 = vmatpush1.msra.mxu0 %v1609
        %1626 = vmatprep.subr.mxu0 0.0
        %1627 = vmatpush1.msra.mxu0 0.0
        %1628 = vmatprep.subr.mxu0 0.0
        %1629 = vmatpush1.msra.mxu0 0.0
        %1630 = vmatprep.subr.mxu0 0.0
        %1631 = vmatpush1.msra.mxu0 0.0
        %1632 = vmatprep.subr.mxu0 0.0
        %1633 = vmatpush1.msra.mxu0 0.0
        %1634 = vmatprep.subr.mxu0 0.0
        %1635 = vmatpush1.msra.mxu0 0.0
        %1636 = vmatprep.subr.mxu0 0.0
        %1637 = vmatpush1.msra.mxu0 0.0
        %1638 = vmatprep.subr.mxu0 0.0
        %1639 = vmatpush1.msra.mxu0 0.0
        %1640 = vmatprep.subr.mxu0 0.0
        %1641 = vmatpush1.msra.mxu0 0.0
        %1642 = vmatprep.subr.mxu0 0.0
        %1643 = vmatpush1.msra.mxu0 0.0
        %1644 = vmatprep.subr.mxu0 0.0
        %1645 = vmatpush1.msra.mxu0 0.0
        %1646 = vmatprep.subr.mxu0 0.0
        %1647 = vmatpush1.msra.mxu0 0.0
        %1648 = vmatprep.subr.mxu0 0.0
        %1649 = vmatpush1.msra.mxu0 0.0
        %1650 = vmatprep.subr.mxu0 0.0
        %1651 = vmatpush1.msra.mxu0 0.0
        %1652 = vmatprep.subr.mxu0 0.0
        %1653 = vmatpush1.msra.mxu0 0.0
        %1654 = vmatprep.subr.mxu0 0.0
        %1655 = vmatpush1.msra.mxu0 0.0
        %1656 = vmatprep.subr.mxu0 0.0
        %1657 = vmatpush1.msra.mxu0 0.0
        %1658 = vmatprep.subr.mxu0 0.0
        %1659 = vmatpush1.msra.mxu0 0.0
        %1660 = vmatprep.subr.mxu0 0.0
        %1661 = vmatpush1.msra.mxu0 0.0
        %1662 = vmatprep.subr.mxu0 0.0
        %1663 = vmatpush1.msra.mxu0 0.0
        %1664 = vmatprep.subr.mxu0 0.0
        %1665 = vmatpush1.msra.mxu0 0.0
        %1666 = vmatprep.subr.mxu0 0.0
        %1667 = vmatpush1.msra.mxu0 0.0
        %1668 = vmatprep.subr.mxu0 0.0
        %1669 = vmatpush1.msra.mxu0 0.0
        %1670 = vmatprep.subr.mxu0 0.0
        %1671 = vmatpush1.msra.mxu0 0.0
        %1672 = vmatprep.subr.mxu0 0.0
        %1673 = vmatpush1.msra.mxu0 0.0
        %1674 = vmatprep.subr.mxu0 0.0
        %1675 = vmatpush1.msra.mxu0 0.0
        %1676 = vmatprep.subr.mxu0 0.0
        %1677 = vmatpush1.msra.mxu0 0.0
        %1678 = vmatprep.subr.mxu0 0.0
        %1679 = vmatpush1.msra.mxu0 0.0
        %1680 = vmatprep.subr.mxu0 0.0
        %1681 = vmatpush1.msra.mxu0 0.0
        %1682 = vmatprep.mubr.f32.mxu0 0.0
        %1683 = vmatmul.mubr.f32.gmra.mrb[0].mxu0 %v565
        %v1684 = vpop.f32.mrb[0].mxu0
        %v1685 = vadd.f32 %v1616, %v1684
        %v1686 = vpop.f32.mrb[0].mxu0
        %1687 = vdwg.mxu0
        %s1688 = scalar_lea.vmem %s5, 64
        %v1689 = vld [vmem:[%s1688] sm:$0xff]
        %v1690 = vld [vmem:[%s1688 + $0x8] sm:$0xff]
        %v1691 = vld [vmem:[%s1688 + $0x10] sm:$0xff]
        %v1692 = vld [vmem:[%s1688 + $0x18] sm:$0xff]
        %s1693 = scalar_lea.vmem %s6, 2
        %v1694 = vld [vmem:[%s1693] sm:$0x1]
        %v1696 = vlaneseq
        %v1697 = vshrl.u32 %v1696, 7
        %v1698 = vsub.s32 0, %v1697
        %v1699 = vrot.slane %v1694, %v1698
        %1701 = vmatprep.subr.mxu0 0.0
        %1702 = vmatpush1.msra.mxu0 %v1689
        %1703 = vmatprep.subr.mxu0 0.0
        %1704 = vmatpush1.msra.mxu0 %v1690
        %1705 = vmatprep.subr.mxu0 0.0
        %1706 = vmatpush1.msra.mxu0 %v1691
        %1707 = vmatprep.subr.mxu0 0.0
        %1708 = vmatpush1.msra.mxu0 %v1692
        %1709 = vmatprep.subr.mxu0 0.0
        %1710 = vmatpush1.msra.mxu0 0.0
        %1711 = vmatprep.subr.mxu0 0.0
        %1712 = vmatpush1.msra.mxu0 0.0
        %1713 = vmatprep.subr.mxu0 0.0
        %1714 = vmatpush1.msra.mxu0 0.0
        %1715 = vmatprep.subr.mxu0 0.0
        %1716 = vmatpush1.msra.mxu0 0.0
        %1717 = vmatprep.subr.mxu0 0.0
        %1718 = vmatpush1.msra.mxu0 0.0
        %1719 = vmatprep.subr.mxu0 0.0
        %1720 = vmatpush1.msra.mxu0 0.0
        %1721 = vmatprep.subr.mxu0 0.0
        %1722 = vmatpush1.msra.mxu0 0.0
        %1723 = vmatprep.subr.mxu0 0.0
        %1724 = vmatpush1.msra.mxu0 0.0
        %1725 = vmatprep.subr.mxu0 0.0
        %1726 = vmatpush1.msra.mxu0 0.0
        %1727 = vmatprep.subr.mxu0 0.0
        %1728 = vmatpush1.msra.mxu0 0.0
        %1729 = vmatprep.subr.mxu0 0.0
        %1730 = vmatpush1.msra.mxu0 0.0
        %1731 = vmatprep.subr.mxu0 0.0
        %1732 = vmatpush1.msra.mxu0 0.0
        %1733 = vmatprep.subr.mxu0 0.0
        %1734 = vmatpush1.msra.mxu0 0.0
        %1735 = vmatprep.subr.mxu0 0.0
        %1736 = vmatpush1.msra.mxu0 0.0
        %1737 = vmatprep.subr.mxu0 0.0
        %1738 = vmatpush1.msra.mxu0 0.0
        %1739 = vmatprep.subr.mxu0 0.0
        %1740 = vmatpush1.msra.mxu0 0.0
        %1741 = vmatprep.subr.mxu0 0.0
        %1742 = vmatpush1.msra.mxu0 0.0
        %1743 = vmatprep.subr.mxu0 0.0
        %1744 = vmatpush1.msra.mxu0 0.0
        %1745 = vmatprep.subr.mxu0 0.0
        %1746 = vmatpush1.msra.mxu0 0.0
        %1747 = vmatprep.subr.mxu0 0.0
        %1748 = vmatpush1.msra.mxu0 0.0
        %1749 = vmatprep.subr.mxu0 0.0
        %1750 = vmatpush1.msra.mxu0 0.0
        %1751 = vmatprep.subr.mxu0 0.0
        %1752 = vmatpush1.msra.mxu0 0.0
        %1753 = vmatprep.subr.mxu0 0.0
        %1754 = vmatpush1.msra.mxu0 0.0
        %1755 = vmatprep.subr.mxu0 0.0
        %1756 = vmatpush1.msra.mxu0 0.0
        %1757 = vmatprep.subr.mxu0 0.0
        %1758 = vmatpush1.msra.mxu0 0.0
        %1759 = vmatprep.subr.mxu0 0.0
        %1760 = vmatpush1.msra.mxu0 0.0
        %1761 = vmatprep.subr.mxu0 0.0
        %1762 = vmatpush1.msra.mxu0 0.0
        %1763 = vmatprep.subr.mxu0 0.0
        %1764 = vmatpush1.msra.mxu0 0.0
        %1765 = vmatprep.mubr.f32.mxu0 0.0
        %1766 = vmatmul.mubr.f32.gmra.mrb[0].mxu0 %v565
        %v1767 = vpop.f32.mrb[0].mxu0
        %v1768 = vadd.f32 %v1699, %v1767
        %v1769 = vpop.f32.mrb[0].mxu0
        %1770 = vdwg.mxu0
        %v1772 = vsel %vm799, %v1602, 0
        %v1775 = vsel %vm799, %v1685, 0
        %1777 = vmatprep.subr.mxu0 0.0
        %1778 = vmatpush1.xpose.msra.mxu0 %v1775
        %1779 = vmatprep.subr.mxu0 0.0
        %1780 = vmatpush1.xpose.msra.mxu0 0.0
        %1781 = vmatprep.subr.mxu0 0.0
        %1782 = vmatpush1.xpose.msra.mxu0 0.0
        %1783 = vmatprep.subr.mxu0 0.0
        %1784 = vmatpush1.xpose.msra.mxu0 0.0
        %1785 = vmatprep.subr.mxu0 0.0
        %1786 = vmatpush1.xpose.msra.mxu0 0.0
        %1787 = vmatprep.subr.mxu0 0.0
        %1788 = vmatpush1.xpose.msra.mxu0 0.0
        %1789 = vmatprep.subr.mxu0 0.0
        %1790 = vmatpush1.xpose.msra.mxu0 0.0
        %1791 = vmatprep.subr.mxu0 0.0
        %1792 = vmatpush1.xpose.msra.mxu0 0.0
        %1793 = vmatprep.subr.mxu0 0.0
        %1794 = vmatpush1.xpose.msra.mxu0 0.0
        %1795 = vmatprep.subr.mxu0 0.0
        %1796 = vmatpush1.xpose.msra.mxu0 0.0
        %1797 = vmatprep.subr.mxu0 0.0
        %1798 = vmatpush1.xpose.msra.mxu0 0.0
        %1799 = vmatprep.subr.mxu0 0.0
        %1800 = vmatpush1.xpose.msra.mxu0 0.0
        %1801 = vmatprep.subr.mxu0 0.0
        %1802 = vmatpush1.xpose.msra.mxu0 0.0
        %1803 = vmatprep.subr.mxu0 0.0
        %1804 = vmatpush1.xpose.msra.mxu0 0.0
        %1805 = vmatprep.subr.mxu0 0.0
        %1806 = vmatpush1.xpose.msra.mxu0 0.0
        %1807 = vmatprep.subr.mxu0 0.0
        %1808 = vmatpush1.xpose.msra.mxu0 0.0
        %1809 = vmatprep.subr.mxu0 0.0
        %1810 = vmatpush1.xpose.msra.mxu0 0.0
        %1811 = vmatprep.subr.mxu0 0.0
        %1812 = vmatpush1.xpose.msra.mxu0 0.0
        %1813 = vmatprep.subr.mxu0 0.0
        %1814 = vmatpush1.xpose.msra.mxu0 0.0
        %1815 = vmatprep.subr.mxu0 0.0
        %1816 = vmatpush1.xpose.msra.mxu0 0.0
        %1817 = vmatprep.subr.mxu0 0.0
        %1818 = vmatpush1.xpose.msra.mxu0 0.0
        %1819 = vmatprep.subr.mxu0 0.0
        %1820 = vmatpush1.xpose.msra.mxu0 0.0
        %1821 = vmatprep.subr.mxu0 0.0
        %1822 = vmatpush1.xpose.msra.mxu0 0.0
        %1823 = vmatprep.subr.mxu0 0.0
        %1824 = vmatpush1.xpose.msra.mxu0 0.0
        %1825 = vmatprep.subr.mxu0 0.0
        %1826 = vmatpush1.xpose.msra.mxu0 0.0
        %1827 = vmatprep.subr.mxu0 0.0
        %1828 = vmatpush1.xpose.msra.mxu0 0.0
        %1829 = vmatprep.subr.mxu0 0.0
        %1830 = vmatpush1.xpose.msra.mxu0 0.0
        %1831 = vmatprep.subr.mxu0 0.0
        %1832 = vmatpush1.xpose.msra.mxu0 0.0
        %1833 = vmatprep.subr.mxu0 0.0
        %1834 = vmatpush1.xpose.msra.mxu0 0.0
        %1835 = vmatprep.subr.mxu0 0.0
        %1836 = vmatpush1.xpose.msra.mxu0 0.0
        %1837 = vmatprep.subr.mxu0 0.0
        %1838 = vmatpush1.xpose.msra.mxu0 0.0
        %1839 = vmatprep.subr.mxu0 0.0
        %1840 = vmatpush1.xpose.msra.mxu0 0.0
        %1841 = vmatprep.mubr.f32.mxu0 0.0
        %1842 = vmatmul.mubr.f32.gmra.mrb[0].mxu0 %v1772
        %v1843 = vpop.f32.mrb[0].mxu0
        %v1844 = vadd.f32 0.0, %v1843
        %v1845 = vpop.f32.mrb[0].mxu0
        %1846 = vdwg.mxu0
        %v1847 = vsel %vm799, %v1844, -inf
        %1848 = vmax.xlane.f32.xlu0 %v1847
        %v1849 = vpop.xlane.xlu0 %1848
        %v1850 = vsub.f32 %v1844, %v1849
        %v1851 = vmul.f32 %v1850, 1.442695
        %v1852 = vpow.pop %v1851
        %v1853 = vsel %vm799, %v1852, 0.0
        %1854 = vadd.xlane.f32.xlu0 %v1853
        %v1855 = vpop.xlane.xlu0 %1854
        %v1856 = vrcp.pop %v1855
        %v1857 = vmul.f32 1.0, %v1856
        %v1858 = vmul.f32 %v1852, %v1857
        %v1860 = vsel %vm799, %v1858, 0
        %1862 = vmatprep.subr.mxu0 0.0
        %1863 = vmatpush1.msra.mxu0 %v1768
        %1864 = vmatprep.subr.mxu0 0.0
        %1865 = vmatpush1.msra.mxu0 0.0
        %1866 = vmatprep.subr.mxu0 0.0
        %1867 = vmatpush1.msra.mxu0 0.0
        %1868 = vmatprep.subr.mxu0 0.0
        %1869 = vmatpush1.msra.mxu0 0.0
        %1870 = vmatprep.subr.mxu0 0.0
        %1871 = vmatpush1.msra.mxu0 0.0
        %1872 = vmatprep.subr.mxu0 0.0
        %1873 = vmatpush1.msra.mxu0 0.0
        %1874 = vmatprep.subr.mxu0 0.0
        %1875 = vmatpush1.msra.mxu0 0.0
        %1876 = vmatprep.subr.mxu0 0.0
        %1877 = vmatpush1.msra.mxu0 0.0
        %1878 = vmatprep.subr.mxu0 0.0
        %1879 = vmatpush1.msra.mxu0 0.0
        %1880 = vmatprep.subr.mxu0 0.0
        %1881 = vmatpush1.msra.mxu0 0.0
        %1882 = vmatprep.subr.mxu0 0.0
        %1883 = vmatpush1.msra.mxu0 0.0
        %1884 = vmatprep.subr.mxu0 0.0
        %1885 = vmatpush1.msra.mxu0 0.0
        %1886 = vmatprep.subr.mxu0 0.0
        %1887 = vmatpush1.msra.mxu0 0.0
        %1888 = vmatprep.subr.mxu0 0.0
        %1889 = vmatpush1.msra.mxu0 0.0
        %1890 = vmatprep.subr.mxu0 0.0
        %1891 = vmatpush1.msra.mxu0 0.0
        %1892 = vmatprep.subr.mxu0 0.0
        %1893 = vmatpush1.msra.mxu0 0.0
        %1894 = vmatprep.subr.mxu0 0.0
        %1895 = vmatpush1.msra.mxu0 0.0
        %1896 = vmatprep.subr.mxu0 0.0
        %1897 = vmatpush1.msra.mxu0 0.0
        %1898 = vmatprep.subr.mxu0 0.0
        %1899 = vmatpush1.msra.mxu0 0.0
        %1900 = vmatprep.subr.mxu0 0.0
        %1901 = vmatpush1.msra.mxu0 0.0
        %1902 = vmatprep.subr.mxu0 0.0
        %1903 = vmatpush1.msra.mxu0 0.0
        %1904 = vmatprep.subr.mxu0 0.0
        %1905 = vmatpush1.msra.mxu0 0.0
        %1906 = vmatprep.subr.mxu0 0.0
        %1907 = vmatpush1.msra.mxu0 0.0
        %1908 = vmatprep.subr.mxu0 0.0
        %1909 = vmatpush1.msra.mxu0 0.0
        %1910 = vmatprep.subr.mxu0 0.0
        %1911 = vmatpush1.msra.mxu0 0.0
        %1912 = vmatprep.subr.mxu0 0.0
        %1913 = vmatpush1.msra.mxu0 0.0
        %1914 = vmatprep.subr.mxu0 0.0
        %1915 = vmatpush1.msra.mxu0 0.0
        %1916 = vmatprep.subr.mxu0 0.0
        %1917 = vmatpush1.msra.mxu0 0.0
        %1918 = vmatprep.subr.mxu0 0.0
        %1919 = vmatpush1.msra.mxu0 0.0
        %1920 = vmatprep.subr.mxu0 0.0
        %1921 = vmatpush1.msra.mxu0 0.0
        %1922 = vmatprep.subr.mxu0 0.0
        %1923 = vmatpush1.msra.mxu0 0.0
        %1924 = vmatprep.subr.mxu0 0.0
        %1925 = vmatpush1.msra.mxu0 0.0
        %1926 = vmatprep.mubr.f32.mxu0 0.0
        %1927 = vmatmul.mubr.f32.gmra.mrb[0].mxu0 %v1860
        %v1928 = vpop.f32.mrb[0].mxu0
        %v1929 = vadd.f32 0.0, %v1928
        %v1930 = vpop.f32.mrb[0].mxu0
        %1931 = vdwg.mxu0
        %s1932 = scalar_lea.vmem %s7, 16
        %v1933 = vld [vmem:[%s1932] sm:$0xff]
        %v1935 = vsel %vm799, %v1929, 0
        %1937 = vmatprep.subr.mxu0 0.0
        %1938 = vmatpush1.msra.mxu0 %v1933
        %1939 = vmatprep.subr.mxu0 0.0
        %1940 = vmatpush1.msra.mxu0 0.0
        %1941 = vmatprep.subr.mxu0 0.0
        %1942 = vmatpush1.msra.mxu0 0.0
        %1943 = vmatprep.subr.mxu0 0.0
        %1944 = vmatpush1.msra.mxu0 0.0
        %1945 = vmatprep.subr.mxu0 0.0
        %1946 = vmatpush1.msra.mxu0 0.0
        %1947 = vmatprep.subr.mxu0 0.0
        %1948 = vmatpush1.msra.mxu0 0.0
        %1949 = vmatprep.subr.mxu0 0.0
        %1950 = vmatpush1.msra.mxu0 0.0
        %1951 = vmatprep.subr.mxu0 0.0
        %1952 = vmatpush1.msra.mxu0 0.0
        %1953 = vmatprep.subr.mxu0 0.0
        %1954 = vmatpush1.msra.mxu0 0.0
        %1955 = vmatprep.subr.mxu0 0.0
        %1956 = vmatpush1.msra.mxu0 0.0
        %1957 = vmatprep.subr.mxu0 0.0
        %1958 = vmatpush1.msra.mxu0 0.0
        %1959 = vmatprep.subr.mxu0 0.0
        %1960 = vmatpush1.msra.mxu0 0.0
        %1961 = vmatprep.subr.mxu0 0.0
        %1962 = vmatpush1.msra.mxu0 0.0
        %1963 = vmatprep.subr.mxu0 0.0
        %1964 = vmatpush1.msra.mxu0 0.0
        %1965 = vmatprep.subr.mxu0 0.0
        %1966 = vmatpush1.msra.mxu0 0.0
        %1967 = vmatprep.subr.mxu0 0.0
        %1968 = vmatpush1.msra.mxu0 0.0
        %1969 = vmatprep.subr.mxu0 0.0
        %1970 = vmatpush1.msra.mxu0 0.0
        %1971 = vmatprep.subr.mxu0 0.0
        %1972 = vmatpush1.msra.mxu0 0.0
        %1973 = vmatprep.subr.mxu0 0.0
        %1974 = vmatpush1.msra.mxu0 0.0
        %1975 = vmatprep.subr.mxu0 0.0
        %1976 = vmatpush1.msra.mxu0 0.0
        %1977 = vmatprep.subr.mxu0 0.0
        %1978 = vmatpush1.msra.mxu0 0.0
        %1979 = vmatprep.subr.mxu0 0.0
        %1980 = vmatpush1.msra.mxu0 0.0
        %1981 = vmatprep.subr.mxu0 0.0
        %1982 = vmatpush1.msra.mxu0 0.0
        %1983 = vmatprep.subr.mxu0 0.0
        %1984 = vmatpush1.msra.mxu0 0.0
        %1985 = vmatprep.subr.mxu0 0.0
        %1986 = vmatpush1.msra.mxu0 0.0
        %1987 = vmatprep.subr.mxu0 0.0
        %1988 = vmatpush1.msra.mxu0 0.0
        %1989 = vmatprep.subr.mxu0 0.0
        %1990 = vmatpush1.msra.mxu0 0.0
        %1991 = vmatprep.subr.mxu0 0.0
        %1992 = vmatpush1.msra.mxu0 0.0
        %1993 = vmatprep.subr.mxu0 0.0
        %1994 = vmatpush1.msra.mxu0 0.0
        %1995 = vmatprep.subr.mxu0 0.0
        %1996 = vmatpush1.msra.mxu0 0.0
        %1997 = vmatprep.subr.mxu0 0.0
        %1998 = vmatpush1.msra.mxu0 0.0
        %1999 = vmatprep.subr.mxu0 0.0
        %2000 = vmatpush1.msra.mxu0 0.0
        %2001 = vmatprep.mubr.f32.mxu0 0.0
        %2002 = vmatmul.mubr.f32.gmra.mrb[0].mxu0 %v1935
        %v2003 = vpop.f32.mrb[0].mxu0
        %v2004 = vadd.f32 0.0, %v2003
        %v2005 = vpop.f32.mrb[0].mxu0
        %2006 = vdwg.mxu0
        %v2007 = vadd.f32 %v1521, %v2004
        %s2008 = scalar_lea.vmem %s1, 96
        %v2009 = vld [vmem:[%s2008] sm:$0xff]
        %v2010 = vld [vmem:[%s2008 + $0x8] sm:$0xff]
        %v2011 = vld [vmem:[%s2008 + $0x10] sm:$0xff]
        %v2012 = vld [vmem:[%s2008 + $0x18] sm:$0xff]
        %s2013 = scalar_lea.vmem %s2, 3
        %v2014 = vld [vmem:[%s2013] sm:$0x1]
        %v2016 = vlaneseq
        %v2017 = vshrl.u32 %v2016, 7
        %v2018 = vsub.s32 0, %v2017
        %v2019 = vrot.slane %v2014, %v2018
        %2021 = vmatprep.subr.mxu0 0.0
        %2022 = vmatpush1.msra.mxu0 %v2009
        %2023 = vmatprep.subr.mxu0 0.0
        %2024 = vmatpush1.msra.mxu0 %v2010
        %2025 = vmatprep.subr.mxu0 0.0
        %2026 = vmatpush1.msra.mxu0 %v2011
        %2027 = vmatprep.subr.mxu0 0.0
        %2028 = vmatpush1.msra.mxu0 %v2012
        %2029 = vmatprep.subr.mxu0 0.0
        %2030 = vmatpush1.msra.mxu0 0.0
        %2031 = vmatprep.subr.mxu0 0.0
        %2032 = vmatpush1.msra.mxu0 0.0
        %2033 = vmatprep.subr.mxu0 0.0
        %2034 = vmatpush1.msra.mxu0 0.0
        %2035 = vmatprep.subr.mxu0 0.0
        %2036 = vmatpush1.msra.mxu0 0.0
        %2037 = vmatprep.subr.mxu0 0.0
        %2038 = vmatpush1.msra.mxu0 0.0
        %2039 = vmatprep.subr.mxu0 0.0
        %2040 = vmatpush1.msra.mxu0 0.0
        %2041 = vmatprep.subr.mxu0 0.0
        %2042 = vmatpush1.msra.mxu0 0.0
        %2043 = vmatprep.subr.mxu0 0.0
        %2044 = vmatpush1.msra.mxu0 0.0
        %2045 = vmatprep.subr.mxu0 0.0
        %2046 = vmatpush1.msra.mxu0 0.0
        %2047 = vmatprep.subr.mxu0 0.0
        %2048 = vmatpush1.msra.mxu0 0.0
        %2049 = vmatprep.subr.mxu0 0.0
        %2050 = vmatpush1.msra.mxu0 0.0
        %2051 = vmatprep.subr.mxu0 0.0
        %2052 = vmatpush1.msra.mxu0 0.0
        %2053 = vmatprep.subr.mxu0 0.0
        %2054 = vmatpush1.msra.mxu0 0.0
        %2055 = vmatprep.subr.mxu0 0.0
        %2056 = vmatpush1.msra.mxu0 0.0
        %2057 = vmatprep.subr.mxu0 0.0
        %2058 = vmatpush1.msra.mxu0 0.0
        %2059 = vmatprep.subr.mxu0 0.0
        %2060 = vmatpush1.msra.mxu0 0.0
        %2061 = vmatprep.subr.mxu0 0.0
        %2062 = vmatpush1.msra.mxu0 0.0
        %2063 = vmatprep.subr.mxu0 0.0
        %2064 = vmatpush1.msra.mxu0 0.0
        %2065 = vmatprep.subr.mxu0 0.0
        %2066 = vmatpush1.msra.mxu0 0.0
        %2067 = vmatprep.subr.mxu0 0.0
        %2068 = vmatpush1.msra.mxu0 0.0
        %2069 = vmatprep.subr.mxu0 0.0
        %2070 = vmatpush1.msra.mxu0 0.0
        %2071 = vmatprep.subr.mxu0 0.0
        %2072 = vmatpush1.msra.mxu0 0.0
        %2073 = vmatprep.subr.mxu0 0.0
        %2074 = vmatpush1.msra.mxu0 0.0
        %2075 = vmatprep.subr.mxu0 0.0
        %2076 = vmatpush1.msra.mxu0 0.0
        %2077 = vmatprep.subr.mxu0 0.0
        %2078 = vmatpush1.msra.mxu0 0.0
        %2079 = vmatprep.subr.mxu0 0.0
        %2080 = vmatpush1.msra.mxu0 0.0
        %2081 = vmatprep.subr.mxu0 0.0
        %2082 = vmatpush1.msra.mxu0 0.0
        %2083 = vmatprep.subr.mxu0 0.0
        %2084 = vmatpush1.msra.mxu0 0.0
        %2085 = vmatprep.mubr.f32.mxu0 0.0
        %2086 = vmatmul.mubr.f32.gmra.mrb[0].mxu0 %v565
        %v2087 = vpop.f32.mrb[0].mxu0
        %v2088 = vadd.f32 %v2019, %v2087
        %v2089 = vpop.f32.mrb[0].mxu0
        %2090 = vdwg.mxu0
        %s2091 = scalar_lea.vmem %s3, 96
        %v2092 = vld [vmem:[%s2091] sm:$0xff]
        %v2093 = vld [vmem:[%s2091 + $0x8] sm:$0xff]
        %v2094 = vld [vmem:[%s2091 + $0x10] sm:$0xff]
        %v2095 = vld [vmem:[%s2091 + $0x18] sm:$0xff]
        %s2096 = scalar_lea.vmem %s4, 3
        %v2097 = vld [vmem:[%s2096] sm:$0x1]
        %v2099 = vlaneseq
        %v2100 = vshrl.u32 %v2099, 7
        %v2101 = vsub.s32 0, %v2100
        %v2102 = vrot.slane %v2097, %v2101
        %2104 = vmatprep.subr.mxu0 0.0
        %2105 = vmatpush1.msra.mxu0 %v2092
        %2106 = vmatprep.subr.mxu0 0.0
        %2107 = vmatpush1.msra.mxu0 %v2093
        %2108 = vmatprep.subr.mxu0 0.0
        %2109 = vmatpush1.msra.mxu0 %v2094
        %2110 = vmatprep.subr.mxu0 0.0
        %2111 = vmatpush1.msra.mxu0 %v2095
        %2112 = vmatprep.subr.mxu0 0.0
        %2113 = vmatpush1.msra.mxu0 0.0
        %2114 = vmatprep.subr.mxu0 0.0
        %2115 = vmatpush1.msra.mxu0 0.0
        %2116 = vmatprep.subr.mxu0 0.0
        %2117 = vmatpush1.msra.mxu0 0.0
        %2118 = vmatprep.subr.mxu0 0.0
        %2119 = vmatpush1.msra.mxu0 0.0
        %2120 = vmatprep.subr.mxu0 0.0
        %2121 = vmatpush1.msra.mxu0 0.0
        %2122 = vmatprep.subr.mxu0 0.0
        %2123 = vmatpush1.msra.mxu0 0.0
        %2124 = vmatprep.subr.mxu0 0.0
        %2125 = vmatpush1.msra.mxu0 0.0
        %2126 = vmatprep.subr.mxu0 0.0
        %2127 = vmatpush1.msra.mxu0 0.0
        %2128 = vmatprep.subr.mxu0 0.0
        %2129 = vmatpush1.msra.mxu0 0.0
        %2130 = vmatprep.subr.mxu0 0.0
        %2131 = vmatpush1.msra.mxu0 0.0
        %2132 = vmatprep.subr.mxu0 0.0
        %2133 = vmatpush1.msra.mxu0 0.0
        %2134 = vmatprep.subr.mxu0 0.0
        %2135 = vmatpush1.msra.mxu0 0.0
        %2136 = vmatprep.subr.mxu0 0.0
        %2137 = vmatpush1.msra.mxu0 0.0
        %2138 = vmatprep.subr.mxu0 0.0
        %2139 = vmatpush1.msra.mxu0 0.0
        %2140 = vmatprep.subr.mxu0 0.0
        %2141 = vmatpush1.msra.mxu0 0.0
        %2142 = vmatprep.subr.mxu0 0.0
        %2143 = vmatpush1.msra.mxu0 0.0
        %2144 = vmatprep.subr.mxu0 0.0
        %2145 = vmatpush1.msra.mxu0 0.0
        %2146 = vmatprep.subr.mxu0 0.0
        %2147 = vmatpush1.msra.mxu0 0.0
        %2148 = vmatprep.subr.mxu0 0.0
        %2149 = vmatpush1.msra.mxu0 0.0
        %2150 = vmatprep.subr.mxu0 0.0
        %2151 = vmatpush1.msra.mxu0 0.0
        %2152 = vmatprep.subr.mxu0 0.0
        %2153 = vmatpush1.msra.mxu0 0.0
        %2154 = vmatprep.subr.mxu0 0.0
        %2155 = vmatpush1.msra.mxu0 0.0
        %2156 = vmatprep.subr.mxu0 0.0
        %2157 = vmatpush1.msra.mxu0 0.0
        %2158 = vmatprep.subr.mxu0 0.0
        %2159 = vmatpush1.msra.mxu0 0.0
        %2160 = vmatprep.subr.mxu0 0.0
        %2161 = vmatpush1.msra.mxu0 0.0
        %2162 = vmatprep.subr.mxu0 0.0
        %2163 = vmatpush1.msra.mxu0 0.0
        %2164 = vmatprep.subr.mxu0 0.0
        %2165 = vmatpush1.msra.mxu0 0.0
        %2166 = vmatprep.subr.mxu0 0.0
        %2167 = vmatpush1.msra.mxu0 0.0
        %2168 = vmatprep.mubr.f32.mxu0 0.0
        %2169 = vmatmul.mubr.f32.gmra.mrb[0].mxu0 %v565
        %v2170 = vpop.f32.mrb[0].mxu0
        %v2171 = vadd.f32 %v2102, %v2170
        %v2172 = vpop.f32.mrb[0].mxu0
        %2173 = vdwg.mxu0
        %s2174 = scalar_lea.vmem %s5, 96
        %v2175 = vld [vmem:[%s2174] sm:$0xff]
        %v2176 = vld [vmem:[%s2174 + $0x8] sm:$0xff]
        %v2177 = vld [vmem:[%s2174 + $0x10] sm:$0xff]
        %v2178 = vld [vmem:[%s2174 + $0x18] sm:$0xff]
        %s2179 = scalar_lea.vmem %s6, 3
        %v2180 = vld [vmem:[%s2179] sm:$0x1]
        %v2182 = vlaneseq
        %v2183 = vshrl.u32 %v2182, 7
        %v2184 = vsub.s32 0, %v2183
        %v2185 = vrot.slane %v2180, %v2184
        %2187 = vmatprep.subr.mxu0 0.0
        %2188 = vmatpush1.msra.mxu0 %v2175
        %2189 = vmatprep.subr.mxu0 0.0
        %2190 = vmatpush1.msra.mxu0 %v2176
        %2191 = vmatprep.subr.mxu0 0.0
        %2192 = vmatpush1.msra.mxu0 %v2177
        %2193 = vmatprep.subr.mxu0 0.0
        %2194 = vmatpush1.msra.mxu0 %v2178
        %2195 = vmatprep.subr.mxu0 0.0
        %2196 = vmatpush1.msra.mxu0 0.0
        %2197 = vmatprep.subr.mxu0 0.0
        %2198 = vmatpush1.msra.mxu0 0.0
        %2199 = vmatprep.subr.mxu0 0.0
        %2200 = vmatpush1.msra.mxu0 0.0
        %2201 = vmatprep.subr.mxu0 0.0
        %2202 = vmatpush1.msra.mxu0 0.0
        %2203 = vmatprep.subr.mxu0 0.0
        %2204 = vmatpush1.msra.mxu0 0.0
        %2205 = vmatprep.subr.mxu0 0.0
        %2206 = vmatpush1.msra.mxu0 0.0
        %2207 = vmatprep.subr.mxu0 0.0
        %2208 = vmatpush1.msra.mxu0 0.0
        %2209 = vmatprep.subr.mxu0 0.0
        %2210 = vmatpush1.msra.mxu0 0.0
        %2211 = vmatprep.subr.mxu0 0.0
        %2212 = vmatpush1.msra.mxu0 0.0
        %2213 = vmatprep.subr.mxu0 0.0
        %2214 = vmatpush1.msra.mxu0 0.0
        %2215 = vmatprep.subr.mxu0 0.0
        %2216 = vmatpush1.msra.mxu0 0.0
        %2217 = vmatprep.subr.mxu0 0.0
        %2218 = vmatpush1.msra.mxu0 0.0
        %2219 = vmatprep.subr.mxu0 0.0
        %2220 = vmatpush1.msra.mxu0 0.0
        %2221 = vmatprep.subr.mxu0 0.0
        %2222 = vmatpush1.msra.mxu0 0.0
        %2223 = vmatprep.subr.mxu0 0.0
        %2224 = vmatpush1.msra.mxu0 0.0
        %2225 = vmatprep.subr.mxu0 0.0
        %2226 = vmatpush1.msra.mxu0 0.0
        %2227 = vmatprep.subr.mxu0 0.0
        %2228 = vmatpush1.msra.mxu0 0.0
        %2229 = vmatprep.subr.mxu0 0.0
        %2230 = vmatpush1.msra.mxu0 0.0
        %2231 = vmatprep.subr.mxu0 0.0
        %2232 = vmatpush1.msra.mxu0 0.0
        %2233 = vmatprep.subr.mxu0 0.0
        %2234 = vmatpush1.msra.mxu0 0.0
        %2235 = vmatprep.subr.mxu0 0.0
        %2236 = vmatpush1.msra.mxu0 0.0
        %2237 = vmatprep.subr.mxu0 0.0
        %2238 = vmatpush1.msra.mxu0 0.0
        %2239 = vmatprep.subr.mxu0 0.0
        %2240 = vmatpush1.msra.mxu0 0.0
        %2241 = vmatprep.subr.mxu0 0.0
        %2242 = vmatpush1.msra.mxu0 0.0
        %2243 = vmatprep.subr.mxu0 0.0
        %2244 = vmatpush1.msra.mxu0 0.0
        %2245 = vmatprep.subr.mxu0 0.0
        %2246 = vmatpush1.msra.mxu0 0.0
        %2247 = vmatprep.subr.mxu0 0.0
        %2248 = vmatpush1.msra.mxu0 0.0
        %2249 = vmatprep.subr.mxu0 0.0
        %2250 = vmatpush1.msra.mxu0 0.0
        %2251 = vmatprep.mubr.f32.mxu0 0.0
        %2252 = vmatmul.mubr.f32.gmra.mrb[0].mxu0 %v565
        %v2253 = vpop.f32.mrb[0].mxu0
        %v2254 = vadd.f32 %v2185, %v2253
        %v2255 = vpop.f32.mrb[0].mxu0
        %2256 = vdwg.mxu0
        %v2258 = vsel %vm799, %v2088, 0
        %v2261 = vsel %vm799, %v2171, 0
        %2263 = vmatprep.subr.mxu0 0.0
        %2264 = vmatpush1.xpose.msra.mxu0 %v2261
        %2265 = vmatprep.subr.mxu0 0.0
        %2266 = vmatpush1.xpose.msra.mxu0 0.0
        %2267 = vmatprep.subr.mxu0 0.0
        %2268 = vmatpush1.xpose.msra.mxu0 0.0
        %2269 = vmatprep.subr.mxu0 0.0
        %2270 = vmatpush1.xpose.msra.mxu0 0.0
        %2271 = vmatprep.subr.mxu0 0.0
        %2272 = vmatpush1.xpose.msra.mxu0 0.0
        %2273 = vmatprep.subr.mxu0 0.0
        %2274 = vmatpush1.xpose.msra.mxu0 0.0
        %2275 = vmatprep.subr.mxu0 0.0
        %2276 = vmatpush1.xpose.msra.mxu0 0.0
        %2277 = vmatprep.subr.mxu0 0.0
        %2278 = vmatpush1.xpose.msra.mxu0 0.0
        %2279 = vmatprep.subr.mxu0 0.0
        %2280 = vmatpush1.xpose.msra.mxu0 0.0
        %2281 = vmatprep.subr.mxu0 0.0
        %2282 = vmatpush1.xpose.msra.mxu0 0.0
        %2283 = vmatprep.subr.mxu0 0.0
        %2284 = vmatpush1.xpose.msra.mxu0 0.0
        %2285 = vmatprep.subr.mxu0 0.0
        %2286 = vmatpush1.xpose.msra.mxu0 0.0
        %2287 = vmatprep.subr.mxu0 0.0
        %2288 = vmatpush1.xpose.msra.mxu0 0.0
        %2289 = vmatprep.subr.mxu0 0.0
        %2290 = vmatpush1.xpose.msra.mxu0 0.0
        %2291 = vmatprep.subr.mxu0 0.0
        %2292 = vmatpush1.xpose.msra.mxu0 0.0
        %2293 = vmatprep.subr.mxu0 0.0
        %2294 = vmatpush1.xpose.msra.mxu0 0.0
        %2295 = vmatprep.subr.mxu0 0.0
        %2296 = vmatpush1.xpose.msra.mxu0 0.0
        %2297 = vmatprep.subr.mxu0 0.0
        %2298 = vmatpush1.xpose.msra.mxu0 0.0
        %2299 = vmatprep.subr.mxu0 0.0
        %2300 = vmatpush1.xpose.msra.mxu0 0.0
        %2301 = vmatprep.subr.mxu0 0.0
        %2302 = vmatpush1.xpose.msra.mxu0 0.0
        %2303 = vmatprep.subr.mxu0 0.0
        %2304 = vmatpush1.xpose.msra.mxu0 0.0
        %2305 = vmatprep.subr.mxu0 0.0
        %2306 = vmatpush1.xpose.msra.mxu0 0.0
        %2307 = vmatprep.subr.mxu0 0.0
        %2308 = vmatpush1.xpose.msra.mxu0 0.0
        %2309 = vmatprep.subr.mxu0 0.0
        %2310 = vmatpush1.xpose.msra.mxu0 0.0
        %2311 = vmatprep.subr.mxu0 0.0
        %2312 = vmatpush1.xpose.msra.mxu0 0.0
        %2313 = vmatprep.subr.mxu0 0.0
        %2314 = vmatpush1.xpose.msra.mxu0 0.0
        %2315 = vmatprep.subr.mxu0 0.0
        %2316 = vmatpush1.xpose.msra.mxu0 0.0
        %2317 = vmatprep.subr.mxu0 0.0
        %2318 = vmatpush1.xpose.msra.mxu0 0.0
        %2319 = vmatprep.subr.mxu0 0.0
        %2320 = vmatpush1.xpose.msra.mxu0 0.0
        %2321 = vmatprep.subr.mxu0 0.0
        %2322 = vmatpush1.xpose.msra.mxu0 0.0
        %2323 = vmatprep.subr.mxu0 0.0
        %2324 = vmatpush1.xpose.msra.mxu0 0.0
        %2325 = vmatprep.subr.mxu0 0.0
        %2326 = vmatpush1.xpose.msra.mxu0 0.0
        %2327 = vmatprep.mubr.f32.mxu0 0.0
        %2328 = vmatmul.mubr.f32.gmra.mrb[0].mxu0 %v2258
        %v2329 = vpop.f32.mrb[0].mxu0
        %v2330 = vadd.f32 0.0, %v2329
        %v2331 = vpop.f32.mrb[0].mxu0
        %2332 = vdwg.mxu0
        %v2333 = vsel %vm799, %v2330, -inf
        %2334 = vmax.xlane.f32.xlu0 %v2333
        %v2335 = vpop.xlane.xlu0 %2334
        %v2336 = vsub.f32 %v2330, %v2335
        %v2337 = vmul.f32 %v2336, 1.442695
        %v2338 = vpow.pop %v2337
        %v2339 = vsel %vm799, %v2338, 0.0
        %2340 = vadd.xlane.f32.xlu0 %v2339
        %v2341 = vpop.xlane.xlu0 %2340
        %v2342 = vrcp.pop %v2341
        %v2343 = vmul.f32 1.0, %v2342
        %v2344 = vmul.f32 %v2338, %v2343
        %v2346 = vsel %vm799, %v2344, 0
        %2348 = vmatprep.subr.mxu0 0.0
        %2349 = vmatpush1.msra.mxu0 %v2254
        %2350 = vmatprep.subr.mxu0 0.0
        %2351 = vmatpush1.msra.mxu0 0.0
        %2352 = vmatprep.subr.mxu0 0.0
        %2353 = vmatpush1.msra.mxu0 0.0
        %2354 = vmatprep.subr.mxu0 0.0
        %2355 = vmatpush1.msra.mxu0 0.0
        %2356 = vmatprep.subr.mxu0 0.0
        %2357 = vmatpush1.msra.mxu0 0.0
        %2358 = vmatprep.subr.mxu0 0.0
        %2359 = vmatpush1.msra.mxu0 0.0
        %2360 = vmatprep.subr.mxu0 0.0
        %2361 = vmatpush1.msra.mxu0 0.0
        %2362 = vmatprep.subr.mxu0 0.0
        %2363 = vmatpush1.msra.mxu0 0.0
        %2364 = vmatprep.subr.mxu0 0.0
        %2365 = vmatpush1.msra.mxu0 0.0
        %2366 = vmatprep.subr.mxu0 0.0
        %2367 = vmatpush1.msra.mxu0 0.0
        %2368 = vmatprep.subr.mxu0 0.0
        %2369 = vmatpush1.msra.mxu0 0.0
        %2370 = vmatprep.subr.mxu0 0.0
        %2371 = vmatpush1.msra.mxu0 0.0
        %2372 = vmatprep.subr.mxu0 0.0
        %2373 = vmatpush1.msra.mxu0 0.0
        %2374 = vmatprep.subr.mxu0 0.0
        %2375 = vmatpush1.msra.mxu0 0.0
        %2376 = vmatprep.subr.mxu0 0.0
        %2377 = vmatpush1.msra.mxu0 0.0
        %2378 = vmatprep.subr.mxu0 0.0
        %2379 = vmatpush1.msra.mxu0 0.0
        %2380 = vmatprep.subr.mxu0 0.0
        %2381 = vmatpush1.msra.mxu0 0.0
        %2382 = vmatprep.subr.mxu0 0.0
        %2383 = vmatpush1.msra.mxu0 0.0
        %2384 = vmatprep.subr.mxu0 0.0
        %2385 = vmatpush1.msra.mxu0 0.0
        %2386 = vmatprep.subr.mxu0 0.0
        %2387 = vmatpush1.msra.mxu0 0.0
        %2388 = vmatprep.subr.mxu0 0.0
        %2389 = vmatpush1.msra.mxu0 0.0
        %2390 = vmatprep.subr.mxu0 0.0
        %2391 = vmatpush1.msra.mxu0 0.0
        %2392 = vmatprep.subr.mxu0 0.0
        %2393 = vmatpush1.msra.mxu0 0.0
        %2394 = vmatprep.subr.mxu0 0.0
        %2395 = vmatpush1.msra.mxu0 0.0
        %2396 = vmatprep.subr.mxu0 0.0
        %2397 = vmatpush1.msra.mxu0 0.0
        %2398 = vmatprep.subr.mxu0 0.0
        %2399 = vmatpush1.msra.mxu0 0.0
        %2400 = vmatprep.subr.mxu0 0.0
        %2401 = vmatpush1.msra.mxu0 0.0
        %2402 = vmatprep.subr.mxu0 0.0
        %2403 = vmatpush1.msra.mxu0 0.0
        %2404 = vmatprep.subr.mxu0 0.0
        %2405 = vmatpush1.msra.mxu0 0.0
        %2406 = vmatprep.subr.mxu0 0.0
        %2407 = vmatpush1.msra.mxu0 0.0
        %2408 = vmatprep.subr.mxu0 0.0
        %2409 = vmatpush1.msra.mxu0 0.0
        %2410 = vmatprep.subr.mxu0 0.0
        %2411 = vmatpush1.msra.mxu0 0.0
        %2412 = vmatprep.mubr.f32.mxu0 0.0
        %2413 = vmatmul.mubr.f32.gmra.mrb[0].mxu0 %v2346
        %v2414 = vpop.f32.mrb[0].mxu0
        %v2415 = vadd.f32 0.0, %v2414
        %v2416 = vpop.f32.mrb[0].mxu0
        %2417 = vdwg.mxu0
        %s2418 = scalar_lea.vmem %s7, 24
        %v2419 = vld [vmem:[%s2418] sm:$0xff]
        %v2421 = vsel %vm799, %v2415, 0
        %2423 = vmatprep.subr.mxu0 0.0
        %2424 = vmatpush1.msra.mxu0 %v2419
        %2425 = vmatprep.subr.mxu0 0.0
        %2426 = vmatpush1.msra.mxu0 0.0
        %2427 = vmatprep.subr.mxu0 0.0
        %2428 = vmatpush1.msra.mxu0 0.0
        %2429 = vmatprep.subr.mxu0 0.0
        %2430 = vmatpush1.msra.mxu0 0.0
        %2431 = vmatprep.subr.mxu0 0.0
        %2432 = vmatpush1.msra.mxu0 0.0
        %2433 = vmatprep.subr.mxu0 0.0
        %2434 = vmatpush1.msra.mxu0 0.0
        %2435 = vmatprep.subr.mxu0 0.0
        %2436 = vmatpush1.msra.mxu0 0.0
        %2437 = vmatprep.subr.mxu0 0.0
        %2438 = vmatpush1.msra.mxu0 0.0
        %2439 = vmatprep.subr.mxu0 0.0
        %2440 = vmatpush1.msra.mxu0 0.0
        %2441 = vmatprep.subr.mxu0 0.0
        %2442 = vmatpush1.msra.mxu0 0.0
        %2443 = vmatprep.subr.mxu0 0.0
        %2444 = vmatpush1.msra.mxu0 0.0
        %2445 = vmatprep.subr.mxu0 0.0
        %2446 = vmatpush1.msra.mxu0 0.0
        %2447 = vmatprep.subr.mxu0 0.0
        %2448 = vmatpush1.msra.mxu0 0.0
        %2449 = vmatprep.subr.mxu0 0.0
        %2450 = vmatpush1.msra.mxu0 0.0
        %2451 = vmatprep.subr.mxu0 0.0
        %2452 = vmatpush1.msra.mxu0 0.0
        %2453 = vmatprep.subr.mxu0 0.0
        %2454 = vmatpush1.msra.mxu0 0.0
        %2455 = vmatprep.subr.mxu0 0.0
        %2456 = vmatpush1.msra.mxu0 0.0
        %2457 = vmatprep.subr.mxu0 0.0
        %2458 = vmatpush1.msra.mxu0 0.0
        %2459 = vmatprep.subr.mxu0 0.0
        %2460 = vmatpush1.msra.mxu0 0.0
        %2461 = vmatprep.subr.mxu0 0.0
        %2462 = vmatpush1.msra.mxu0 0.0
        %2463 = vmatprep.subr.mxu0 0.0
        %2464 = vmatpush1.msra.mxu0 0.0
        %2465 = vmatprep.subr.mxu0 0.0
        %2466 = vmatpush1.msra.mxu0 0.0
        %2467 = vmatprep.subr.mxu0 0.0
        %2468 = vmatpush1.msra.mxu0 0.0
        %2469 = vmatprep.subr.mxu0 0.0
        %2470 = vmatpush1.msra.mxu0 0.0
        %2471 = vmatprep.subr.mxu0 0.0
        %2472 = vmatpush1.msra.mxu0 0.0
        %2473 = vmatprep.subr.mxu0 0.0
        %2474 = vmatpush1.msra.mxu0 0.0
        %2475 = vmatprep.subr.mxu0 0.0
        %2476 = vmatpush1.msra.mxu0 0.0
        %2477 = vmatprep.subr.mxu0 0.0
        %2478 = vmatpush1.msra.mxu0 0.0
        %2479 = vmatprep.subr.mxu0 0.0
        %2480 = vmatpush1.msra.mxu0 0.0
        %2481 = vmatprep.subr.mxu0 0.0
        %2482 = vmatpush1.msra.mxu0 0.0
        %2483 = vmatprep.subr.mxu0 0.0
        %2484 = vmatpush1.msra.mxu0 0.0
        %2485 = vmatprep.subr.mxu0 0.0
        %2486 = vmatpush1.msra.mxu0 0.0
        %2487 = vmatprep.mubr.f32.mxu0 0.0
        %2488 = vmatmul.mubr.f32.gmra.mrb[0].mxu0 %v2421
        %v2489 = vpop.f32.mrb[0].mxu0
        %v2490 = vadd.f32 0.0, %v2489
        %v2491 = vpop.f32.mrb[0].mxu0
        %2492 = vdwg.mxu0
        %v2493 = vadd.f32 %v2007, %v2490
        %v2494 = vadd.f32 %v544, %v2493
        %v2495 = vld [vmem:[%s9] sm:$0x1]
        %v2496 = vld [vmem:[%s10] sm:$0x1]
        %v2497 = vsel %vm563, %v2494, 0.0
        %2498 = vadd.xlane.f32.xlu0 %v2497
        %v2499 = vpop.xlane.xlu0 %2498
        %v2500 = vrcp.pop 32.0
        %v2501 = vmul.f32 %v2499, %v2500
        %v2502 = vsub.f32 %v2494, %v2501
        %v2503 = vmul.f32 %v2502, %v2502
        %v2504 = vsel %vm563, %v2503, 0.0
        %2505 = vadd.xlane.f32.xlu0 %v2504
        %v2506 = vpop.xlane.xlu0 %2505
        %v2507 = vmul.f32 %v2506, %v2500
        %v2508 = vadd.f32 %v2507, 1e-05
        %v2509 = vrsqrt.pop %v2508
        %v2510 = vmul.f32 %v2502, %v2509
        %v2512 = vlaneseq
        %v2513 = vshrl.u32 %v2512, 7
        %v2514 = vsub.s32 0, %v2513
        %v2515 = vrot.slane %v2495, %v2514
        %v2517 = vmul.f32 %v2510, %v2515
        %v2519 = vlaneseq
        %v2520 = vshrl.u32 %v2519, 7
        %v2521 = vsub.s32 0, %v2520
        %v2522 = vrot.slane %v2496, %v2521
        %v2524 = vadd.f32 %v2517, %v2522
        %v2525 = vld [vmem:[%s11] sm:$0xff]
        %v2526 = vld [vmem:[%s11 + $0x8] sm:$0xff]
        %v2527 = vld [vmem:[%s11 + $0x10] sm:$0xff]
        %v2528 = vld [vmem:[%s11 + $0x18] sm:$0xff]
        %v2529 = vld [vmem:[%s12] sm:$0x1]
        %v2531 = vlaneseq
        %v2532 = vshrl.u32 %v2531, 7
        %v2533 = vsub.s32 0, %v2532
        %v2534 = vrot.slane %v2529, %v2533
        %v2537 = vsel %vm563, %v2524, 0
        %2539 = vmatprep.subr.mxu0 0.0
        %2540 = vmatpush1.msra.mxu0 %v2525
        %2541 = vmatprep.subr.mxu0 0.0
        %2542 = vmatpush1.msra.mxu0 %v2526
        %2543 = vmatprep.subr.mxu0 0.0
        %2544 = vmatpush1.msra.mxu0 %v2527
        %2545 = vmatprep.subr.mxu0 0.0
        %2546 = vmatpush1.msra.mxu0 %v2528
        %2547 = vmatprep.subr.mxu0 0.0
        %2548 = vmatpush1.msra.mxu0 0.0
        %2549 = vmatprep.subr.mxu0 0.0
        %2550 = vmatpush1.msra.mxu0 0.0
        %2551 = vmatprep.subr.mxu0 0.0
        %2552 = vmatpush1.msra.mxu0 0.0
        %2553 = vmatprep.subr.mxu0 0.0
        %2554 = vmatpush1.msra.mxu0 0.0
        %2555 = vmatprep.subr.mxu0 0.0
        %2556 = vmatpush1.msra.mxu0 0.0
        %2557 = vmatprep.subr.mxu0 0.0
        %2558 = vmatpush1.msra.mxu0 0.0
        %2559 = vmatprep.subr.mxu0 0.0
        %2560 = vmatpush1.msra.mxu0 0.0
        %2561 = vmatprep.subr.mxu0 0.0
        %2562 = vmatpush1.msra.mxu0 0.0
        %2563 = vmatprep.subr.mxu0 0.0
        %2564 = vmatpush1.msra.mxu0 0.0
        %2565 = vmatprep.subr.mxu0 0.0
        %2566 = vmatpush1.msra.mxu0 0.0
        %2567 = vmatprep.subr.mxu0 0.0
        %2568 = vmatpush1.msra.mxu0 0.0
        %2569 = vmatprep.subr.mxu0 0.0
        %2570 = vmatpush1.msra.mxu0 0.0
        %2571 = vmatprep.subr.mxu0 0.0
        %2572 = vmatpush1.msra.mxu0 0.0
        %2573 = vmatprep.subr.mxu0 0.0
        %2574 = vmatpush1.msra.mxu0 0.0
        %2575 = vmatprep.subr.mxu0 0.0
        %2576 = vmatpush1.msra.mxu0 0.0
        %2577 = vmatprep.subr.mxu0 0.0
        %2578 = vmatpush1.msra.mxu0 0.0
        %2579 = vmatprep.subr.mxu0 0.0
        %2580 = vmatpush1.msra.mxu0 0.0
        %2581 = vmatprep.subr.mxu0 0.0
        %2582 = vmatpush1.msra.mxu0 0.0
        %2583 = vmatprep.subr.mxu0 0.0
        %2584 = vmatpush1.msra.mxu0 0.0
        %2585 = vmatprep.subr.mxu0 0.0
        %2586 = vmatpush1.msra.mxu0 0.0
        %2587 = vmatprep.subr.mxu0 0.0
        %2588 = vmatpush1.msra.mxu0 0.0
        %2589 = vmatprep.subr.mxu0 0.0
        %2590 = vmatpush1.msra.mxu0 0.0
        %2591 = vmatprep.subr.mxu0 0.0
        %2592 = vmatpush1.msra.mxu0 0.0
        %2593 = vmatprep.subr.mxu0 0.0
        %2594 = vmatpush1.msra.mxu0 0.0
        %2595 = vmatprep.subr.mxu0 0.0
        %2596 = vmatpush1.msra.mxu0 0.0
        %2597 = vmatprep.subr.mxu0 0.0
        %2598 = vmatpush1.msra.mxu0 0.0
        %2599 = vmatprep.subr.mxu0 0.0
        %2600 = vmatpush1.msra.mxu0 0.0
        %2601 = vmatprep.subr.mxu0 0.0
        %2602 = vmatpush1.msra.mxu0 0.0
        %2603 = vmatprep.mubr.f32.mxu0 0.0
        %2604 = vmatmul.mubr.f32.gmra.mrb[0].mxu0 %v2537
        %v2605 = vpop.f32.mrb[0].mxu0
        %v2606 = vadd.f32 %v2534, %v2605
        %v2607 = vpop.f32.mrb[0].mxu0
        %2608 = vdwg.mxu0
        %v2609 = vmax.f32 %v2606, 0.0
        %v2610 = vld [vmem:[%s13] sm:$0xff]
        %v2611 = vld [vmem:[%s13 + $0x8] sm:$0xff]
        %v2612 = vld [vmem:[%s13 + $0x10] sm:$0xff]
        %v2613 = vld [vmem:[%s13 + $0x18] sm:$0xff]
        %v2614 = vld [vmem:[%s13 + $0x20] sm:$0xff]
        %v2615 = vld [vmem:[%s13 + $0x28] sm:$0xff]
        %v2616 = vld [vmem:[%s13 + $0x30] sm:$0xff]
        %v2617 = vld [vmem:[%s13 + $0x38] sm:$0xff]
        %v2618 = vld [vmem:[%s14] sm:$0x1]
        %v2620 = vlaneseq
        %v2621 = vshrl.u32 %v2620, 7
        %v2622 = vsub.s32 0, %v2621
        %v2623 = vrot.slane %v2618, %v2622
        %vm2625 = vcmask 523264
        %v2627 = vsel %vm2625, %v2609, 0
        %2629 = vmatprep.subr.mxu0 0.0
        %2630 = vmatpush1.msra.mxu0 %v2610
        %2631 = vmatprep.subr.mxu0 0.0
        %2632 = vmatpush1.msra.mxu0 %v2611
        %2633 = vmatprep.subr.mxu0 0.0
        %2634 = vmatpush1.msra.mxu0 %v2612
        %2635 = vmatprep.subr.mxu0 0.0
        %2636 = vmatpush1.msra.mxu0 %v2613
        %2637 = vmatprep.subr.mxu0 0.0
        %2638 = vmatpush1.msra.mxu0 %v2614
        %2639 = vmatprep.subr.mxu0 0.0
        %2640 = vmatpush1.msra.mxu0 %v2615
        %2641 = vmatprep.subr.mxu0 0.0
        %2642 = vmatpush1.msra.mxu0 %v2616
        %2643 = vmatprep.subr.mxu0 0.0
        %2644 = vmatpush1.msra.mxu0 %v2617
        %2645 = vmatprep.subr.mxu0 0.0
        %2646 = vmatpush1.msra.mxu0 0.0
        %2647 = vmatprep.subr.mxu0 0.0
        %2648 = vmatpush1.msra.mxu0 0.0
        %2649 = vmatprep.subr.mxu0 0.0
        %2650 = vmatpush1.msra.mxu0 0.0
        %2651 = vmatprep.subr.mxu0 0.0
        %2652 = vmatpush1.msra.mxu0 0.0
        %2653 = vmatprep.subr.mxu0 0.0
        %2654 = vmatpush1.msra.mxu0 0.0
        %2655 = vmatprep.subr.mxu0 0.0
        %2656 = vmatpush1.msra.mxu0 0.0
        %2657 = vmatprep.subr.mxu0 0.0
        %2658 = vmatpush1.msra.mxu0 0.0
        %2659 = vmatprep.subr.mxu0 0.0
        %2660 = vmatpush1.msra.mxu0 0.0
        %2661 = vmatprep.subr.mxu0 0.0
        %2662 = vmatpush1.msra.mxu0 0.0
        %2663 = vmatprep.subr.mxu0 0.0
        %2664 = vmatpush1.msra.mxu0 0.0
        %2665 = vmatprep.subr.mxu0 0.0
        %2666 = vmatpush1.msra.mxu0 0.0
        %2667 = vmatprep.subr.mxu0 0.0
        %2668 = vmatpush1.msra.mxu0 0.0
        %2669 = vmatprep.subr.mxu0 0.0
        %2670 = vmatpush1.msra.mxu0 0.0
        %2671 = vmatprep.subr.mxu0 0.0
        %2672 = vmatpush1.msra.mxu0 0.0
        %2673 = vmatprep.subr.mxu0 0.0
        %2674 = vmatpush1.msra.mxu0 0.0
        %2675 = vmatprep.subr.mxu0 0.0
        %2676 = vmatpush1.msra.mxu0 0.0
        %2677 = vmatprep.subr.mxu0 0.0
        %2678 = vmatpush1.msra.mxu0 0.0
        %2679 = vmatprep.subr.mxu0 0.0
        %2680 = vmatpush1.msra.mxu0 0.0
        %2681 = vmatprep.subr.mxu0 0.0
        %2682 = vmatpush1.msra.mxu0 0.0
        %2683 = vmatprep.subr.mxu0 0.0
        %2684 = vmatpush1.msra.mxu0 0.0
        %2685 = vmatprep.subr.mxu0 0.0
        %2686 = vmatpush1.msra.mxu0 0.0
        %2687 = vmatprep.subr.mxu0 0.0
        %2688 = vmatpush1.msra.mxu0 0.0
        %2689 = vmatprep.subr.mxu0 0.0
        %2690 = vmatpush1.msra.mxu0 0.0
        %2691 = vmatprep.subr.mxu0 0.0
        %2692 = vmatpush1.msra.mxu0 0.0
        %2693 = vmatprep.mubr.f32.mxu0 0.0
        %2694 = vmatmul.mubr.f32.gmra.mrb[0].mxu0 %v2627
        %v2695 = vpop.f32.mrb[0].mxu0
        %v2696 = vadd.f32 %v2623, %v2695
        %v2697 = vpop.f32.mrb[0].mxu0
        %2698 = vdwg.mxu0
        %v2699 = vadd.f32 %v2524, %v2696
        %v2700 = vld [vmem:[%s15] sm:$0x1]
        %v2701 = vld [vmem:[%s16] sm:$0x1]
        %v2702 = vsel %vm563, %v2699, 0.0
        %2703 = vadd.xlane.f32.xlu0 %v2702
        %v2704 = vpop.xlane.xlu0 %2703
        %v2705 = vmul.f32 %v2704, %v2500
        %v2706 = vsub.f32 %v2699, %v2705
        %v2707 = vmul.f32 %v2706, %v2706
        %v2708 = vsel %vm563, %v2707, 0.0
        %2709 = vadd.xlane.f32.xlu0 %v2708
        %v2710 = vpop.xlane.xlu0 %2709
        %v2711 = vmul.f32 %v2710, %v2500
        %v2712 = vadd.f32 %v2711, 1e-05
        %v2713 = vrsqrt.pop %v2712
        %v2714 = vmul.f32 %v2706, %v2713
        %v2716 = vlaneseq
        %v2717 = vshrl.u32 %v2716, 7
        %v2718 = vsub.s32 0, %v2717
        %v2719 = vrot.slane %v2700, %v2718
        %v2721 = vmul.f32 %v2714, %v2719
        %v2723 = vlaneseq
        %v2724 = vshrl.u32 %v2723, 7
        %v2725 = vsub.s32 0, %v2724
        %v2726 = vrot.slane %v2701, %v2725
        %v2728 = vadd.f32 %v2721, %v2726
        %s2729 = scalar_lea.vmem %s8, 1
        %v2730 = vld [vmem:[%s2729] sm:$0x1]
        %v2732 = vlaneseq
        %v2733 = vshrl.u32 %v2732, 7
        %v2734 = vsub.s32 0, %v2733
        %v2735 = vrot.slane %v2730, %v2734
        %s2737 = scalar_lea.vmem %s1, 128
        %v2738 = vld [vmem:[%s2737] sm:$0xff]
        %v2739 = vld [vmem:[%s2737 + $0x8] sm:$0xff]
        %v2740 = vld [vmem:[%s2737 + $0x10] sm:$0xff]
        %v2741 = vld [vmem:[%s2737 + $0x18] sm:$0xff]
        %s2742 = scalar_lea.vmem %s2, 4
        %v2743 = vld [vmem:[%s2742] sm:$0x1]
        %v2745 = vlaneseq
        %v2746 = vshrl.u32 %v2745, 7
        %v2747 = vsub.s32 0, %v2746
        %v2748 = vrot.slane %v2743, %v2747
        %v2751 = vsel %vm563, %v2728, 0
        %2753 = vmatprep.subr.mxu0 0.0
        %2754 = vmatpush1.msra.mxu0 %v2738
        %2755 = vmatprep.subr.mxu0 0.0
        %2756 = vmatpush1.msra.mxu0 %v2739
        %2757 = vmatprep.subr.mxu0 0.0
        %2758 = vmatpush1.msra.mxu0 %v2740
        %2759 = vmatprep.subr.mxu0 0.0
        %2760 = vmatpush1.msra.mxu0 %v2741
        %2761 = vmatprep.subr.mxu0 0.0
        %2762 = vmatpush1.msra.mxu0 0.0
        %2763 = vmatprep.subr.mxu0 0.0
        %2764 = vmatpush1.msra.mxu0 0.0
        %2765 = vmatprep.subr.mxu0 0.0
        %2766 = vmatpush1.msra.mxu0 0.0
        %2767 = vmatprep.subr.mxu0 0.0
        %2768 = vmatpush1.msra.mxu0 0.0
        %2769 = vmatprep.subr.mxu0 0.0
        %2770 = vmatpush1.msra.mxu0 0.0
        %2771 = vmatprep.subr.mxu0 0.0
        %2772 = vmatpush1.msra.mxu0 0.0
        %2773 = vmatprep.subr.mxu0 0.0
        %2774 = vmatpush1.msra.mxu0 0.0
        %2775 = vmatprep.subr.mxu0 0.0
        %2776 = vmatpush1.msra.mxu0 0.0
        %2777 = vmatprep.subr.mxu0 0.0
        %2778 = vmatpush1.msra.mxu0 0.0
        %2779 = vmatprep.subr.mxu0 0.0
        %2780 = vmatpush1.msra.mxu0 0.0
        %2781 = vmatprep.subr.mxu0 0.0
        %2782 = vmatpush1.msra.mxu0 0.0
        %2783 = vmatprep.subr.mxu0 0.0
        %2784 = vmatpush1.msra.mxu0 0.0
        %2785 = vmatprep.subr.mxu0 0.0
        %2786 = vmatpush1.msra.mxu0 0.0
        %2787 = vmatprep.subr.mxu0 0.0
        %2788 = vmatpush1.msra.mxu0 0.0
        %2789 = vmatprep.subr.mxu0 0.0
        %2790 = vmatpush1.msra.mxu0 0.0
        %2791 = vmatprep.subr.mxu0 0.0
        %2792 = vmatpush1.msra.mxu0 0.0
        %2793 = vmatprep.subr.mxu0 0.0
        %2794 = vmatpush1.msra.mxu0 0.0
        %2795 = vmatprep.subr.mxu0 0.0
        %2796 = vmatpush1.msra.mxu0 0.0
        %2797 = vmatprep.subr.mxu0 0.0
        %2798 = vmatpush1.msra.mxu0 0.0
        %2799 = vmatprep.subr.mxu0 0.0
        %2800 = vmatpush1.msra.mxu0 0.0
        %2801 = vmatprep.subr.mxu0 0.0
        %2802 = vmatpush1.msra.mxu0 0.0
        %2803 = vmatprep.subr.mxu0 0.0
        %2804 = vmatpush1.msra.mxu0 0.0
        %2805 = vmatprep.subr.mxu0 0.0
        %2806 = vmatpush1.msra.mxu0 0.0
        %2807 = vmatprep.subr.mxu0 0.0
        %2808 = vmatpush1.msra.mxu0 0.0
        %2809 = vmatprep.subr.mxu0 0.0
        %2810 = vmatpush1.msra.mxu0 0.0
        %2811 = vmatprep.subr.mxu0 0.0
        %2812 = vmatpush1.msra.mxu0 0.0
        %2813 = vmatprep.subr.mxu0 0.0
        %2814 = vmatpush1.msra.mxu0 0.0
        %2815 = vmatprep.subr.mxu0 0.0
        %2816 = vmatpush1.msra.mxu0 0.0
        %2817 = vmatprep.mubr.f32.mxu0 0.0
        %2818 = vmatmul.mubr.f32.gmra.mrb[0].mxu0 %v2751
        %v2819 = vpop.f32.mrb[0].mxu0
        %v2820 = vadd.f32 %v2748, %v2819
        %v2821 = vpop.f32.mrb[0].mxu0
        %2822 = vdwg.mxu0
        %s2823 = scalar_lea.vmem %s3, 128
        %v2824 = vld [vmem:[%s2823] sm:$0xff]
        %v2825 = vld [vmem:[%s2823 + $0x8] sm:$0xff]
        %v2826 = vld [vmem:[%s2823 + $0x10] sm:$0xff]
        %v2827 = vld [vmem:[%s2823 + $0x18] sm:$0xff]
        %s2828 = scalar_lea.vmem %s4, 4
        %v2829 = vld [vmem:[%s2828] sm:$0x1]
        %v2831 = vlaneseq
        %v2832 = vshrl.u32 %v2831, 7
        %v2833 = vsub.s32 0, %v2832
        %v2834 = vrot.slane %v2829, %v2833
        %2836 = vmatprep.subr.mxu0 0.0
        %2837 = vmatpush1.msra.mxu0 %v2824
        %2838 = vmatprep.subr.mxu0 0.0
        %2839 = vmatpush1.msra.mxu0 %v2825
        %2840 = vmatprep.subr.mxu0 0.0
        %2841 = vmatpush1.msra.mxu0 %v2826
        %2842 = vmatprep.subr.mxu0 0.0
        %2843 = vmatpush1.msra.mxu0 %v2827
        %2844 = vmatprep.subr.mxu0 0.0
        %2845 = vmatpush1.msra.mxu0 0.0
        %2846 = vmatprep.subr.mxu0 0.0
        %2847 = vmatpush1.msra.mxu0 0.0
        %2848 = vmatprep.subr.mxu0 0.0
        %2849 = vmatpush1.msra.mxu0 0.0
        %2850 = vmatprep.subr.mxu0 0.0
        %2851 = vmatpush1.msra.mxu0 0.0
        %2852 = vmatprep.subr.mxu0 0.0
        %2853 = vmatpush1.msra.mxu0 0.0
        %2854 = vmatprep.subr.mxu0 0.0
        %2855 = vmatpush1.msra.mxu0 0.0
        %2856 = vmatprep.subr.mxu0 0.0
        %2857 = vmatpush1.msra.mxu0 0.0
        %2858 = vmatprep.subr.mxu0 0.0
        %2859 = vmatpush1.msra.mxu0 0.0
        %2860 = vmatprep.subr.mxu0 0.0
        %2861 = vmatpush1.msra.mxu0 0.0
        %2862 = vmatprep.subr.mxu0 0.0
        %2863 = vmatpush1.msra.mxu0 0.0
        %2864 = vmatprep.subr.mxu0 0.0
        %2865 = vmatpush1.msra.mxu0 0.0
        %2866 = vmatprep.subr.mxu0 0.0
        %2867 = vmatpush1.msra.mxu0 0.0
        %2868 = vmatprep.subr.mxu0 0.0
        %2869 = vmatpush1.msra.mxu0 0.0
        %2870 = vmatprep.subr.mxu0 0.0
        %2871 = vmatpush1.msra.mxu0 0.0
        %2872 = vmatprep.subr.mxu0 0.0
        %2873 = vmatpush1.msra.mxu0 0.0
        %2874 = vmatprep.subr.mxu0 0.0
        %2875 = vmatpush1.msra.mxu0 0.0
        %2876 = vmatprep.subr.mxu0 0.0
        %2877 = vmatpush1.msra.mxu0 0.0
        %2878 = vmatprep.subr.mxu0 0.0
        %2879 = vmatpush1.msra.mxu0 0.0
        %2880 = vmatprep.subr.mxu0 0.0
        %2881 = vmatpush1.msra.mxu0 0.0
        %2882 = vmatprep.subr.mxu0 0.0
        %2883 = vmatpush1.msra.mxu0 0.0
        %2884 = vmatprep.subr.mxu0 0.0
        %2885 = vmatpush1.msra.mxu0 0.0
        %2886 = vmatprep.subr.mxu0 0.0
        %2887 = vmatpush1.msra.mxu0 0.0
        %2888 = vmatprep.subr.mxu0 0.0
        %2889 = vmatpush1.msra.mxu0 0.0
        %2890 = vmatprep.subr.mxu0 0.0
        %2891 = vmatpush1.msra.mxu0 0.0
        %2892 = vmatprep.subr.mxu0 0.0
        %2893 = vmatpush1.msra.mxu0 0.0
        %2894 = vmatprep.subr.mxu0 0.0
        %2895 = vmatpush1.msra.mxu0 0.0
        %2896 = vmatprep.subr.mxu0 0.0
        %2897 = vmatpush1.msra.mxu0 0.0
        %2898 = vmatprep.subr.mxu0 0.0
        %2899 = vmatpush1.msra.mxu0 0.0
        %2900 = vmatprep.mubr.f32.mxu0 0.0
        %2901 = vmatmul.mubr.f32.gmra.mrb[0].mxu0 %v2751
        %v2902 = vpop.f32.mrb[0].mxu0
        %v2903 = vadd.f32 %v2834, %v2902
        %v2904 = vpop.f32.mrb[0].mxu0
        %2905 = vdwg.mxu0
        %s2906 = scalar_lea.vmem %s5, 128
        %v2907 = vld [vmem:[%s2906] sm:$0xff]
        %v2908 = vld [vmem:[%s2906 + $0x8] sm:$0xff]
        %v2909 = vld [vmem:[%s2906 + $0x10] sm:$0xff]
        %v2910 = vld [vmem:[%s2906 + $0x18] sm:$0xff]
        %s2911 = scalar_lea.vmem %s6, 4
        %v2912 = vld [vmem:[%s2911] sm:$0x1]
        %v2914 = vlaneseq
        %v2915 = vshrl.u32 %v2914, 7
        %v2916 = vsub.s32 0, %v2915
        %v2917 = vrot.slane %v2912, %v2916
        %2919 = vmatprep.subr.mxu0 0.0
        %2920 = vmatpush1.msra.mxu0 %v2907
        %2921 = vmatprep.subr.mxu0 0.0
        %2922 = vmatpush1.msra.mxu0 %v2908
        %2923 = vmatprep.subr.mxu0 0.0
        %2924 = vmatpush1.msra.mxu0 %v2909
        %2925 = vmatprep.subr.mxu0 0.0
        %2926 = vmatpush1.msra.mxu0 %v2910
        %2927 = vmatprep.subr.mxu0 0.0
        %2928 = vmatpush1.msra.mxu0 0.0
        %2929 = vmatprep.subr.mxu0 0.0
        %2930 = vmatpush1.msra.mxu0 0.0
        %2931 = vmatprep.subr.mxu0 0.0
        %2932 = vmatpush1.msra.mxu0 0.0
        %2933 = vmatprep.subr.mxu0 0.0
        %2934 = vmatpush1.msra.mxu0 0.0
        %2935 = vmatprep.subr.mxu0 0.0
        %2936 = vmatpush1.msra.mxu0 0.0
        %2937 = vmatprep.subr.mxu0 0.0
        %2938 = vmatpush1.msra.mxu0 0.0
        %2939 = vmatprep.subr.mxu0 0.0
        %2940 = vmatpush1.msra.mxu0 0.0
        %2941 = vmatprep.subr.mxu0 0.0
        %2942 = vmatpush1.msra.mxu0 0.0
        %2943 = vmatprep.subr.mxu0 0.0
        %2944 = vmatpush1.msra.mxu0 0.0
        %2945 = vmatprep.subr.mxu0 0.0
        %2946 = vmatpush1.msra.mxu0 0.0
        %2947 = vmatprep.subr.mxu0 0.0
        %2948 = vmatpush1.msra.mxu0 0.0
        %2949 = vmatprep.subr.mxu0 0.0
        %2950 = vmatpush1.msra.mxu0 0.0
        %2951 = vmatprep.subr.mxu0 0.0
        %2952 = vmatpush1.msra.mxu0 0.0
        %2953 = vmatprep.subr.mxu0 0.0
        %2954 = vmatpush1.msra.mxu0 0.0
        %2955 = vmatprep.subr.mxu0 0.0
        %2956 = vmatpush1.msra.mxu0 0.0
        %2957 = vmatprep.subr.mxu0 0.0
        %2958 = vmatpush1.msra.mxu0 0.0
        %2959 = vmatprep.subr.mxu0 0.0
        %2960 = vmatpush1.msra.mxu0 0.0
        %2961 = vmatprep.subr.mxu0 0.0
        %2962 = vmatpush1.msra.mxu0 0.0
        %2963 = vmatprep.subr.mxu0 0.0
        %2964 = vmatpush1.msra.mxu0 0.0
        %2965 = vmatprep.subr.mxu0 0.0
        %2966 = vmatpush1.msra.mxu0 0.0
        %2967 = vmatprep.subr.mxu0 0.0
        %2968 = vmatpush1.msra.mxu0 0.0
        %2969 = vmatprep.subr.mxu0 0.0
        %2970 = vmatpush1.msra.mxu0 0.0
        %2971 = vmatprep.subr.mxu0 0.0
        %2972 = vmatpush1.msra.mxu0 0.0
        %2973 = vmatprep.subr.mxu0 0.0
        %2974 = vmatpush1.msra.mxu0 0.0
        %2975 = vmatprep.subr.mxu0 0.0
        %2976 = vmatpush1.msra.mxu0 0.0
        %2977 = vmatprep.subr.mxu0 0.0
        %2978 = vmatpush1.msra.mxu0 0.0
        %2979 = vmatprep.subr.mxu0 0.0
        %2980 = vmatpush1.msra.mxu0 0.0
        %2981 = vmatprep.subr.mxu0 0.0
        %2982 = vmatpush1.msra.mxu0 0.0
        %2983 = vmatprep.mubr.f32.mxu0 0.0
        %2984 = vmatmul.mubr.f32.gmra.mrb[0].mxu0 %v2751
        %v2985 = vpop.f32.mrb[0].mxu0
        %v2986 = vadd.f32 %v2917, %v2985
        %v2987 = vpop.f32.mrb[0].mxu0
        %2988 = vdwg.mxu0
        %v2990 = vsel %vm799, %v2820, 0
        %v2993 = vsel %vm799, %v2903, 0
        %2995 = vmatprep.subr.mxu0 0.0
        %2996 = vmatpush1.xpose.msra.mxu0 %v2993
        %2997 = vmatprep.subr.mxu0 0.0
        %2998 = vmatpush1.xpose.msra.mxu0 0.0
        %2999 = vmatprep.subr.mxu0 0.0
        %3000 = vmatpush1.xpose.msra.mxu0 0.0
        %3001 = vmatprep.subr.mxu0 0.0
        %3002 = vmatpush1.xpose.msra.mxu0 0.0
        %3003 = vmatprep.subr.mxu0 0.0
        %3004 = vmatpush1.xpose.msra.mxu0 0.0
        %3005 = vmatprep.subr.mxu0 0.0
        %3006 = vmatpush1.xpose.msra.mxu0 0.0
        %3007 = vmatprep.subr.mxu0 0.0
        %3008 = vmatpush1.xpose.msra.mxu0 0.0
        %3009 = vmatprep.subr.mxu0 0.0
        %3010 = vmatpush1.xpose.msra.mxu0 0.0
        %3011 = vmatprep.subr.mxu0 0.0
        %3012 = vmatpush1.xpose.msra.mxu0 0.0
        %3013 = vmatprep.subr.mxu0 0.0
        %3014 = vmatpush1.xpose.msra.mxu0 0.0
        %3015 = vmatprep.subr.mxu0 0.0
        %3016 = vmatpush1.xpose.msra.mxu0 0.0
        %3017 = vmatprep.subr.mxu0 0.0
        %3018 = vmatpush1.xpose.msra.mxu0 0.0
        %3019 = vmatprep.subr.mxu0 0.0
        %3020 = vmatpush1.xpose.msra.mxu0 0.0
        %3021 = vmatprep.subr.mxu0 0.0
        %3022 = vmatpush1.xpose.msra.mxu0 0.0
        %3023 = vmatprep.subr.mxu0 0.0
        %3024 = vmatpush1.xpose.msra.mxu0 0.0
        %3025 = vmatprep.subr.mxu0 0.0
        %3026 = vmatpush1.xpose.msra.mxu0 0.0
        %3027 = vmatprep.subr.mxu0 0.0
        %3028 = vmatpush1.xpose.msra.mxu0 0.0
        %3029 = vmatprep.subr.mxu0 0.0
        %3030 = vmatpush1.xpose.msra.mxu0 0.0
        %3031 = vmatprep.subr.mxu0 0.0
        %3032 = vmatpush1.xpose.msra.mxu0 0.0
        %3033 = vmatprep.subr.mxu0 0.0
        %3034 = vmatpush1.xpose.msra.mxu0 0.0
        %3035 = vmatprep.subr.mxu0 0.0
        %3036 = vmatpush1.xpose.msra.mxu0 0.0
        %3037 = vmatprep.subr.mxu0 0.0
        %3038 = vmatpush1.xpose.msra.mxu0 0.0
        %3039 = vmatprep.subr.mxu0 0.0
        %3040 = vmatpush1.xpose.msra.mxu0 0.0
        %3041 = vmatprep.subr.mxu0 0.0
        %3042 = vmatpush1.xpose.msra.mxu0 0.0
        %3043 = vmatprep.subr.mxu0 0.0
        %3044 = vmatpush1.xpose.msra.mxu0 0.0
        %3045 = vmatprep.subr.mxu0 0.0
        %3046 = vmatpush1.xpose.msra.mxu0 0.0
        %3047 = vmatprep.subr.mxu0 0.0
        %3048 = vmatpush1.xpose.msra.mxu0 0.0
        %3049 = vmatprep.subr.mxu0 0.0
        %3050 = vmatpush1.xpose.msra.mxu0 0.0
        %3051 = vmatprep.subr.mxu0 0.0
        %3052 = vmatpush1.xpose.msra.mxu0 0.0
        %3053 = vmatprep.subr.mxu0 0.0
        %3054 = vmatpush1.xpose.msra.mxu0 0.0
        %3055 = vmatprep.subr.mxu0 0.0
        %3056 = vmatpush1.xpose.msra.mxu0 0.0
        %3057 = vmatprep.subr.mxu0 0.0
        %3058 = vmatpush1.xpose.msra.mxu0 0.0
        %3059 = vmatprep.mubr.f32.mxu0 0.0
        %3060 = vmatmul.mubr.f32.gmra.mrb[0].mxu0 %v2990
        %v3061 = vpop.f32.mrb[0].mxu0
        %v3062 = vadd.f32 0.0, %v3061
        %v3063 = vpop.f32.mrb[0].mxu0
        %3064 = vdwg.mxu0
        %v3065 = vsel %vm799, %v3062, -inf
        %3066 = vmax.xlane.f32.xlu0 %v3065
        %v3067 = vpop.xlane.xlu0 %3066
        %v3068 = vsub.f32 %v3062, %v3067
        %v3069 = vmul.f32 %v3068, 1.442695
        %v3070 = vpow.pop %v3069
        %v3071 = vsel %vm799, %v3070, 0.0
        %3072 = vadd.xlane.f32.xlu0 %v3071
        %v3073 = vpop.xlane.xlu0 %3072
        %v3074 = vrcp.pop %v3073
        %v3075 = vmul.f32 1.0, %v3074
        %v3076 = vmul.f32 %v3070, %v3075
        %v3078 = vsel %vm799, %v3076, 0
        %3080 = vmatprep.subr.mxu0 0.0
        %3081 = vmatpush1.msra.mxu0 %v2986
        %3082 = vmatprep.subr.mxu0 0.0
        %3083 = vmatpush1.msra.mxu0 0.0
        %3084 = vmatprep.subr.mxu0 0.0
        %3085 = vmatpush1.msra.mxu0 0.0
        %3086 = vmatprep.subr.mxu0 0.0
        %3087 = vmatpush1.msra.mxu0 0.0
        %3088 = vmatprep.subr.mxu0 0.0
        %3089 = vmatpush1.msra.mxu0 0.0
        %3090 = vmatprep.subr.mxu0 0.0
        %3091 = vmatpush1.msra.mxu0 0.0
        %3092 = vmatprep.subr.mxu0 0.0
        %3093 = vmatpush1.msra.mxu0 0.0
        %3094 = vmatprep.subr.mxu0 0.0
        %3095 = vmatpush1.msra.mxu0 0.0
        %3096 = vmatprep.subr.mxu0 0.0
        %3097 = vmatpush1.msra.mxu0 0.0
        %3098 = vmatprep.subr.mxu0 0.0
        %3099 = vmatpush1.msra.mxu0 0.0
        %3100 = vmatprep.subr.mxu0 0.0
        %3101 = vmatpush1.msra.mxu0 0.0
        %3102 = vmatprep.subr.mxu0 0.0
        %3103 = vmatpush1.msra.mxu0 0.0
        %3104 = vmatprep.subr.mxu0 0.0
        %3105 = vmatpush1.msra.mxu0 0.0
        %3106 = vmatprep.subr.mxu0 0.0
        %3107 = vmatpush1.msra.mxu0 0.0
        %3108 = vmatprep.subr.mxu0 0.0
        %3109 = vmatpush1.msra.mxu0 0.0
        %3110 = vmatprep.subr.mxu0 0.0
        %3111 = vmatpush1.msra.mxu0 0.0
        %3112 = vmatprep.subr.mxu0 0.0
        %3113 = vmatpush1.msra.mxu0 0.0
        %3114 = vmatprep.subr.mxu0 0.0
        %3115 = vmatpush1.msra.mxu0 0.0
        %3116 = vmatprep.subr.mxu0 0.0
        %3117 = vmatpush1.msra.mxu0 0.0
        %3118 = vmatprep.subr.mxu0 0.0
        %3119 = vmatpush1.msra.mxu0 0.0
        %3120 = vmatprep.subr.mxu0 0.0
        %3121 = vmatpush1.msra.mxu0 0.0
        %3122 = vmatprep.subr.mxu0 0.0
        %3123 = vmatpush1.msra.mxu0 0.0
        %3124 = vmatprep.subr.mxu0 0.0
        %3125 = vmatpush1.msra.mxu0 0.0
        %3126 = vmatprep.subr.mxu0 0.0
        %3127 = vmatpush1.msra.mxu0 0.0
        %3128 = vmatprep.subr.mxu0 0.0
        %3129 = vmatpush1.msra.mxu0 0.0
        %3130 = vmatprep.subr.mxu0 0.0
        %3131 = vmatpush1.msra.mxu0 0.0
        %3132 = vmatprep.subr.mxu0 0.0
        %3133 = vmatpush1.msra.mxu0 0.0
        %3134 = vmatprep.subr.mxu0 0.0
        %3135 = vmatpush1.msra.mxu0 0.0
        %3136 = vmatprep.subr.mxu0 0.0
        %3137 = vmatpush1.msra.mxu0 0.0
        %3138 = vmatprep.subr.mxu0 0.0
        %3139 = vmatpush1.msra.mxu0 0.0
        %3140 = vmatprep.subr.mxu0 0.0
        %3141 = vmatpush1.msra.mxu0 0.0
        %3142 = vmatprep.subr.mxu0 0.0
        %3143 = vmatpush1.msra.mxu0 0.0
        %3144 = vmatprep.mubr.f32.mxu0 0.0
        %3145 = vmatmul.mubr.f32.gmra.mrb[0].mxu0 %v3078
        %v3146 = vpop.f32.mrb[0].mxu0
        %v3147 = vadd.f32 0.0, %v3146
        %v3148 = vpop.f32.mrb[0].mxu0
        %3149 = vdwg.mxu0
        %s3150 = scalar_lea.vmem %s7, 32
        %v3151 = vld [vmem:[%s3150] sm:$0xff]
        %v3153 = vsel %vm799, %v3147, 0
        %3155 = vmatprep.subr.mxu0 0.0
        %3156 = vmatpush1.msra.mxu0 %v3151
        %3157 = vmatprep.subr.mxu0 0.0
        %3158 = vmatpush1.msra.mxu0 0.0
        %3159 = vmatprep.subr.mxu0 0.0
        %3160 = vmatpush1.msra.mxu0 0.0
        %3161 = vmatprep.subr.mxu0 0.0
        %3162 = vmatpush1.msra.mxu0 0.0
        %3163 = vmatprep.subr.mxu0 0.0
        %3164 = vmatpush1.msra.mxu0 0.0
        %3165 = vmatprep.subr.mxu0 0.0
        %3166 = vmatpush1.msra.mxu0 0.0
        %3167 = vmatprep.subr.mxu0 0.0
        %3168 = vmatpush1.msra.mxu0 0.0
        %3169 = vmatprep.subr.mxu0 0.0
        %3170 = vmatpush1.msra.mxu0 0.0
        %3171 = vmatprep.subr.mxu0 0.0
        %3172 = vmatpush1.msra.mxu0 0.0
        %3173 = vmatprep.subr.mxu0 0.0
        %3174 = vmatpush1.msra.mxu0 0.0
        %3175 = vmatprep.subr.mxu0 0.0
        %3176 = vmatpush1.msra.mxu0 0.0
        %3177 = vmatprep.subr.mxu0 0.0
        %3178 = vmatpush1.msra.mxu0 0.0
        %3179 = vmatprep.subr.mxu0 0.0
        %3180 = vmatpush1.msra.mxu0 0.0
        %3181 = vmatprep.subr.mxu0 0.0
        %3182 = vmatpush1.msra.mxu0 0.0
        %3183 = vmatprep.subr.mxu0 0.0
        %3184 = vmatpush1.msra.mxu0 0.0
        %3185 = vmatprep.subr.mxu0 0.0
        %3186 = vmatpush1.msra.mxu0 0.0
        %3187 = vmatprep.subr.mxu0 0.0
        %3188 = vmatpush1.msra.mxu0 0.0
        %3189 = vmatprep.subr.mxu0 0.0
        %3190 = vmatpush1.msra.mxu0 0.0
        %3191 = vmatprep.subr.mxu0 0.0
        %3192 = vmatpush1.msra.mxu0 0.0
        %3193 = vmatprep.subr.mxu0 0.0
        %3194 = vmatpush1.msra.mxu0 0.0
        %3195 = vmatprep.subr.mxu0 0.0
        %3196 = vmatpush1.msra.mxu0 0.0
        %3197 = vmatprep.subr.mxu0 0.0
        %3198 = vmatpush1.msra.mxu0 0.0
        %3199 = vmatprep.subr.mxu0 0.0
        %3200 = vmatpush1.msra.mxu0 0.0
        %3201 = vmatprep.subr.mxu0 0.0
        %3202 = vmatpush1.msra.mxu0 0.0
        %3203 = vmatprep.subr.mxu0 0.0
        %3204 = vmatpush1.msra.mxu0 0.0
        %3205 = vmatprep.subr.mxu0 0.0
        %3206 = vmatpush1.msra.mxu0 0.0
        %3207 = vmatprep.subr.mxu0 0.0
        %3208 = vmatpush1.msra.mxu0 0.0
        %3209 = vmatprep.subr.mxu0 0.0
        %3210 = vmatpush1.msra.mxu0 0.0
        %3211 = vmatprep.subr.mxu0 0.0
        %3212 = vmatpush1.msra.mxu0 0.0
        %3213 = vmatprep.subr.mxu0 0.0
        %3214 = vmatpush1.msra.mxu0 0.0
        %3215 = vmatprep.subr.mxu0 0.0
        %3216 = vmatpush1.msra.mxu0 0.0
        %3217 = vmatprep.subr.mxu0 0.0
        %3218 = vmatpush1.msra.mxu0 0.0
        %3219 = vmatprep.mubr.f32.mxu0 0.0
        %3220 = vmatmul.mubr.f32.gmra.mrb[0].mxu0 %v3153
        %v3221 = vpop.f32.mrb[0].mxu0
        %v3222 = vadd.f32 0.0, %v3221
        %v3223 = vpop.f32.mrb[0].mxu0
        %3224 = vdwg.mxu0
        %v3225 = vadd.f32 %v2735, %v3222
        %s3226 = scalar_lea.vmem %s1, 160
        %v3227 = vld [vmem:[%s3226] sm:$0xff]
        %v3228 = vld [vmem:[%s3226 + $0x8] sm:$0xff]
        %v3229 = vld [vmem:[%s3226 + $0x10] sm:$0xff]
        %v3230 = vld [vmem:[%s3226 + $0x18] sm:$0xff]
        %s3231 = scalar_lea.vmem %s2, 5
        %v3232 = vld [vmem:[%s3231] sm:$0x1]
        %v3234 = vlaneseq
        %v3235 = vshrl.u32 %v3234, 7
        %v3236 = vsub.s32 0, %v3235
        %v3237 = vrot.slane %v3232, %v3236
        %3239 = vmatprep.subr.mxu0 0.0
        %3240 = vmatpush1.msra.mxu0 %v3227
        %3241 = vmatprep.subr.mxu0 0.0
        %3242 = vmatpush1.msra.mxu0 %v3228
        %3243 = vmatprep.subr.mxu0 0.0
        %3244 = vmatpush1.msra.mxu0 %v3229
        %3245 = vmatprep.subr.mxu0 0.0
        %3246 = vmatpush1.msra.mxu0 %v3230
        %3247 = vmatprep.subr.mxu0 0.0
        %3248 = vmatpush1.msra.mxu0 0.0
        %3249 = vmatprep.subr.mxu0 0.0
        %3250 = vmatpush1.msra.mxu0 0.0
        %3251 = vmatprep.subr.mxu0 0.0
        %3252 = vmatpush1.msra.mxu0 0.0
        %3253 = vmatprep.subr.mxu0 0.0
        %3254 = vmatpush1.msra.mxu0 0.0
        %3255 = vmatprep.subr.mxu0 0.0
        %3256 = vmatpush1.msra.mxu0 0.0
        %3257 = vmatprep.subr.mxu0 0.0
        %3258 = vmatpush1.msra.mxu0 0.0
        %3259 = vmatprep.subr.mxu0 0.0
        %3260 = vmatpush1.msra.mxu0 0.0
        %3261 = vmatprep.subr.mxu0 0.0
        %3262 = vmatpush1.msra.mxu0 0.0
        %3263 = vmatprep.subr.mxu0 0.0
        %3264 = vmatpush1.msra.mxu0 0.0
        %3265 = vmatprep.subr.mxu0 0.0
        %3266 = vmatpush1.msra.mxu0 0.0
        %3267 = vmatprep.subr.mxu0 0.0
        %3268 = vmatpush1.msra.mxu0 0.0
        %3269 = vmatprep.subr.mxu0 0.0
        %3270 = vmatpush1.msra.mxu0 0.0
        %3271 = vmatprep.subr.mxu0 0.0
        %3272 = vmatpush1.msra.mxu0 0.0
        %3273 = vmatprep.subr.mxu0 0.0
        %3274 = vmatpush1.msra.mxu0 0.0
        %3275 = vmatprep.subr.mxu0 0.0
        %3276 = vmatpush1.msra.mxu0 0.0
        %3277 = vmatprep.subr.mxu0 0.0
        %3278 = vmatpush1.msra.mxu0 0.0
        %3279 = vmatprep.subr.mxu0 0.0
        %3280 = vmatpush1.msra.mxu0 0.0
        %3281 = vmatprep.subr.mxu0 0.0
        %3282 = vmatpush1.msra.mxu0 0.0
        %3283 = vmatprep.subr.mxu0 0.0
        %3284 = vmatpush1.msra.mxu0 0.0
        %3285 = vmatprep.subr.mxu0 0.0
        %3286 = vmatpush1.msra.mxu0 0.0
        %3287 = vmatprep.subr.mxu0 0.0
        %3288 = vmatpush1.msra.mxu0 0.0
        %3289 = vmatprep.subr.mxu0 0.0
        %3290 = vmatpush1.msra.mxu0 0.0
        %3291 = vmatprep.subr.mxu0 0.0
        %3292 = vmatpush1.msra.mxu0 0.0
        %3293 = vmatprep.subr.mxu0 0.0
        %3294 = vmatpush1.msra.mxu0 0.0
        %3295 = vmatprep.subr.mxu0 0.0
        %3296 = vmatpush1.msra.mxu0 0.0
        %3297 = vmatprep.subr.mxu0 0.0
        %3298 = vmatpush1.msra.mxu0 0.0
        %3299 = vmatprep.subr.mxu0 0.0
        %3300 = vmatpush1.msra.mxu0 0.0
        %3301 = vmatprep.subr.mxu0 0.0
        %3302 = vmatpush1.msra.mxu0 0.0
        %3303 = vmatprep.mubr.f32.mxu0 0.0
        %3304 = vmatmul.mubr.f32.gmra.mrb[0].mxu0 %v2751
        %v3305 = vpop.f32.mrb[0].mxu0
        %v3306 = vadd.f32 %v3237, %v3305
        %v3307 = vpop.f32.mrb[0].mxu0
        %3308 = vdwg.mxu0
        %s3309 = scalar_lea.vmem %s3, 160
        %v3310 = vld [vmem:[%s3309] sm:$0xff]
        %v3311 = vld [vmem:[%s3309 + $0x8] sm:$0xff]
        %v3312 = vld [vmem:[%s3309 + $0x10] sm:$0xff]
        %v3313 = vld [vmem:[%s3309 + $0x18] sm:$0xff]
        %s3314 = scalar_lea.vmem %s4, 5
        %v3315 = vld [vmem:[%s3314] sm:$0x1]
        %v3317 = vlaneseq
        %v3318 = vshrl.u32 %v3317, 7
        %v3319 = vsub.s32 0, %v3318
        %v3320 = vrot.slane %v3315, %v3319
        %3322 = vmatprep.subr.mxu0 0.0
        %3323 = vmatpush1.msra.mxu0 %v3310
        %3324 = vmatprep.subr.mxu0 0.0
        %3325 = vmatpush1.msra.mxu0 %v3311
        %3326 = vmatprep.subr.mxu0 0.0
        %3327 = vmatpush1.msra.mxu0 %v3312
        %3328 = vmatprep.subr.mxu0 0.0
        %3329 = vmatpush1.msra.mxu0 %v3313
        %3330 = vmatprep.subr.mxu0 0.0
        %3331 = vmatpush1.msra.mxu0 0.0
        %3332 = vmatprep.subr.mxu0 0.0
        %3333 = vmatpush1.msra.mxu0 0.0
        %3334 = vmatprep.subr.mxu0 0.0
        %3335 = vmatpush1.msra.mxu0 0.0
        %3336 = vmatprep.subr.mxu0 0.0
        %3337 = vmatpush1.msra.mxu0 0.0
        %3338 = vmatprep.subr.mxu0 0.0
        %3339 = vmatpush1.msra.mxu0 0.0
        %3340 = vmatprep.subr.mxu0 0.0
        %3341 = vmatpush1.msra.mxu0 0.0
        %3342 = vmatprep.subr.mxu0 0.0
        %3343 = vmatpush1.msra.mxu0 0.0
        %3344 = vmatprep.subr.mxu0 0.0
        %3345 = vmatpush1.msra.mxu0 0.0
        %3346 = vmatprep.subr.mxu0 0.0
        %3347 = vmatpush1.msra.mxu0 0.0
        %3348 = vmatprep.subr.mxu0 0.0
        %3349 = vmatpush1.msra.mxu0 0.0
        %3350 = vmatprep.subr.mxu0 0.0
        %3351 = vmatpush1.msra.mxu0 0.0
        %3352 = vmatprep.subr.mxu0 0.0
        %3353 = vmatpush1.msra.mxu0 0.0
        %3354 = vmatprep.subr.mxu0 0.0
        %3355 = vmatpush1.msra.mxu0 0.0
        %3356 = vmatprep.subr.mxu0 0.0
        %3357 = vmatpush1.msra.mxu0 0.0
        %3358 = vmatprep.subr.mxu0 0.0
        %3359 = vmatpush1.msra.mxu0 0.0
        %3360 = vmatprep.subr.mxu0 0.0
        %3361 = vmatpush1.msra.mxu0 0.0
        %3362 = vmatprep.subr.mxu0 0.0
        %3363 = vmatpush1.msra.mxu0 0.0
        %3364 = vmatprep.subr.mxu0 0.0
        %3365 = vmatpush1.msra.mxu0 0.0
        %3366 = vmatprep.subr.mxu0 0.0
        %3367 = vmatpush1.msra.mxu0 0.0
        %3368 = vmatprep.subr.mxu0 0.0
        %3369 = vmatpush1.msra.mxu0 0.0
        %3370 = vmatprep.subr.mxu0 0.0
        %3371 = vmatpush1.msra.mxu0 0.0
        %3372 = vmatprep.subr.mxu0 0.0
        %3373 = vmatpush1.msra.mxu0 0.0
        %3374 = vmatprep.subr.mxu0 0.0
        %3375 = vmatpush1.msra.mxu0 0.0
        %3376 = vmatprep.subr.mxu0 0.0
        %3377 = vmatpush1.msra.mxu0 0.0
        %3378 = vmatprep.subr.mxu0 0.0
        %3379 = vmatpush1.msra.mxu0 0.0
        %3380 = vmatprep.subr.mxu0 0.0
        %3381 = vmatpush1.msra.mxu0 0.0
        %3382 = vmatprep.subr.mxu0 0.0
        %3383 = vmatpush1.msra.mxu0 0.0
        %3384 = vmatprep.subr.mxu0 0.0
        %3385 = vmatpush1.msra.mxu0 0.0
        %3386 = vmatprep.mubr.f32.mxu0 0.0
        %3387 = vmatmul.mubr.f32.gmra.mrb[0].mxu0 %v2751
        %v3388 = vpop.f32.mrb[0].mxu0
        %v3389 = vadd.f32 %v3320, %v3388
        %v3390 = vpop.f32.mrb[0].mxu0
        %3391 = vdwg.mxu0
        %s3392 = scalar_lea.vmem %s5, 160
        %v3393 = vld [vmem:[%s3392] sm:$0xff]
        %v3394 = vld [vmem:[%s3392 + $0x8] sm:$0xff]
        %v3395 = vld [vmem:[%s3392 + $0x10] sm:$0xff]
        %v3396 = vld [vmem:[%s3392 + $0x18] sm:$0xff]
        %s3397 = scalar_lea.vmem %s6, 5
        %v3398 = vld [vmem:[%s3397] sm:$0x1]
        %v3400 = vlaneseq
        %v3401 = vshrl.u32 %v3400, 7
        %v3402 = vsub.s32 0, %v3401
        %v3403 = vrot.slane %v3398, %v3402
        %3405 = vmatprep.subr.mxu0 0.0
        %3406 = vmatpush1.msra.mxu0 %v3393
        %3407 = vmatprep.subr.mxu0 0.0
        %3408 = vmatpush1.msra.mxu0 %v3394
        %3409 = vmatprep.subr.mxu0 0.0
        %3410 = vmatpush1.msra.mxu0 %v3395
        %3411 = vmatprep.subr.mxu0 0.0
        %3412 = vmatpush1.msra.mxu0 %v3396
        %3413 = vmatprep.subr.mxu0 0.0
        %3414 = vmatpush1.msra.mxu0 0.0
        %3415 = vmatprep.subr.mxu0 0.0
        %3416 = vmatpush1.msra.mxu0 0.0
        %3417 = vmatprep.subr.mxu0 0.0
        %3418 = vmatpush1.msra.mxu0 0.0
        %3419 = vmatprep.subr.mxu0 0.0
        %3420 = vmatpush1.msra.mxu0 0.0
        %3421 = vmatprep.subr.mxu0 0.0
        %3422 = vmatpush1.msra.mxu0 0.0
        %3423 = vmatprep.subr.mxu0 0.0
        %3424 = vmatpush1.msra.mxu0 0.0
        %3425 = vmatprep.subr.mxu0 0.0
        %3426 = vmatpush1.msra.mxu0 0.0
        %3427 = vmatprep.subr.mxu0 0.0
        %3428 = vmatpush1.msra.mxu0 0.0
        %3429 = vmatprep.subr.mxu0 0.0
        %3430 = vmatpush1.msra.mxu0 0.0
        %3431 = vmatprep.subr.mxu0 0.0
        %3432 = vmatpush1.msra.mxu0 0.0
        %3433 = vmatprep.subr.mxu0 0.0
        %3434 = vmatpush1.msra.mxu0 0.0
        %3435 = vmatprep.subr.mxu0 0.0
        %3436 = vmatpush1.msra.mxu0 0.0
        %3437 = vmatprep.subr.mxu0 0.0
        %3438 = vmatpush1.msra.mxu0 0.0
        %3439 = vmatprep.subr.mxu0 0.0
        %3440 = vmatpush1.msra.mxu0 0.0
        %3441 = vmatprep.subr.mxu0 0.0
        %3442 = vmatpush1.msra.mxu0 0.0
        %3443 = vmatprep.subr.mxu0 0.0
        %3444 = vmatpush1.msra.mxu0 0.0
        %3445 = vmatprep.subr.mxu0 0.0
        %3446 = vmatpush1.msra.mxu0 0.0
        %3447 = vmatprep.subr.mxu0 0.0
        %3448 = vmatpush1.msra.mxu0 0.0
        %3449 = vmatprep.subr.mxu0 0.0
        %3450 = vmatpush1.msra.mxu0 0.0
        %3451 = vmatprep.subr.mxu0 0.0
        %3452 = vmatpush1.msra.mxu0 0.0
        %3453 = vmatprep.subr.mxu0 0.0
        %3454 = vmatpush1.msra.mxu0 0.0
        %3455 = vmatprep.subr.mxu0 0.0
        %3456 = vmatpush1.msra.mxu0 0.0
        %3457 = vmatprep.subr.mxu0 0.0
        %3458 = vmatpush1.msra.mxu0 0.0
        %3459 = vmatprep.subr.mxu0 0.0
        %3460 = vmatpush1.msra.mxu0 0.0
        %3461 = vmatprep.subr.mxu0 0.0
        %3462 = vmatpush1.msra.mxu0 0.0
        %3463 = vmatprep.subr.mxu0 0.0
        %3464 = vmatpush1.msra.mxu0 0.0
        %3465 = vmatprep.subr.mxu0 0.0
        %3466 = vmatpush1.msra.mxu0 0.0
        %3467 = vmatprep.subr.mxu0 0.0
        %3468 = vmatpush1.msra.mxu0 0.0
        %3469 = vmatprep.mubr.f32.mxu0 0.0
        %3470 = vmatmul.mubr.f32.gmra.mrb[0].mxu0 %v2751
        %v3471 = vpop.f32.mrb[0].mxu0
        %v3472 = vadd.f32 %v3403, %v3471
        %v3473 = vpop.f32.mrb[0].mxu0
        %3474 = vdwg.mxu0
        %v3476 = vsel %vm799, %v3306, 0
        %v3479 = vsel %vm799, %v3389, 0
        %3481 = vmatprep.subr.mxu0 0.0
        %3482 = vmatpush1.xpose.msra.mxu0 %v3479
        %3483 = vmatprep.subr.mxu0 0.0
        %3484 = vmatpush1.xpose.msra.mxu0 0.0
        %3485 = vmatprep.subr.mxu0 0.0
        %3486 = vmatpush1.xpose.msra.mxu0 0.0
        %3487 = vmatprep.subr.mxu0 0.0
        %3488 = vmatpush1.xpose.msra.mxu0 0.0
        %3489 = vmatprep.subr.mxu0 0.0
        %3490 = vmatpush1.xpose.msra.mxu0 0.0
        %3491 = vmatprep.subr.mxu0 0.0
        %3492 = vmatpush1.xpose.msra.mxu0 0.0
        %3493 = vmatprep.subr.mxu0 0.0
        %3494 = vmatpush1.xpose.msra.mxu0 0.0
        %3495 = vmatprep.subr.mxu0 0.0
        %3496 = vmatpush1.xpose.msra.mxu0 0.0
        %3497 = vmatprep.subr.mxu0 0.0
        %3498 = vmatpush1.xpose.msra.mxu0 0.0
        %3499 = vmatprep.subr.mxu0 0.0
        %3500 = vmatpush1.xpose.msra.mxu0 0.0
        %3501 = vmatprep.subr.mxu0 0.0
        %3502 = vmatpush1.xpose.msra.mxu0 0.0
        %3503 = vmatprep.subr.mxu0 0.0
        %3504 = vmatpush1.xpose.msra.mxu0 0.0
        %3505 = vmatprep.subr.mxu0 0.0
        %3506 = vmatpush1.xpose.msra.mxu0 0.0
        %3507 = vmatprep.subr.mxu0 0.0
        %3508 = vmatpush1.xpose.msra.mxu0 0.0
        %3509 = vmatprep.subr.mxu0 0.0
        %3510 = vmatpush1.xpose.msra.mxu0 0.0
        %3511 = vmatprep.subr.mxu0 0.0
        %3512 = vmatpush1.xpose.msra.mxu0 0.0
        %3513 = vmatprep.subr.mxu0 0.0
        %3514 = vmatpush1.xpose.msra.mxu0 0.0
        %3515 = vmatprep.subr.mxu0 0.0
        %3516 = vmatpush1.xpose.msra.mxu0 0.0
        %3517 = vmatprep.subr.mxu0 0.0
        %3518 = vmatpush1.xpose.msra.mxu0 0.0
        %3519 = vmatprep.subr.mxu0 0.0
        %3520 = vmatpush1.xpose.msra.mxu0 0.0
        %3521 = vmatprep.subr.mxu0 0.0
        %3522 = vmatpush1.xpose.msra.mxu0 0.0
        %3523 = vmatprep.subr.mxu0 0.0
        %3524 = vmatpush1.xpose.msra.mxu0 0.0
        %3525 = vmatprep.subr.mxu0 0.0
        %3526 = vmatpush1.xpose.msra.mxu0 0.0
        %3527 = vmatprep.subr.mxu0 0.0
        %3528 = vmatpush1.xpose.msra.mxu0 0.0
        %3529 = vmatprep.subr.mxu0 0.0
        %3530 = vmatpush1.xpose.msra.mxu0 0.0
        %3531 = vmatprep.subr.mxu0 0.0
        %3532 = vmatpush1.xpose.msra.mxu0 0.0
        %3533 = vmatprep.subr.mxu0 0.0
        %3534 = vmatpush1.xpose.msra.mxu0 0.0
        %3535 = vmatprep.subr.mxu0 0.0
        %3536 = vmatpush1.xpose.msra.mxu0 0.0
        %3537 = vmatprep.subr.mxu0 0.0
        %3538 = vmatpush1.xpose.msra.mxu0 0.0
        %3539 = vmatprep.subr.mxu0 0.0
        %3540 = vmatpush1.xpose.msra.mxu0 0.0
        %3541 = vmatprep.subr.mxu0 0.0
        %3542 = vmatpush1.xpose.msra.mxu0 0.0
        %3543 = vmatprep.subr.mxu0 0.0
        %3544 = vmatpush1.xpose.msra.mxu0 0.0
        %3545 = vmatprep.mubr.f32.mxu0 0.0
        %3546 = vmatmul.mubr.f32.gmra.mrb[0].mxu0 %v3476
        %v3547 = vpop.f32.mrb[0].mxu0
        %v3548 = vadd.f32 0.0, %v3547
        %v3549 = vpop.f32.mrb[0].mxu0
        %3550 = vdwg.mxu0
        %v3551 = vsel %vm799, %v3548, -inf
        %3552 = vmax.xlane.f32.xlu0 %v3551
        %v3553 = vpop.xlane.xlu0 %3552
        %v3554 = vsub.f32 %v3548, %v3553
        %v3555 = vmul.f32 %v3554, 1.442695
        %v3556 = vpow.pop %v3555
        %v3557 = vsel %vm799, %v3556, 0.0
        %3558 = vadd.xlane.f32.xlu0 %v3557
        %v3559 = vpop.xlane.xlu0 %3558
        %v3560 = vrcp.pop %v3559
        %v3561 = vmul.f32 1.0, %v3560
        %v3562 = vmul.f32 %v3556, %v3561
        %v3564 = vsel %vm799, %v3562, 0
        %3566 = vmatprep.subr.mxu0 0.0
        %3567 = vmatpush1.msra.mxu0 %v3472
        %3568 = vmatprep.subr.mxu0 0.0
        %3569 = vmatpush1.msra.mxu0 0.0
        %3570 = vmatprep.subr.mxu0 0.0
        %3571 = vmatpush1.msra.mxu0 0.0
        %3572 = vmatprep.subr.mxu0 0.0
        %3573 = vmatpush1.msra.mxu0 0.0
        %3574 = vmatprep.subr.mxu0 0.0
        %3575 = vmatpush1.msra.mxu0 0.0
        %3576 = vmatprep.subr.mxu0 0.0
        %3577 = vmatpush1.msra.mxu0 0.0
        %3578 = vmatprep.subr.mxu0 0.0
        %3579 = vmatpush1.msra.mxu0 0.0
        %3580 = vmatprep.subr.mxu0 0.0
        %3581 = vmatpush1.msra.mxu0 0.0
        %3582 = vmatprep.subr.mxu0 0.0
        %3583 = vmatpush1.msra.mxu0 0.0
        %3584 = vmatprep.subr.mxu0 0.0
        %3585 = vmatpush1.msra.mxu0 0.0
        %3586 = vmatprep.subr.mxu0 0.0
        %3587 = vmatpush1.msra.mxu0 0.0
        %3588 = vmatprep.subr.mxu0 0.0
        %3589 = vmatpush1.msra.mxu0 0.0
        %3590 = vmatprep.subr.mxu0 0.0
        %3591 = vmatpush1.msra.mxu0 0.0
        %3592 = vmatprep.subr.mxu0 0.0
        %3593 = vmatpush1.msra.mxu0 0.0
        %3594 = vmatprep.subr.mxu0 0.0
        %3595 = vmatpush1.msra.mxu0 0.0
        %3596 = vmatprep.subr.mxu0 0.0
        %3597 = vmatpush1.msra.mxu0 0.0
        %3598 = vmatprep.subr.mxu0 0.0
        %3599 = vmatpush1.msra.mxu0 0.0
        %3600 = vmatprep.subr.mxu0 0.0
        %3601 = vmatpush1.msra.mxu0 0.0
        %3602 = vmatprep.subr.mxu0 0.0
        %3603 = vmatpush1.msra.mxu0 0.0
        %3604 = vmatprep.subr.mxu0 0.0
        %3605 = vmatpush1.msra.mxu0 0.0
        %3606 = vmatprep.subr.mxu0 0.0
        %3607 = vmatpush1.msra.mxu0 0.0
        %3608 = vmatprep.subr.mxu0 0.0
        %3609 = vmatpush1.msra.mxu0 0.0
        %3610 = vmatprep.subr.mxu0 0.0
        %3611 = vmatpush1.msra.mxu0 0.0
        %3612 = vmatprep.subr.mxu0 0.0
        %3613 = vmatpush1.msra.mxu0 0.0
        %3614 = vmatprep.subr.mxu0 0.0
        %3615 = vmatpush1.msra.mxu0 0.0
        %3616 = vmatprep.subr.mxu0 0.0
        %3617 = vmatpush1.msra.mxu0 0.0
        %3618 = vmatprep.subr.mxu0 0.0
        %3619 = vmatpush1.msra.mxu0 0.0
        %3620 = vmatprep.subr.mxu0 0.0
        %3621 = vmatpush1.msra.mxu0 0.0
        %3622 = vmatprep.subr.mxu0 0.0
        %3623 = vmatpush1.msra.mxu0 0.0
        %3624 = vmatprep.subr.mxu0 0.0
        %3625 = vmatpush1.msra.mxu0 0.0
        %3626 = vmatprep.subr.mxu0 0.0
        %3627 = vmatpush1.msra.mxu0 0.0
        %3628 = vmatprep.subr.mxu0 0.0
        %3629 = vmatpush1.msra.mxu0 0.0
        %3630 = vmatprep.mubr.f32.mxu0 0.0
        %3631 = vmatmul.mubr.f32.gmra.mrb[0].mxu0 %v3564
        %v3632 = vpop.f32.mrb[0].mxu0
        %v3633 = vadd.f32 0.0, %v3632
        %v3634 = vpop.f32.mrb[0].mxu0
        %3635 = vdwg.mxu0
        %s3636 = scalar_lea.vmem %s7, 40
        %v3637 = vld [vmem:[%s3636] sm:$0xff]
        %v3639 = vsel %vm799, %v3633, 0
        %3641 = vmatprep.subr.mxu0 0.0
        %3642 = vmatpush1.msra.mxu0 %v3637
        %3643 = vmatprep.subr.mxu0 0.0
        %3644 = vmatpush1.msra.mxu0 0.0
        %3645 = vmatprep.subr.mxu0 0.0
        %3646 = vmatpush1.msra.mxu0 0.0
        %3647 = vmatprep.subr.mxu0 0.0
        %3648 = vmatpush1.msra.mxu0 0.0
        %3649 = vmatprep.subr.mxu0 0.0
        %3650 = vmatpush1.msra.mxu0 0.0
        %3651 = vmatprep.subr.mxu0 0.0
        %3652 = vmatpush1.msra.mxu0 0.0
        %3653 = vmatprep.subr.mxu0 0.0
        %3654 = vmatpush1.msra.mxu0 0.0
        %3655 = vmatprep.subr.mxu0 0.0
        %3656 = vmatpush1.msra.mxu0 0.0
        %3657 = vmatprep.subr.mxu0 0.0
        %3658 = vmatpush1.msra.mxu0 0.0
        %3659 = vmatprep.subr.mxu0 0.0
        %3660 = vmatpush1.msra.mxu0 0.0
        %3661 = vmatprep.subr.mxu0 0.0
        %3662 = vmatpush1.msra.mxu0 0.0
        %3663 = vmatprep.subr.mxu0 0.0
        %3664 = vmatpush1.msra.mxu0 0.0
        %3665 = vmatprep.subr.mxu0 0.0
        %3666 = vmatpush1.msra.mxu0 0.0
        %3667 = vmatprep.subr.mxu0 0.0
        %3668 = vmatpush1.msra.mxu0 0.0
        %3669 = vmatprep.subr.mxu0 0.0
        %3670 = vmatpush1.msra.mxu0 0.0
        %3671 = vmatprep.subr.mxu0 0.0
        %3672 = vmatpush1.msra.mxu0 0.0
        %3673 = vmatprep.subr.mxu0 0.0
        %3674 = vmatpush1.msra.mxu0 0.0
        %3675 = vmatprep.subr.mxu0 0.0
        %3676 = vmatpush1.msra.mxu0 0.0
        %3677 = vmatprep.subr.mxu0 0.0
        %3678 = vmatpush1.msra.mxu0 0.0
        %3679 = vmatprep.subr.mxu0 0.0
        %3680 = vmatpush1.msra.mxu0 0.0
        %3681 = vmatprep.subr.mxu0 0.0
        %3682 = vmatpush1.msra.mxu0 0.0
        %3683 = vmatprep.subr.mxu0 0.0
        %3684 = vmatpush1.msra.mxu0 0.0
        %3685 = vmatprep.subr.mxu0 0.0
        %3686 = vmatpush1.msra.mxu0 0.0
        %3687 = vmatprep.subr.mxu0 0.0
        %3688 = vmatpush1.msra.mxu0 0.0
        %3689 = vmatprep.subr.mxu0 0.0
        %3690 = vmatpush1.msra.mxu0 0.0
        %3691 = vmatprep.subr.mxu0 0.0
        %3692 = vmatpush1.msra.mxu0 0.0
        %3693 = vmatprep.subr.mxu0 0.0
        %3694 = vmatpush1.msra.mxu0 0.0
        %3695 = vmatprep.subr.mxu0 0.0
        %3696 = vmatpush1.msra.mxu0 0.0
        %3697 = vmatprep.subr.mxu0 0.0
        %3698 = vmatpush1.msra.mxu0 0.0
        %3699 = vmatprep.subr.mxu0 0.0
        %3700 = vmatpush1.msra.mxu0 0.0
        %3701 = vmatprep.subr.mxu0 0.0
        %3702 = vmatpush1.msra.mxu0 0.0
        %3703 = vmatprep.subr.mxu0 0.0
        %3704 = vmatpush1.msra.mxu0 0.0
        %3705 = vmatprep.mubr.f32.mxu0 0.0
        %3706 = vmatmul.mubr.f32.gmra.mrb[0].mxu0 %v3639
        %v3707 = vpop.f32.mrb[0].mxu0
        %v3708 = vadd.f32 0.0, %v3707
        %v3709 = vpop.f32.mrb[0].mxu0
        %3710 = vdwg.mxu0
        %v3711 = vadd.f32 %v3225, %v3708
        %s3712 = scalar_lea.vmem %s1, 192
        %v3713 = vld [vmem:[%s3712] sm:$0xff]
        %v3714 = vld [vmem:[%s3712 + $0x8] sm:$0xff]
        %v3715 = vld [vmem:[%s3712 + $0x10] sm:$0xff]
        %v3716 = vld [vmem:[%s3712 + $0x18] sm:$0xff]
        %s3717 = scalar_lea.vmem %s2, 6
        %v3718 = vld [vmem:[%s3717] sm:$0x1]
        %v3720 = vlaneseq
        %v3721 = vshrl.u32 %v3720, 7
        %v3722 = vsub.s32 0, %v3721
        %v3723 = vrot.slane %v3718, %v3722
        %3725 = vmatprep.subr.mxu0 0.0
        %3726 = vmatpush1.msra.mxu0 %v3713
        %3727 = vmatprep.subr.mxu0 0.0
        %3728 = vmatpush1.msra.mxu0 %v3714
        %3729 = vmatprep.subr.mxu0 0.0
        %3730 = vmatpush1.msra.mxu0 %v3715
        %3731 = vmatprep.subr.mxu0 0.0
        %3732 = vmatpush1.msra.mxu0 %v3716
        %3733 = vmatprep.subr.mxu0 0.0
        %3734 = vmatpush1.msra.mxu0 0.0
        %3735 = vmatprep.subr.mxu0 0.0
        %3736 = vmatpush1.msra.mxu0 0.0
        %3737 = vmatprep.subr.mxu0 0.0
        %3738 = vmatpush1.msra.mxu0 0.0
        %3739 = vmatprep.subr.mxu0 0.0
        %3740 = vmatpush1.msra.mxu0 0.0
        %3741 = vmatprep.subr.mxu0 0.0
        %3742 = vmatpush1.msra.mxu0 0.0
        %3743 = vmatprep.subr.mxu0 0.0
        %3744 = vmatpush1.msra.mxu0 0.0
        %3745 = vmatprep.subr.mxu0 0.0
        %3746 = vmatpush1.msra.mxu0 0.0
        %3747 = vmatprep.subr.mxu0 0.0
        %3748 = vmatpush1.msra.mxu0 0.0
        %3749 = vmatprep.subr.mxu0 0.0
        %3750 = vmatpush1.msra.mxu0 0.0
        %3751 = vmatprep.subr.mxu0 0.0
        %3752 = vmatpush1.msra.mxu0 0.0
        %3753 = vmatprep.subr.mxu0 0.0
        %3754 = vmatpush1.msra.mxu0 0.0
        %3755 = vmatprep.subr.mxu0 0.0
        %3756 = vmatpush1.msra.mxu0 0.0
        %3757 = vmatprep.subr.mxu0 0.0
        %3758 = vmatpush1.msra.mxu0 0.0
        %3759 = vmatprep.subr.mxu0 0.0
        %3760 = vmatpush1.msra.mxu0 0.0
        %3761 = vmatprep.subr.mxu0 0.0
        %3762 = vmatpush1.msra.mxu0 0.0
        %3763 = vmatprep.subr.mxu0 0.0
        %3764 = vmatpush1.msra.mxu0 0.0
        %3765 = vmatprep.subr.mxu0 0.0
        %3766 = vmatpush1.msra.mxu0 0.0
        %3767 = vmatprep.subr.mxu0 0.0
        %3768 = vmatpush1.msra.mxu0 0.0
        %3769 = vmatprep.subr.mxu0 0.0
        %3770 = vmatpush1.msra.mxu0 0.0
        %3771 = vmatprep.subr.mxu0 0.0
        %3772 = vmatpush1.msra.mxu0 0.0
        %3773 = vmatprep.subr.mxu0 0.0
        %3774 = vmatpush1.msra.mxu0 0.0
        %3775 = vmatprep.subr.mxu0 0.0
        %3776 = vmatpush1.msra.mxu0 0.0
        %3777 = vmatprep.subr.mxu0 0.0
        %3778 = vmatpush1.msra.mxu0 0.0
        %3779 = vmatprep.subr.mxu0 0.0
        %3780 = vmatpush1.msra.mxu0 0.0
        %3781 = vmatprep.subr.mxu0 0.0
        %3782 = vmatpush1.msra.mxu0 0.0
        %3783 = vmatprep.subr.mxu0 0.0
        %3784 = vmatpush1.msra.mxu0 0.0
        %3785 = vmatprep.subr.mxu0 0.0
        %3786 = vmatpush1.msra.mxu0 0.0
        %3787 = vmatprep.subr.mxu0 0.0
        %3788 = vmatpush1.msra.mxu0 0.0
        %3789 = vmatprep.mubr.f32.mxu0 0.0
        %3790 = vmatmul.mubr.f32.gmra.mrb[0].mxu0 %v2751
        %v3791 = vpop.f32.mrb[0].mxu0
        %v3792 = vadd.f32 %v3723, %v3791
        %v3793 = vpop.f32.mrb[0].mxu0
        %3794 = vdwg.mxu0
        %s3795 = scalar_lea.vmem %s3, 192
        %v3796 = vld [vmem:[%s3795] sm:$0xff]
        %v3797 = vld [vmem:[%s3795 + $0x8] sm:$0xff]
        %v3798 = vld [vmem:[%s3795 + $0x10] sm:$0xff]
        %v3799 = vld [vmem:[%s3795 + $0x18] sm:$0xff]
        %s3800 = scalar_lea.vmem %s4, 6
        %v3801 = vld [vmem:[%s3800] sm:$0x1]
        %v3803 = vlaneseq
        %v3804 = vshrl.u32 %v3803, 7
        %v3805 = vsub.s32 0, %v3804
        %v3806 = vrot.slane %v3801, %v3805
        %3808 = vmatprep.subr.mxu0 0.0
        %3809 = vmatpush1.msra.mxu0 %v3796
        %3810 = vmatprep.subr.mxu0 0.0
        %3811 = vmatpush1.msra.mxu0 %v3797
        %3812 = vmatprep.subr.mxu0 0.0
        %3813 = vmatpush1.msra.mxu0 %v3798
        %3814 = vmatprep.subr.mxu0 0.0
        %3815 = vmatpush1.msra.mxu0 %v3799
        %3816 = vmatprep.subr.mxu0 0.0
        %3817 = vmatpush1.msra.mxu0 0.0
        %3818 = vmatprep.subr.mxu0 0.0
        %3819 = vmatpush1.msra.mxu0 0.0
        %3820 = vmatprep.subr.mxu0 0.0
        %3821 = vmatpush1.msra.mxu0 0.0
        %3822 = vmatprep.subr.mxu0 0.0
        %3823 = vmatpush1.msra.mxu0 0.0
        %3824 = vmatprep.subr.mxu0 0.0
        %3825 = vmatpush1.msra.mxu0 0.0
        %3826 = vmatprep.subr.mxu0 0.0
        %3827 = vmatpush1.msra.mxu0 0.0
        %3828 = vmatprep.subr.mxu0 0.0
        %3829 = vmatpush1.msra.mxu0 0.0
        %3830 = vmatprep.subr.mxu0 0.0
        %3831 = vmatpush1.msra.mxu0 0.0
        %3832 = vmatprep.subr.mxu0 0.0
        %3833 = vmatpush1.msra.mxu0 0.0
        %3834 = vmatprep.subr.mxu0 0.0
        %3835 = vmatpush1.msra.mxu0 0.0
        %3836 = vmatprep.subr.mxu0 0.0
        %3837 = vmatpush1.msra.mxu0 0.0
        %3838 = vmatprep.subr.mxu0 0.0
        %3839 = vmatpush1.msra.mxu0 0.0
        %3840 = vmatprep.subr.mxu0 0.0
        %3841 = vmatpush1.msra.mxu0 0.0
        %3842 = vmatprep.subr.mxu0 0.0
        %3843 = vmatpush1.msra.mxu0 0.0
        %3844 = vmatprep.subr.mxu0 0.0
        %3845 = vmatpush1.msra.mxu0 0.0
        %3846 = vmatprep.subr.mxu0 0.0
        %3847 = vmatpush1.msra.mxu0 0.0
        %3848 = vmatprep.subr.mxu0 0.0
        %3849 = vmatpush1.msra.mxu0 0.0
        %3850 = vmatprep.subr.mxu0 0.0
        %3851 = vmatpush1.msra.mxu0 0.0
        %3852 = vmatprep.subr.mxu0 0.0
        %3853 = vmatpush1.msra.mxu0 0.0
        %3854 = vmatprep.subr.mxu0 0.0
        %3855 = vmatpush1.msra.mxu0 0.0
        %3856 = vmatprep.subr.mxu0 0.0
        %3857 = vmatpush1.msra.mxu0 0.0
        %3858 = vmatprep.subr.mxu0 0.0
        %3859 = vmatpush1.msra.mxu0 0.0
        %3860 = vmatprep.subr.mxu0 0.0
        %3861 = vmatpush1.msra.mxu0 0.0
        %3862 = vmatprep.subr.mxu0 0.0
        %3863 = vmatpush1.msra.mxu0 0.0
        %3864 = vmatprep.subr.mxu0 0.0
        %3865 = vmatpush1.msra.mxu0 0.0
        %3866 = vmatprep.subr.mxu0 0.0
        %3867 = vmatpush1.msra.mxu0 0.0
        %3868 = vmatprep.subr.mxu0 0.0
        %3869 = vmatpush1.msra.mxu0 0.0
        %3870 = vmatprep.subr.mxu0 0.0
        %3871 = vmatpush1.msra.mxu0 0.0
        %3872 = vmatprep.mubr.f32.mxu0 0.0
        %3873 = vmatmul.mubr.f32.gmra.mrb[0].mxu0 %v2751
        %v3874 = vpop.f32.mrb[0].mxu0
        %v3875 = vadd.f32 %v3806, %v3874
        %v3876 = vpop.f32.mrb[0].mxu0
        %3877 = vdwg.mxu0
        %s3878 = scalar_lea.vmem %s5, 192
        %v3879 = vld [vmem:[%s3878] sm:$0xff]
        %v3880 = vld [vmem:[%s3878 + $0x8] sm:$0xff]
        %v3881 = vld [vmem:[%s3878 + $0x10] sm:$0xff]
        %v3882 = vld [vmem:[%s3878 + $0x18] sm:$0xff]
        %s3883 = scalar_lea.vmem %s6, 6
        %v3884 = vld [vmem:[%s3883] sm:$0x1]
        %v3886 = vlaneseq
        %v3887 = vshrl.u32 %v3886, 7
        %v3888 = vsub.s32 0, %v3887
        %v3889 = vrot.slane %v3884, %v3888
        %3891 = vmatprep.subr.mxu0 0.0
        %3892 = vmatpush1.msra.mxu0 %v3879
        %3893 = vmatprep.subr.mxu0 0.0
        %3894 = vmatpush1.msra.mxu0 %v3880
        %3895 = vmatprep.subr.mxu0 0.0
        %3896 = vmatpush1.msra.mxu0 %v3881
        %3897 = vmatprep.subr.mxu0 0.0
        %3898 = vmatpush1.msra.mxu0 %v3882
        %3899 = vmatprep.subr.mxu0 0.0
        %3900 = vmatpush1.msra.mxu0 0.0
        %3901 = vmatprep.subr.mxu0 0.0
        %3902 = vmatpush1.msra.mxu0 0.0
        %3903 = vmatprep.subr.mxu0 0.0
        %3904 = vmatpush1.msra.mxu0 0.0
        %3905 = vmatprep.subr.mxu0 0.0
        %3906 = vmatpush1.msra.mxu0 0.0
        %3907 = vmatprep.subr.mxu0 0.0
        %3908 = vmatpush1.msra.mxu0 0.0
        %3909 = vmatprep.subr.mxu0 0.0
        %3910 = vmatpush1.msra.mxu0 0.0
        %3911 = vmatprep.subr.mxu0 0.0
        %3912 = vmatpush1.msra.mxu0 0.0
        %3913 = vmatprep.subr.mxu0 0.0
        %3914 = vmatpush1.msra.mxu0 0.0
        %3915 = vmatprep.subr.mxu0 0.0
        %3916 = vmatpush1.msra.mxu0 0.0
        %3917 = vmatprep.subr.mxu0 0.0
        %3918 = vmatpush1.msra.mxu0 0.0
        %3919 = vmatprep.subr.mxu0 0.0
        %3920 = vmatpush1.msra.mxu0 0.0
        %3921 = vmatprep.subr.mxu0 0.0
        %3922 = vmatpush1.msra.mxu0 0.0
        %3923 = vmatprep.subr.mxu0 0.0
        %3924 = vmatpush1.msra.mxu0 0.0
        %3925 = vmatprep.subr.mxu0 0.0
        %3926 = vmatpush1.msra.mxu0 0.0
        %3927 = vmatprep.subr.mxu0 0.0
        %3928 = vmatpush1.msra.mxu0 0.0
        %3929 = vmatprep.subr.mxu0 0.0
        %3930 = vmatpush1.msra.mxu0 0.0
        %3931 = vmatprep.subr.mxu0 0.0
        %3932 = vmatpush1.msra.mxu0 0.0
        %3933 = vmatprep.subr.mxu0 0.0
        %3934 = vmatpush1.msra.mxu0 0.0
        %3935 = vmatprep.subr.mxu0 0.0
        %3936 = vmatpush1.msra.mxu0 0.0
        %3937 = vmatprep.subr.mxu0 0.0
        %3938 = vmatpush1.msra.mxu0 0.0
        %3939 = vmatprep.subr.mxu0 0.0
        %3940 = vmatpush1.msra.mxu0 0.0
        %3941 = vmatprep.subr.mxu0 0.0
        %3942 = vmatpush1.msra.mxu0 0.0
        %3943 = vmatprep.subr.mxu0 0.0
        %3944 = vmatpush1.msra.mxu0 0.0
        %3945 = vmatprep.subr.mxu0 0.0
        %3946 = vmatpush1.msra.mxu0 0.0
        %3947 = vmatprep.subr.mxu0 0.0
        %3948 = vmatpush1.msra.mxu0 0.0
        %3949 = vmatprep.subr.mxu0 0.0
        %3950 = vmatpush1.msra.mxu0 0.0
        %3951 = vmatprep.subr.mxu0 0.0
        %3952 = vmatpush1.msra.mxu0 0.0
        %3953 = vmatprep.subr.mxu0 0.0
        %3954 = vmatpush1.msra.mxu0 0.0
        %3955 = vmatprep.mubr.f32.mxu0 0.0
        %3956 = vmatmul.mubr.f32.gmra.mrb[0].mxu0 %v2751
        %v3957 = vpop.f32.mrb[0].mxu0
        %v3958 = vadd.f32 %v3889, %v3957
        %v3959 = vpop.f32.mrb[0].mxu0
        %3960 = vdwg.mxu0
        %v3962 = vsel %vm799, %v3792, 0
        %v3965 = vsel %vm799, %v3875, 0
        %3967 = vmatprep.subr.mxu0 0.0
        %3968 = vmatpush1.xpose.msra.mxu0 %v3965
        %3969 = vmatprep.subr.mxu0 0.0
        %3970 = vmatpush1.xpose.msra.mxu0 0.0
        %3971 = vmatprep.subr.mxu0 0.0
        %3972 = vmatpush1.xpose.msra.mxu0 0.0
        %3973 = vmatprep.subr.mxu0 0.0
        %3974 = vmatpush1.xpose.msra.mxu0 0.0
        %3975 = vmatprep.subr.mxu0 0.0
        %3976 = vmatpush1.xpose.msra.mxu0 0.0
        %3977 = vmatprep.subr.mxu0 0.0
        %3978 = vmatpush1.xpose.msra.mxu0 0.0
        %3979 = vmatprep.subr.mxu0 0.0
        %3980 = vmatpush1.xpose.msra.mxu0 0.0
        %3981 = vmatprep.subr.mxu0 0.0
        %3982 = vmatpush1.xpose.msra.mxu0 0.0
        %3983 = vmatprep.subr.mxu0 0.0
        %3984 = vmatpush1.xpose.msra.mxu0 0.0
        %3985 = vmatprep.subr.mxu0 0.0
        %3986 = vmatpush1.xpose.msra.mxu0 0.0
        %3987 = vmatprep.subr.mxu0 0.0
        %3988 = vmatpush1.xpose.msra.mxu0 0.0
        %3989 = vmatprep.subr.mxu0 0.0
        %3990 = vmatpush1.xpose.msra.mxu0 0.0
        %3991 = vmatprep.subr.mxu0 0.0
        %3992 = vmatpush1.xpose.msra.mxu0 0.0
        %3993 = vmatprep.subr.mxu0 0.0
        %3994 = vmatpush1.xpose.msra.mxu0 0.0
        %3995 = vmatprep.subr.mxu0 0.0
        %3996 = vmatpush1.xpose.msra.mxu0 0.0
        %3997 = vmatprep.subr.mxu0 0.0
        %3998 = vmatpush1.xpose.msra.mxu0 0.0
        %3999 = vmatprep.subr.mxu0 0.0
        %4000 = vmatpush1.xpose.msra.mxu0 0.0
        %4001 = vmatprep.subr.mxu0 0.0
        %4002 = vmatpush1.xpose.msra.mxu0 0.0
        %4003 = vmatprep.subr.mxu0 0.0
        %4004 = vmatpush1.xpose.msra.mxu0 0.0
        %4005 = vmatprep.subr.mxu0 0.0
        %4006 = vmatpush1.xpose.msra.mxu0 0.0
        %4007 = vmatprep.subr.mxu0 0.0
        %4008 = vmatpush1.xpose.msra.mxu0 0.0
        %4009 = vmatprep.subr.mxu0 0.0
        %4010 = vmatpush1.xpose.msra.mxu0 0.0
        %4011 = vmatprep.subr.mxu0 0.0
        %4012 = vmatpush1.xpose.msra.mxu0 0.0
        %4013 = vmatprep.subr.mxu0 0.0
        %4014 = vmatpush1.xpose.msra.mxu0 0.0
        %4015 = vmatprep.subr.mxu0 0.0
        %4016 = vmatpush1.xpose.msra.mxu0 0.0
        %4017 = vmatprep.subr.mxu0 0.0
        %4018 = vmatpush1.xpose.msra.mxu0 0.0
        %4019 = vmatprep.subr.mxu0 0.0
        %4020 = vmatpush1.xpose.msra.mxu0 0.0
        %4021 = vmatprep.subr.mxu0 0.0
        %4022 = vmatpush1.xpose.msra.mxu0 0.0
        %4023 = vmatprep.subr.mxu0 0.0
        %4024 = vmatpush1.xpose.msra.mxu0 0.0
        %4025 = vmatprep.subr.mxu0 0.0
        %4026 = vmatpush1.xpose.msra.mxu0 0.0
        %4027 = vmatprep.subr.mxu0 0.0
        %4028 = vmatpush1.xpose.msra.mxu0 0.0
        %4029 = vmatprep.subr.mxu0 0.0
        %4030 = vmatpush1.xpose.msra.mxu0 0.0
        %4031 = vmatprep.mubr.f32.mxu0 0.0
        %4032 = vmatmul.mubr.f32.gmra.mrb[0].mxu0 %v3962
        %v4033 = vpop.f32.mrb[0].mxu0
        %v4034 = vadd.f32 0.0, %v4033
        %v4035 = vpop.f32.mrb[0].mxu0
        %4036 = vdwg.mxu0
        %v4037 = vsel %vm799, %v4034, -inf
        %4038 = vmax.xlane.f32.xlu0 %v4037
        %v4039 = vpop.xlane.xlu0 %4038
        %v4040 = vsub.f32 %v4034, %v4039
        %v4041 = vmul.f32 %v4040, 1.442695
        %v4042 = vpow.pop %v4041
        %v4043 = vsel %vm799, %v4042, 0.0
        %4044 = vadd.xlane.f32.xlu0 %v4043
        %v4045 = vpop.xlane.xlu0 %4044
        %v4046 = vrcp.pop %v4045
        %v4047 = vmul.f32 1.0, %v4046
        %v4048 = vmul.f32 %v4042, %v4047
        %v4050 = vsel %vm799, %v4048, 0
        %4052 = vmatprep.subr.mxu0 0.0
        %4053 = vmatpush1.msra.mxu0 %v3958
        %4054 = vmatprep.subr.mxu0 0.0
        %4055 = vmatpush1.msra.mxu0 0.0
        %4056 = vmatprep.subr.mxu0 0.0
        %4057 = vmatpush1.msra.mxu0 0.0
        %4058 = vmatprep.subr.mxu0 0.0
        %4059 = vmatpush1.msra.mxu0 0.0
        %4060 = vmatprep.subr.mxu0 0.0
        %4061 = vmatpush1.msra.mxu0 0.0
        %4062 = vmatprep.subr.mxu0 0.0
        %4063 = vmatpush1.msra.mxu0 0.0
        %4064 = vmatprep.subr.mxu0 0.0
        %4065 = vmatpush1.msra.mxu0 0.0
        %4066 = vmatprep.subr.mxu0 0.0
        %4067 = vmatpush1.msra.mxu0 0.0
        %4068 = vmatprep.subr.mxu0 0.0
        %4069 = vmatpush1.msra.mxu0 0.0
        %4070 = vmatprep.subr.mxu0 0.0
        %4071 = vmatpush1.msra.mxu0 0.0
        %4072 = vmatprep.subr.mxu0 0.0
        %4073 = vmatpush1.msra.mxu0 0.0
        %4074 = vmatprep.subr.mxu0 0.0
        %4075 = vmatpush1.msra.mxu0 0.0
        %4076 = vmatprep.subr.mxu0 0.0
        %4077 = vmatpush1.msra.mxu0 0.0
        %4078 = vmatprep.subr.mxu0 0.0
        %4079 = vmatpush1.msra.mxu0 0.0
        %4080 = vmatprep.subr.mxu0 0.0
        %4081 = vmatpush1.msra.mxu0 0.0
        %4082 = vmatprep.subr.mxu0 0.0
        %4083 = vmatpush1.msra.mxu0 0.0
        %4084 = vmatprep.subr.mxu0 0.0
        %4085 = vmatpush1.msra.mxu0 0.0
        %4086 = vmatprep.subr.mxu0 0.0
        %4087 = vmatpush1.msra.mxu0 0.0
        %4088 = vmatprep.subr.mxu0 0.0
        %4089 = vmatpush1.msra.mxu0 0.0
        %4090 = vmatprep.subr.mxu0 0.0
        %4091 = vmatpush1.msra.mxu0 0.0
        %4092 = vmatprep.subr.mxu0 0.0
        %4093 = vmatpush1.msra.mxu0 0.0
        %4094 = vmatprep.subr.mxu0 0.0
        %4095 = vmatpush1.msra.mxu0 0.0
        %4096 = vmatprep.subr.mxu0 0.0
        %4097 = vmatpush1.msra.mxu0 0.0
        %4098 = vmatprep.subr.mxu0 0.0
        %4099 = vmatpush1.msra.mxu0 0.0
        %4100 = vmatprep.subr.mxu0 0.0
        %4101 = vmatpush1.msra.mxu0 0.0
        %4102 = vmatprep.subr.mxu0 0.0
        %4103 = vmatpush1.msra.mxu0 0.0
        %4104 = vmatprep.subr.mxu0 0.0
        %4105 = vmatpush1.msra.mxu0 0.0
        %4106 = vmatprep.subr.mxu0 0.0
        %4107 = vmatpush1.msra.mxu0 0.0
        %4108 = vmatprep.subr.mxu0 0.0
        %4109 = vmatpush1.msra.mxu0 0.0
        %4110 = vmatprep.subr.mxu0 0.0
        %4111 = vmatpush1.msra.mxu0 0.0
        %4112 = vmatprep.subr.mxu0 0.0
        %4113 = vmatpush1.msra.mxu0 0.0
        %4114 = vmatprep.subr.mxu0 0.0
        %4115 = vmatpush1.msra.mxu0 0.0
        %4116 = vmatprep.mubr.f32.mxu0 0.0
        %4117 = vmatmul.mubr.f32.gmra.mrb[0].mxu0 %v4050
        %v4118 = vpop.f32.mrb[0].mxu0
        %v4119 = vadd.f32 0.0, %v4118
        %v4120 = vpop.f32.mrb[0].mxu0
        %4121 = vdwg.mxu0
        %s4122 = scalar_lea.vmem %s7, 48
        %v4123 = vld [vmem:[%s4122] sm:$0xff]
        %v4125 = vsel %vm799, %v4119, 0
        %4127 = vmatprep.subr.mxu0 0.0
        %4128 = vmatpush1.msra.mxu0 %v4123
        %4129 = vmatprep.subr.mxu0 0.0
        %4130 = vmatpush1.msra.mxu0 0.0
        %4131 = vmatprep.subr.mxu0 0.0
        %4132 = vmatpush1.msra.mxu0 0.0
        %4133 = vmatprep.subr.mxu0 0.0
        %4134 = vmatpush1.msra.mxu0 0.0
        %4135 = vmatprep.subr.mxu0 0.0
        %4136 = vmatpush1.msra.mxu0 0.0
        %4137 = vmatprep.subr.mxu0 0.0
        %4138 = vmatpush1.msra.mxu0 0.0
        %4139 = vmatprep.subr.mxu0 0.0
        %4140 = vmatpush1.msra.mxu0 0.0
        %4141 = vmatprep.subr.mxu0 0.0
        %4142 = vmatpush1.msra.mxu0 0.0
        %4143 = vmatprep.subr.mxu0 0.0
        %4144 = vmatpush1.msra.mxu0 0.0
        %4145 = vmatprep.subr.mxu0 0.0
        %4146 = vmatpush1.msra.mxu0 0.0
        %4147 = vmatprep.subr.mxu0 0.0
        %4148 = vmatpush1.msra.mxu0 0.0
        %4149 = vmatprep.subr.mxu0 0.0
        %4150 = vmatpush1.msra.mxu0 0.0
        %4151 = vmatprep.subr.mxu0 0.0
        %4152 = vmatpush1.msra.mxu0 0.0
        %4153 = vmatprep.subr.mxu0 0.0
        %4154 = vmatpush1.msra.mxu0 0.0
        %4155 = vmatprep.subr.mxu0 0.0
        %4156 = vmatpush1.msra.mxu0 0.0
        %4157 = vmatprep.subr.mxu0 0.0
        %4158 = vmatpush1.msra.mxu0 0.0
        %4159 = vmatprep.subr.mxu0 0.0
        %4160 = vmatpush1.msra.mxu0 0.0
        %4161 = vmatprep.subr.mxu0 0.0
        %4162 = vmatpush1.msra.mxu0 0.0
        %4163 = vmatprep.subr.mxu0 0.0
        %4164 = vmatpush1.msra.mxu0 0.0
        %4165 = vmatprep.subr.mxu0 0.0
        %4166 = vmatpush1.msra.mxu0 0.0
        %4167 = vmatprep.subr.mxu0 0.0
        %4168 = vmatpush1.msra.mxu0 0.0
        %4169 = vmatprep.subr.mxu0 0.0
        %4170 = vmatpush1.msra.mxu0 0.0
        %4171 = vmatprep.subr.mxu0 0.0
        %4172 = vmatpush1.msra.mxu0 0.0
        %4173 = vmatprep.subr.mxu0 0.0
        %4174 = vmatpush1.msra.mxu0 0.0
        %4175 = vmatprep.subr.mxu0 0.0
        %4176 = vmatpush1.msra.mxu0 0.0
        %4177 = vmatprep.subr.mxu0 0.0
        %4178 = vmatpush1.msra.mxu0 0.0
        %4179 = vmatprep.subr.mxu0 0.0
        %4180 = vmatpush1.msra.mxu0 0.0
        %4181 = vmatprep.subr.mxu0 0.0
        %4182 = vmatpush1.msra.mxu0 0.0
        %4183 = vmatprep.subr.mxu0 0.0
        %4184 = vmatpush1.msra.mxu0 0.0
        %4185 = vmatprep.subr.mxu0 0.0
        %4186 = vmatpush1.msra.mxu0 0.0
        %4187 = vmatprep.subr.mxu0 0.0
        %4188 = vmatpush1.msra.mxu0 0.0
        %4189 = vmatprep.subr.mxu0 0.0
        %4190 = vmatpush1.msra.mxu0 0.0
        %4191 = vmatprep.mubr.f32.mxu0 0.0
        %4192 = vmatmul.mubr.f32.gmra.mrb[0].mxu0 %v4125
        %v4193 = vpop.f32.mrb[0].mxu0
        %v4194 = vadd.f32 0.0, %v4193
        %v4195 = vpop.f32.mrb[0].mxu0
        %4196 = vdwg.mxu0
        %v4197 = vadd.f32 %v3711, %v4194
        %s4198 = scalar_lea.vmem %s1, 224
        %v4199 = vld [vmem:[%s4198] sm:$0xff]
        %v4200 = vld [vmem:[%s4198 + $0x8] sm:$0xff]
        %v4201 = vld [vmem:[%s4198 + $0x10] sm:$0xff]
        %v4202 = vld [vmem:[%s4198 + $0x18] sm:$0xff]
        %s4203 = scalar_lea.vmem %s2, 7
        %v4204 = vld [vmem:[%s4203] sm:$0x1]
        %v4206 = vlaneseq
        %v4207 = vshrl.u32 %v4206, 7
        %v4208 = vsub.s32 0, %v4207
        %v4209 = vrot.slane %v4204, %v4208
        %4211 = vmatprep.subr.mxu0 0.0
        %4212 = vmatpush1.msra.mxu0 %v4199
        %4213 = vmatprep.subr.mxu0 0.0
        %4214 = vmatpush1.msra.mxu0 %v4200
        %4215 = vmatprep.subr.mxu0 0.0
        %4216 = vmatpush1.msra.mxu0 %v4201
        %4217 = vmatprep.subr.mxu0 0.0
        %4218 = vmatpush1.msra.mxu0 %v4202
        %4219 = vmatprep.subr.mxu0 0.0
        %4220 = vmatpush1.msra.mxu0 0.0
        %4221 = vmatprep.subr.mxu0 0.0
        %4222 = vmatpush1.msra.mxu0 0.0
        %4223 = vmatprep.subr.mxu0 0.0
        %4224 = vmatpush1.msra.mxu0 0.0
        %4225 = vmatprep.subr.mxu0 0.0
        %4226 = vmatpush1.msra.mxu0 0.0
        %4227 = vmatprep.subr.mxu0 0.0
        %4228 = vmatpush1.msra.mxu0 0.0
        %4229 = vmatprep.subr.mxu0 0.0
        %4230 = vmatpush1.msra.mxu0 0.0
        %4231 = vmatprep.subr.mxu0 0.0
        %4232 = vmatpush1.msra.mxu0 0.0
        %4233 = vmatprep.subr.mxu0 0.0
        %4234 = vmatpush1.msra.mxu0 0.0
        %4235 = vmatprep.subr.mxu0 0.0
        %4236 = vmatpush1.msra.mxu0 0.0
        %4237 = vmatprep.subr.mxu0 0.0
        %4238 = vmatpush1.msra.mxu0 0.0
        %4239 = vmatprep.subr.mxu0 0.0
        %4240 = vmatpush1.msra.mxu0 0.0
        %4241 = vmatprep.subr.mxu0 0.0
        %4242 = vmatpush1.msra.mxu0 0.0
        %4243 = vmatprep.subr.mxu0 0.0
        %4244 = vmatpush1.msra.mxu0 0.0
        %4245 = vmatprep.subr.mxu0 0.0
        %4246 = vmatpush1.msra.mxu0 0.0
        %4247 = vmatprep.subr.mxu0 0.0
        %4248 = vmatpush1.msra.mxu0 0.0
        %4249 = vmatprep.subr.mxu0 0.0
        %4250 = vmatpush1.msra.mxu0 0.0
        %4251 = vmatprep.subr.mxu0 0.0
        %4252 = vmatpush1.msra.mxu0 0.0
        %4253 = vmatprep.subr.mxu0 0.0
        %4254 = vmatpush1.msra.mxu0 0.0
        %4255 = vmatprep.subr.mxu0 0.0
        %4256 = vmatpush1.msra.mxu0 0.0
        %4257 = vmatprep.subr.mxu0 0.0
        %4258 = vmatpush1.msra.mxu0 0.0
        %4259 = vmatprep.subr.mxu0 0.0
        %4260 = vmatpush1.msra.mxu0 0.0
        %4261 = vmatprep.subr.mxu0 0.0
        %4262 = vmatpush1.msra.mxu0 0.0
        %4263 = vmatprep.subr.mxu0 0.0
        %4264 = vmatpush1.msra.mxu0 0.0
        %4265 = vmatprep.subr.mxu0 0.0
        %4266 = vmatpush1.msra.mxu0 0.0
        %4267 = vmatprep.subr.mxu0 0.0
        %4268 = vmatpush1.msra.mxu0 0.0
        %4269 = vmatprep.subr.mxu0 0.0
        %4270 = vmatpush1.msra.mxu0 0.0
        %4271 = vmatprep.subr.mxu0 0.0
        %4272 = vmatpush1.msra.mxu0 0.0
        %4273 = vmatprep.subr.mxu0 0.0
        %4274 = vmatpush1.msra.mxu0 0.0
        %4275 = vmatprep.mubr.f32.mxu0 0.0
        %4276 = vmatmul.mubr.f32.gmra.mrb[0].mxu0 %v2751
        %v4277 = vpop.f32.mrb[0].mxu0
        %v4278 = vadd.f32 %v4209, %v4277
        %v4279 = vpop.f32.mrb[0].mxu0
        %4280 = vdwg.mxu0
        %s4281 = scalar_lea.vmem %s3, 224
        %v4282 = vld [vmem:[%s4281] sm:$0xff]
        %v4283 = vld [vmem:[%s4281 + $0x8] sm:$0xff]
        %v4284 = vld [vmem:[%s4281 + $0x10] sm:$0xff]
        %v4285 = vld [vmem:[%s4281 + $0x18] sm:$0xff]
        %s4286 = scalar_lea.vmem %s4, 7
        %v4287 = vld [vmem:[%s4286] sm:$0x1]
        %v4289 = vlaneseq
        %v4290 = vshrl.u32 %v4289, 7
        %v4291 = vsub.s32 0, %v4290
        %v4292 = vrot.slane %v4287, %v4291
        %4294 = vmatprep.subr.mxu0 0.0
        %4295 = vmatpush1.msra.mxu0 %v4282
        %4296 = vmatprep.subr.mxu0 0.0
        %4297 = vmatpush1.msra.mxu0 %v4283
        %4298 = vmatprep.subr.mxu0 0.0
        %4299 = vmatpush1.msra.mxu0 %v4284
        %4300 = vmatprep.subr.mxu0 0.0
        %4301 = vmatpush1.msra.mxu0 %v4285
        %4302 = vmatprep.subr.mxu0 0.0
        %4303 = vmatpush1.msra.mxu0 0.0
        %4304 = vmatprep.subr.mxu0 0.0
        %4305 = vmatpush1.msra.mxu0 0.0
        %4306 = vmatprep.subr.mxu0 0.0
        %4307 = vmatpush1.msra.mxu0 0.0
        %4308 = vmatprep.subr.mxu0 0.0
        %4309 = vmatpush1.msra.mxu0 0.0
        %4310 = vmatprep.subr.mxu0 0.0
        %4311 = vmatpush1.msra.mxu0 0.0
        %4312 = vmatprep.subr.mxu0 0.0
        %4313 = vmatpush1.msra.mxu0 0.0
        %4314 = vmatprep.subr.mxu0 0.0
        %4315 = vmatpush1.msra.mxu0 0.0
        %4316 = vmatprep.subr.mxu0 0.0
        %4317 = vmatpush1.msra.mxu0 0.0
        %4318 = vmatprep.subr.mxu0 0.0
        %4319 = vmatpush1.msra.mxu0 0.0
        %4320 = vmatprep.subr.mxu0 0.0
        %4321 = vmatpush1.msra.mxu0 0.0
        %4322 = vmatprep.subr.mxu0 0.0
        %4323 = vmatpush1.msra.mxu0 0.0
        %4324 = vmatprep.subr.mxu0 0.0
        %4325 = vmatpush1.msra.mxu0 0.0
        %4326 = vmatprep.subr.mxu0 0.0
        %4327 = vmatpush1.msra.mxu0 0.0
        %4328 = vmatprep.subr.mxu0 0.0
        %4329 = vmatpush1.msra.mxu0 0.0
        %4330 = vmatprep.subr.mxu0 0.0
        %4331 = vmatpush1.msra.mxu0 0.0
        %4332 = vmatprep.subr.mxu0 0.0
        %4333 = vmatpush1.msra.mxu0 0.0
        %4334 = vmatprep.subr.mxu0 0.0
        %4335 = vmatpush1.msra.mxu0 0.0
        %4336 = vmatprep.subr.mxu0 0.0
        %4337 = vmatpush1.msra.mxu0 0.0
        %4338 = vmatprep.subr.mxu0 0.0
        %4339 = vmatpush1.msra.mxu0 0.0
        %4340 = vmatprep.subr.mxu0 0.0
        %4341 = vmatpush1.msra.mxu0 0.0
        %4342 = vmatprep.subr.mxu0 0.0
        %4343 = vmatpush1.msra.mxu0 0.0
        %4344 = vmatprep.subr.mxu0 0.0
        %4345 = vmatpush1.msra.mxu0 0.0
        %4346 = vmatprep.subr.mxu0 0.0
        %4347 = vmatpush1.msra.mxu0 0.0
        %4348 = vmatprep.subr.mxu0 0.0
        %4349 = vmatpush1.msra.mxu0 0.0
        %4350 = vmatprep.subr.mxu0 0.0
        %4351 = vmatpush1.msra.mxu0 0.0
        %4352 = vmatprep.subr.mxu0 0.0
        %4353 = vmatpush1.msra.mxu0 0.0
        %4354 = vmatprep.subr.mxu0 0.0
        %4355 = vmatpush1.msra.mxu0 0.0
        %4356 = vmatprep.subr.mxu0 0.0
        %4357 = vmatpush1.msra.mxu0 0.0
        %4358 = vmatprep.mubr.f32.mxu0 0.0
        %4359 = vmatmul.mubr.f32.gmra.mrb[0].mxu0 %v2751
        %v4360 = vpop.f32.mrb[0].mxu0
        %v4361 = vadd.f32 %v4292, %v4360
        %v4362 = vpop.f32.mrb[0].mxu0
        %4363 = vdwg.mxu0
        %s4364 = scalar_lea.vmem %s5, 224
        %v4365 = vld [vmem:[%s4364] sm:$0xff]
        %v4366 = vld [vmem:[%s4364 + $0x8] sm:$0xff]
        %v4367 = vld [vmem:[%s4364 + $0x10] sm:$0xff]
        %v4368 = vld [vmem:[%s4364 + $0x18] sm:$0xff]
        %s4369 = scalar_lea.vmem %s6, 7
        %v4370 = vld [vmem:[%s4369] sm:$0x1]
        %v4372 = vlaneseq
        %v4373 = vshrl.u32 %v4372, 7
        %v4374 = vsub.s32 0, %v4373
        %v4375 = vrot.slane %v4370, %v4374
        %4377 = vmatprep.subr.mxu0 0.0
        %4378 = vmatpush1.msra.mxu0 %v4365
        %4379 = vmatprep.subr.mxu0 0.0
        %4380 = vmatpush1.msra.mxu0 %v4366
        %4381 = vmatprep.subr.mxu0 0.0
        %4382 = vmatpush1.msra.mxu0 %v4367
        %4383 = vmatprep.subr.mxu0 0.0
        %4384 = vmatpush1.msra.mxu0 %v4368
        %4385 = vmatprep.subr.mxu0 0.0
        %4386 = vmatpush1.msra.mxu0 0.0
        %4387 = vmatprep.subr.mxu0 0.0
        %4388 = vmatpush1.msra.mxu0 0.0
        %4389 = vmatprep.subr.mxu0 0.0
        %4390 = vmatpush1.msra.mxu0 0.0
        %4391 = vmatprep.subr.mxu0 0.0
        %4392 = vmatpush1.msra.mxu0 0.0
        %4393 = vmatprep.subr.mxu0 0.0
        %4394 = vmatpush1.msra.mxu0 0.0
        %4395 = vmatprep.subr.mxu0 0.0
        %4396 = vmatpush1.msra.mxu0 0.0
        %4397 = vmatprep.subr.mxu0 0.0
        %4398 = vmatpush1.msra.mxu0 0.0
        %4399 = vmatprep.subr.mxu0 0.0
        %4400 = vmatpush1.msra.mxu0 0.0
        %4401 = vmatprep.subr.mxu0 0.0
        %4402 = vmatpush1.msra.mxu0 0.0
        %4403 = vmatprep.subr.mxu0 0.0
        %4404 = vmatpush1.msra.mxu0 0.0
        %4405 = vmatprep.subr.mxu0 0.0
        %4406 = vmatpush1.msra.mxu0 0.0
        %4407 = vmatprep.subr.mxu0 0.0
        %4408 = vmatpush1.msra.mxu0 0.0
        %4409 = vmatprep.subr.mxu0 0.0
        %4410 = vmatpush1.msra.mxu0 0.0
        %4411 = vmatprep.subr.mxu0 0.0
        %4412 = vmatpush1.msra.mxu0 0.0
        %4413 = vmatprep.subr.mxu0 0.0
        %4414 = vmatpush1.msra.mxu0 0.0
        %4415 = vmatprep.subr.mxu0 0.0
        %4416 = vmatpush1.msra.mxu0 0.0
        %4417 = vmatprep.subr.mxu0 0.0
        %4418 = vmatpush1.msra.mxu0 0.0
        %4419 = vmatprep.subr.mxu0 0.0
        %4420 = vmatpush1.msra.mxu0 0.0
        %4421 = vmatprep.subr.mxu0 0.0
        %4422 = vmatpush1.msra.mxu0 0.0
        %4423 = vmatprep.subr.mxu0 0.0
        %4424 = vmatpush1.msra.mxu0 0.0
        %4425 = vmatprep.subr.mxu0 0.0
        %4426 = vmatpush1.msra.mxu0 0.0
        %4427 = vmatprep.subr.mxu0 0.0
        %4428 = vmatpush1.msra.mxu0 0.0
        %4429 = vmatprep.subr.mxu0 0.0
        %4430 = vmatpush1.msra.mxu0 0.0
        %4431 = vmatprep.subr.mxu0 0.0
        %4432 = vmatpush1.msra.mxu0 0.0
        %4433 = vmatprep.subr.mxu0 0.0
        %4434 = vmatpush1.msra.mxu0 0.0
        %4435 = vmatprep.subr.mxu0 0.0
        %4436 = vmatpush1.msra.mxu0 0.0
        %4437 = vmatprep.subr.mxu0 0.0
        %4438 = vmatpush1.msra.mxu0 0.0
        %4439 = vmatprep.subr.mxu0 0.0
        %4440 = vmatpush1.msra.mxu0 0.0
        %4441 = vmatprep.mubr.f32.mxu0 0.0
        %4442 = vmatmul.mubr.f32.gmra.mrb[0].mxu0 %v2751
        %v4443 = vpop.f32.mrb[0].mxu0
        %v4444 = vadd.f32 %v4375, %v4443
        %v4445 = vpop.f32.mrb[0].mxu0
        %4446 = vdwg.mxu0
        %v4448 = vsel %vm799, %v4278, 0
        %v4451 = vsel %vm799, %v4361, 0
        %4453 = vmatprep.subr.mxu0 0.0
        %4454 = vmatpush1.xpose.msra.mxu0 %v4451
        %4455 = vmatprep.subr.mxu0 0.0
        %4456 = vmatpush1.xpose.msra.mxu0 0.0
        %4457 = vmatprep.subr.mxu0 0.0
        %4458 = vmatpush1.xpose.msra.mxu0 0.0
        %4459 = vmatprep.subr.mxu0 0.0
        %4460 = vmatpush1.xpose.msra.mxu0 0.0
        %4461 = vmatprep.subr.mxu0 0.0
        %4462 = vmatpush1.xpose.msra.mxu0 0.0
        %4463 = vmatprep.subr.mxu0 0.0
        %4464 = vmatpush1.xpose.msra.mxu0 0.0
        %4465 = vmatprep.subr.mxu0 0.0
        %4466 = vmatpush1.xpose.msra.mxu0 0.0
        %4467 = vmatprep.subr.mxu0 0.0
        %4468 = vmatpush1.xpose.msra.mxu0 0.0
        %4469 = vmatprep.subr.mxu0 0.0
        %4470 = vmatpush1.xpose.msra.mxu0 0.0
        %4471 = vmatprep.subr.mxu0 0.0
        %4472 = vmatpush1.xpose.msra.mxu0 0.0
        %4473 = vmatprep.subr.mxu0 0.0
        %4474 = vmatpush1.xpose.msra.mxu0 0.0
        %4475 = vmatprep.subr.mxu0 0.0
        %4476 = vmatpush1.xpose.msra.mxu0 0.0
        %4477 = vmatprep.subr.mxu0 0.0
        %4478 = vmatpush1.xpose.msra.mxu0 0.0
        %4479 = vmatprep.subr.mxu0 0.0
        %4480 = vmatpush1.xpose.msra.mxu0 0.0
        %4481 = vmatprep.subr.mxu0 0.0
        %4482 = vmatpush1.xpose.msra.mxu0 0.0
        %4483 = vmatprep.subr.mxu0 0.0
        %4484 = vmatpush1.xpose.msra.mxu0 0.0
        %4485 = vmatprep.subr.mxu0 0.0
        %4486 = vmatpush1.xpose.msra.mxu0 0.0
        %4487 = vmatprep.subr.mxu0 0.0
        %4488 = vmatpush1.xpose.msra.mxu0 0.0
        %4489 = vmatprep.subr.mxu0 0.0
        %4490 = vmatpush1.xpose.msra.mxu0 0.0
        %4491 = vmatprep.subr.mxu0 0.0
        %4492 = vmatpush1.xpose.msra.mxu0 0.0
        %4493 = vmatprep.subr.mxu0 0.0
        %4494 = vmatpush1.xpose.msra.mxu0 0.0
        %4495 = vmatprep.subr.mxu0 0.0
        %4496 = vmatpush1.xpose.msra.mxu0 0.0
        %4497 = vmatprep.subr.mxu0 0.0
        %4498 = vmatpush1.xpose.msra.mxu0 0.0
        %4499 = vmatprep.subr.mxu0 0.0
        %4500 = vmatpush1.xpose.msra.mxu0 0.0
        %4501 = vmatprep.subr.mxu0 0.0
        %4502 = vmatpush1.xpose.msra.mxu0 0.0
        %4503 = vmatprep.subr.mxu0 0.0
        %4504 = vmatpush1.xpose.msra.mxu0 0.0
        %4505 = vmatprep.subr.mxu0 0.0
        %4506 = vmatpush1.xpose.msra.mxu0 0.0
        %4507 = vmatprep.subr.mxu0 0.0
        %4508 = vmatpush1.xpose.msra.mxu0 0.0
        %4509 = vmatprep.subr.mxu0 0.0
        %4510 = vmatpush1.xpose.msra.mxu0 0.0
        %4511 = vmatprep.subr.mxu0 0.0
        %4512 = vmatpush1.xpose.msra.mxu0 0.0
        %4513 = vmatprep.subr.mxu0 0.0
        %4514 = vmatpush1.xpose.msra.mxu0 0.0
        %4515 = vmatprep.subr.mxu0 0.0
        %4516 = vmatpush1.xpose.msra.mxu0 0.0
        %4517 = vmatprep.mubr.f32.mxu0 0.0
        %4518 = vmatmul.mubr.f32.gmra.mrb[0].mxu0 %v4448
        %v4519 = vpop.f32.mrb[0].mxu0
        %v4520 = vadd.f32 0.0, %v4519
        %v4521 = vpop.f32.mrb[0].mxu0
        %4522 = vdwg.mxu0
        %v4523 = vsel %vm799, %v4520, -inf
        %4524 = vmax.xlane.f32.xlu0 %v4523
        %v4525 = vpop.xlane.xlu0 %4524
        %v4526 = vsub.f32 %v4520, %v4525
        %v4527 = vmul.f32 %v4526, 1.442695
        %v4528 = vpow.pop %v4527
        %v4529 = vsel %vm799, %v4528, 0.0
        %4530 = vadd.xlane.f32.xlu0 %v4529
        %v4531 = vpop.xlane.xlu0 %4530
        %v4532 = vrcp.pop %v4531
        %v4533 = vmul.f32 1.0, %v4532
        %v4534 = vmul.f32 %v4528, %v4533
        %v4536 = vsel %vm799, %v4534, 0
        %4538 = vmatprep.subr.mxu0 0.0
        %4539 = vmatpush1.msra.mxu0 %v4444
        %4540 = vmatprep.subr.mxu0 0.0
        %4541 = vmatpush1.msra.mxu0 0.0
        %4542 = vmatprep.subr.mxu0 0.0
        %4543 = vmatpush1.msra.mxu0 0.0
        %4544 = vmatprep.subr.mxu0 0.0
        %4545 = vmatpush1.msra.mxu0 0.0
        %4546 = vmatprep.subr.mxu0 0.0
        %4547 = vmatpush1.msra.mxu0 0.0
        %4548 = vmatprep.subr.mxu0 0.0
        %4549 = vmatpush1.msra.mxu0 0.0
        %4550 = vmatprep.subr.mxu0 0.0
        %4551 = vmatpush1.msra.mxu0 0.0
        %4552 = vmatprep.subr.mxu0 0.0
        %4553 = vmatpush1.msra.mxu0 0.0
        %4554 = vmatprep.subr.mxu0 0.0
        %4555 = vmatpush1.msra.mxu0 0.0
        %4556 = vmatprep.subr.mxu0 0.0
        %4557 = vmatpush1.msra.mxu0 0.0
        %4558 = vmatprep.subr.mxu0 0.0
        %4559 = vmatpush1.msra.mxu0 0.0
        %4560 = vmatprep.subr.mxu0 0.0
        %4561 = vmatpush1.msra.mxu0 0.0
        %4562 = vmatprep.subr.mxu0 0.0
        %4563 = vmatpush1.msra.mxu0 0.0
        %4564 = vmatprep.subr.mxu0 0.0
        %4565 = vmatpush1.msra.mxu0 0.0
        %4566 = vmatprep.subr.mxu0 0.0
        %4567 = vmatpush1.msra.mxu0 0.0
        %4568 = vmatprep.subr.mxu0 0.0
        %4569 = vmatpush1.msra.mxu0 0.0
        %4570 = vmatprep.subr.mxu0 0.0
        %4571 = vmatpush1.msra.mxu0 0.0
        %4572 = vmatprep.subr.mxu0 0.0
        %4573 = vmatpush1.msra.mxu0 0.0
        %4574 = vmatprep.subr.mxu0 0.0
        %4575 = vmatpush1.msra.mxu0 0.0
        %4576 = vmatprep.subr.mxu0 0.0
        %4577 = vmatpush1.msra.mxu0 0.0
        %4578 = vmatprep.subr.mxu0 0.0
        %4579 = vmatpush1.msra.mxu0 0.0
        %4580 = vmatprep.subr.mxu0 0.0
        %4581 = vmatpush1.msra.mxu0 0.0
        %4582 = vmatprep.subr.mxu0 0.0
        %4583 = vmatpush1.msra.mxu0 0.0
        %4584 = vmatprep.subr.mxu0 0.0
        %4585 = vmatpush1.msra.mxu0 0.0
        %4586 = vmatprep.subr.mxu0 0.0
        %4587 = vmatpush1.msra.mxu0 0.0
        %4588 = vmatprep.subr.mxu0 0.0
        %4589 = vmatpush1.msra.mxu0 0.0
        %4590 = vmatprep.subr.mxu0 0.0
        %4591 = vmatpush1.msra.mxu0 0.0
        %4592 = vmatprep.subr.mxu0 0.0
        %4593 = vmatpush1.msra.mxu0 0.0
        %4594 = vmatprep.subr.mxu0 0.0
        %4595 = vmatpush1.msra.mxu0 0.0
        %4596 = vmatprep.subr.mxu0 0.0
        %4597 = vmatpush1.msra.mxu0 0.0
        %4598 = vmatprep.subr.mxu0 0.0
        %4599 = vmatpush1.msra.mxu0 0.0
        %4600 = vmatprep.subr.mxu0 0.0
        %4601 = vmatpush1.msra.mxu0 0.0
        %4602 = vmatprep.mubr.f32.mxu0 0.0
        %4603 = vmatmul.mubr.f32.gmra.mrb[0].mxu0 %v4536
        %v4604 = vpop.f32.mrb[0].mxu0
        %v4605 = vadd.f32 0.0, %v4604
        %v4606 = vpop.f32.mrb[0].mxu0
        %4607 = vdwg.mxu0
        %s4608 = scalar_lea.vmem %s7, 56
        %v4609 = vld [vmem:[%s4608] sm:$0xff]
        %v4611 = vsel %vm799, %v4605, 0
        %4613 = vmatprep.subr.mxu0 0.0
        %4614 = vmatpush1.msra.mxu0 %v4609
        %4615 = vmatprep.subr.mxu0 0.0
        %4616 = vmatpush1.msra.mxu0 0.0
        %4617 = vmatprep.subr.mxu0 0.0
        %4618 = vmatpush1.msra.mxu0 0.0
        %4619 = vmatprep.subr.mxu0 0.0
        %4620 = vmatpush1.msra.mxu0 0.0
        %4621 = vmatprep.subr.mxu0 0.0
        %4622 = vmatpush1.msra.mxu0 0.0
        %4623 = vmatprep.subr.mxu0 0.0
        %4624 = vmatpush1.msra.mxu0 0.0
        %4625 = vmatprep.subr.mxu0 0.0
        %4626 = vmatpush1.msra.mxu0 0.0
        %4627 = vmatprep.subr.mxu0 0.0
        %4628 = vmatpush1.msra.mxu0 0.0
        %4629 = vmatprep.subr.mxu0 0.0
        %4630 = vmatpush1.msra.mxu0 0.0
        %4631 = vmatprep.subr.mxu0 0.0
        %4632 = vmatpush1.msra.mxu0 0.0
        %4633 = vmatprep.subr.mxu0 0.0
        %4634 = vmatpush1.msra.mxu0 0.0
        %4635 = vmatprep.subr.mxu0 0.0
        %4636 = vmatpush1.msra.mxu0 0.0
        %4637 = vmatprep.subr.mxu0 0.0
        %4638 = vmatpush1.msra.mxu0 0.0
        %4639 = vmatprep.subr.mxu0 0.0
        %4640 = vmatpush1.msra.mxu0 0.0
        %4641 = vmatprep.subr.mxu0 0.0
        %4642 = vmatpush1.msra.mxu0 0.0
        %4643 = vmatprep.subr.mxu0 0.0
        %4644 = vmatpush1.msra.mxu0 0.0
        %4645 = vmatprep.subr.mxu0 0.0
        %4646 = vmatpush1.msra.mxu0 0.0
        %4647 = vmatprep.subr.mxu0 0.0
        %4648 = vmatpush1.msra.mxu0 0.0
        %4649 = vmatprep.subr.mxu0 0.0
        %4650 = vmatpush1.msra.mxu0 0.0
        %4651 = vmatprep.subr.mxu0 0.0
        %4652 = vmatpush1.msra.mxu0 0.0
        %4653 = vmatprep.subr.mxu0 0.0
        %4654 = vmatpush1.msra.mxu0 0.0
        %4655 = vmatprep.subr.mxu0 0.0
        %4656 = vmatpush1.msra.mxu0 0.0
        %4657 = vmatprep.subr.mxu0 0.0
        %4658 = vmatpush1.msra.mxu0 0.0
        %4659 = vmatprep.subr.mxu0 0.0
        %4660 = vmatpush1.msra.mxu0 0.0
        %4661 = vmatprep.subr.mxu0 0.0
        %4662 = vmatpush1.msra.mxu0 0.0
        %4663 = vmatprep.subr.mxu0 0.0
        %4664 = vmatpush1.msra.mxu0 0.0
        %4665 = vmatprep.subr.mxu0 0.0
        %4666 = vmatpush1.msra.mxu0 0.0
        %4667 = vmatprep.subr.mxu0 0.0
        %4668 = vmatpush1.msra.mxu0 0.0
        %4669 = vmatprep.subr.mxu0 0.0
        %4670 = vmatpush1.msra.mxu0 0.0
        %4671 = vmatprep.subr.mxu0 0.0
        %4672 = vmatpush1.msra.mxu0 0.0
        %4673 = vmatprep.subr.mxu0 0.0
        %4674 = vmatpush1.msra.mxu0 0.0
        %4675 = vmatprep.subr.mxu0 0.0
        %4676 = vmatpush1.msra.mxu0 0.0
        %4677 = vmatprep.mubr.f32.mxu0 0.0
        %4678 = vmatmul.mubr.f32.gmra.mrb[0].mxu0 %v4611
        %v4679 = vpop.f32.mrb[0].mxu0
        %v4680 = vadd.f32 0.0, %v4679
        %v4681 = vpop.f32.mrb[0].mxu0
        %4682 = vdwg.mxu0
        %v4683 = vadd.f32 %v4197, %v4680
        %v4684 = vadd.f32 %v2728, %v4683
        %s4685 = scalar_lea.vmem %s9, 1
        %v4686 = vld [vmem:[%s4685] sm:$0x1]
        %s4687 = scalar_lea.vmem %s10, 1
        %v4688 = vld [vmem:[%s4687] sm:$0x1]
        %v4689 = vsel %vm563, %v4684, 0.0
        %4690 = vadd.xlane.f32.xlu0 %v4689
        %v4691 = vpop.xlane.xlu0 %4690
        %v4692 = vmul.f32 %v4691, %v2500
        %v4693 = vsub.f32 %v4684, %v4692
        %v4694 = vmul.f32 %v4693, %v4693
        %v4695 = vsel %vm563, %v4694, 0.0
        %4696 = vadd.xlane.f32.xlu0 %v4695
        %v4697 = vpop.xlane.xlu0 %4696
        %v4698 = vmul.f32 %v4697, %v2500
        %v4699 = vadd.f32 %v4698, 1e-05
        %v4700 = vrsqrt.pop %v4699
        %v4701 = vmul.f32 %v4693, %v4700
        %v4703 = vlaneseq
        %v4704 = vshrl.u32 %v4703, 7
        %v4705 = vsub.s32 0, %v4704
        %v4706 = vrot.slane %v4686, %v4705
        %v4708 = vmul.f32 %v4701, %v4706
        %v4710 = vlaneseq
        %v4711 = vshrl.u32 %v4710, 7
        %v4712 = vsub.s32 0, %v4711
        %v4713 = vrot.slane %v4688, %v4712
        %v4715 = vadd.f32 %v4708, %v4713
        %s4716 = scalar_lea.vmem %s11, 32
        %v4717 = vld [vmem:[%s4716] sm:$0xff]
        %v4718 = vld [vmem:[%s4716 + $0x8] sm:$0xff]
        %v4719 = vld [vmem:[%s4716 + $0x10] sm:$0xff]
        %v4720 = vld [vmem:[%s4716 + $0x18] sm:$0xff]
        %s4721 = scalar_lea.vmem %s12, 1
        %v4722 = vld [vmem:[%s4721] sm:$0x1]
        %v4724 = vlaneseq
        %v4725 = vshrl.u32 %v4724, 7
        %v4726 = vsub.s32 0, %v4725
        %v4727 = vrot.slane %v4722, %v4726
        %v4730 = vsel %vm563, %v4715, 0
        %4732 = vmatprep.subr.mxu0 0.0
        %4733 = vmatpush1.msra.mxu0 %v4717
        %4734 = vmatprep.subr.mxu0 0.0
        %4735 = vmatpush1.msra.mxu0 %v4718
        %4736 = vmatprep.subr.mxu0 0.0
        %4737 = vmatpush1.msra.mxu0 %v4719
        %4738 = vmatprep.subr.mxu0 0.0
        %4739 = vmatpush1.msra.mxu0 %v4720
        %4740 = vmatprep.subr.mxu0 0.0
        %4741 = vmatpush1.msra.mxu0 0.0
        %4742 = vmatprep.subr.mxu0 0.0
        %4743 = vmatpush1.msra.mxu0 0.0
        %4744 = vmatprep.subr.mxu0 0.0
        %4745 = vmatpush1.msra.mxu0 0.0
        %4746 = vmatprep.subr.mxu0 0.0
        %4747 = vmatpush1.msra.mxu0 0.0
        %4748 = vmatprep.subr.mxu0 0.0
        %4749 = vmatpush1.msra.mxu0 0.0
        %4750 = vmatprep.subr.mxu0 0.0
        %4751 = vmatpush1.msra.mxu0 0.0
        %4752 = vmatprep.subr.mxu0 0.0
        %4753 = vmatpush1.msra.mxu0 0.0
        %4754 = vmatprep.subr.mxu0 0.0
        %4755 = vmatpush1.msra.mxu0 0.0
        %4756 = vmatprep.subr.mxu0 0.0
        %4757 = vmatpush1.msra.mxu0 0.0
        %4758 = vmatprep.subr.mxu0 0.0
        %4759 = vmatpush1.msra.mxu0 0.0
        %4760 = vmatprep.subr.mxu0 0.0
        %4761 = vmatpush1.msra.mxu0 0.0
        %4762 = vmatprep.subr.mxu0 0.0
        %4763 = vmatpush1.msra.mxu0 0.0
        %4764 = vmatprep.subr.mxu0 0.0
        %4765 = vmatpush1.msra.mxu0 0.0
        %4766 = vmatprep.subr.mxu0 0.0
        %4767 = vmatpush1.msra.mxu0 0.0
        %4768 = vmatprep.subr.mxu0 0.0
        %4769 = vmatpush1.msra.mxu0 0.0
        %4770 = vmatprep.subr.mxu0 0.0
        %4771 = vmatpush1.msra.mxu0 0.0
        %4772 = vmatprep.subr.mxu0 0.0
        %4773 = vmatpush1.msra.mxu0 0.0
        %4774 = vmatprep.subr.mxu0 0.0
        %4775 = vmatpush1.msra.mxu0 0.0
        %4776 = vmatprep.subr.mxu0 0.0
        %4777 = vmatpush1.msra.mxu0 0.0
        %4778 = vmatprep.subr.mxu0 0.0
        %4779 = vmatpush1.msra.mxu0 0.0
        %4780 = vmatprep.subr.mxu0 0.0
        %4781 = vmatpush1.msra.mxu0 0.0
        %4782 = vmatprep.subr.mxu0 0.0
        %4783 = vmatpush1.msra.mxu0 0.0
        %4784 = vmatprep.subr.mxu0 0.0
        %4785 = vmatpush1.msra.mxu0 0.0
        %4786 = vmatprep.subr.mxu0 0.0
        %4787 = vmatpush1.msra.mxu0 0.0
        %4788 = vmatprep.subr.mxu0 0.0
        %4789 = vmatpush1.msra.mxu0 0.0
        %4790 = vmatprep.subr.mxu0 0.0
        %4791 = vmatpush1.msra.mxu0 0.0
        %4792 = vmatprep.subr.mxu0 0.0
        %4793 = vmatpush1.msra.mxu0 0.0
        %4794 = vmatprep.subr.mxu0 0.0
        %4795 = vmatpush1.msra.mxu0 0.0
        %4796 = vmatprep.mubr.f32.mxu0 0.0
        %4797 = vmatmul.mubr.f32.gmra.mrb[0].mxu0 %v4730
        %v4798 = vpop.f32.mrb[0].mxu0
        %v4799 = vadd.f32 %v4727, %v4798
        %v4800 = vpop.f32.mrb[0].mxu0
        %4801 = vdwg.mxu0
        %v4802 = vmax.f32 %v4799, 0.0
        %s4803 = scalar_lea.vmem %s13, 64
        %v4804 = vld [vmem:[%s4803] sm:$0xff]
        %v4805 = vld [vmem:[%s4803 + $0x8] sm:$0xff]
        %v4806 = vld [vmem:[%s4803 + $0x10] sm:$0xff]
        %v4807 = vld [vmem:[%s4803 + $0x18] sm:$0xff]
        %v4808 = vld [vmem:[%s4803 + $0x20] sm:$0xff]
        %v4809 = vld [vmem:[%s4803 + $0x28] sm:$0xff]
        %v4810 = vld [vmem:[%s4803 + $0x30] sm:$0xff]
        %v4811 = vld [vmem:[%s4803 + $0x38] sm:$0xff]
        %s4812 = scalar_lea.vmem %s14, 1
        %v4813 = vld [vmem:[%s4812] sm:$0x1]
        %v4815 = vlaneseq
        %v4816 = vshrl.u32 %v4815, 7
        %v4817 = vsub.s32 0, %v4816
        %v4818 = vrot.slane %v4813, %v4817
        %v4821 = vsel %vm2625, %v4802, 0
        %4823 = vmatprep.subr.mxu0 0.0
        %4824 = vmatpush1.msra.mxu0 %v4804
        %4825 = vmatprep.subr.mxu0 0.0
        %4826 = vmatpush1.msra.mxu0 %v4805
        %4827 = vmatprep.subr.mxu0 0.0
        %4828 = vmatpush1.msra.mxu0 %v4806
        %4829 = vmatprep.subr.mxu0 0.0
        %4830 = vmatpush1.msra.mxu0 %v4807
        %4831 = vmatprep.subr.mxu0 0.0
        %4832 = vmatpush1.msra.mxu0 %v4808
        %4833 = vmatprep.subr.mxu0 0.0
        %4834 = vmatpush1.msra.mxu0 %v4809
        %4835 = vmatprep.subr.mxu0 0.0
        %4836 = vmatpush1.msra.mxu0 %v4810
        %4837 = vmatprep.subr.mxu0 0.0
        %4838 = vmatpush1.msra.mxu0 %v4811
        %4839 = vmatprep.subr.mxu0 0.0
        %4840 = vmatpush1.msra.mxu0 0.0
        %4841 = vmatprep.subr.mxu0 0.0
        %4842 = vmatpush1.msra.mxu0 0.0
        %4843 = vmatprep.subr.mxu0 0.0
        %4844 = vmatpush1.msra.mxu0 0.0
        %4845 = vmatprep.subr.mxu0 0.0
        %4846 = vmatpush1.msra.mxu0 0.0
        %4847 = vmatprep.subr.mxu0 0.0
        %4848 = vmatpush1.msra.mxu0 0.0
        %4849 = vmatprep.subr.mxu0 0.0
        %4850 = vmatpush1.msra.mxu0 0.0
        %4851 = vmatprep.subr.mxu0 0.0
        %4852 = vmatpush1.msra.mxu0 0.0
        %4853 = vmatprep.subr.mxu0 0.0
        %4854 = vmatpush1.msra.mxu0 0.0
        %4855 = vmatprep.subr.mxu0 0.0
        %4856 = vmatpush1.msra.mxu0 0.0
        %4857 = vmatprep.subr.mxu0 0.0
        %4858 = vmatpush1.msra.mxu0 0.0
        %4859 = vmatprep.subr.mxu0 0.0
        %4860 = vmatpush1.msra.mxu0 0.0
        %4861 = vmatprep.subr.mxu0 0.0
        %4862 = vmatpush1.msra.mxu0 0.0
        %4863 = vmatprep.subr.mxu0 0.0
        %4864 = vmatpush1.msra.mxu0 0.0
        %4865 = vmatprep.subr.mxu0 0.0
        %4866 = vmatpush1.msra.mxu0 0.0
        %4867 = vmatprep.subr.mxu0 0.0
        %4868 = vmatpush1.msra.mxu0 0.0
        %4869 = vmatprep.subr.mxu0 0.0
        %4870 = vmatpush1.msra.mxu0 0.0
        %4871 = vmatprep.subr.mxu0 0.0
        %4872 = vmatpush1.msra.mxu0 0.0
        %4873 = vmatprep.subr.mxu0 0.0
        %4874 = vmatpush1.msra.mxu0 0.0
        %4875 = vmatprep.subr.mxu0 0.0
        %4876 = vmatpush1.msra.mxu0 0.0
        %4877 = vmatprep.subr.mxu0 0.0
        %4878 = vmatpush1.msra.mxu0 0.0
        %4879 = vmatprep.subr.mxu0 0.0
        %4880 = vmatpush1.msra.mxu0 0.0
        %4881 = vmatprep.subr.mxu0 0.0
        %4882 = vmatpush1.msra.mxu0 0.0
        %4883 = vmatprep.subr.mxu0 0.0
        %4884 = vmatpush1.msra.mxu0 0.0
        %4885 = vmatprep.subr.mxu0 0.0
        %4886 = vmatpush1.msra.mxu0 0.0
        %4887 = vmatprep.mubr.f32.mxu0 0.0
        %4888 = vmatmul.mubr.f32.gmra.mrb[0].mxu0 %v4821
        %v4889 = vpop.f32.mrb[0].mxu0
        %v4890 = vadd.f32 %v4818, %v4889
        %v4891 = vpop.f32.mrb[0].mxu0
        %4892 = vdwg.mxu0
        %v4893 = vadd.f32 %v4715, %v4890
        %s4894 = scalar_lea.vmem %s15, 1
        %v4895 = vld [vmem:[%s4894] sm:$0x1]
        %s4896 = scalar_lea.vmem %s16, 1
        %v4897 = vld [vmem:[%s4896] sm:$0x1]
        %v4898 = vsel %vm563, %v4893, 0.0
        %4899 = vadd.xlane.f32.xlu0 %v4898
        %v4900 = vpop.xlane.xlu0 %4899
        %v4901 = vmul.f32 %v4900, %v2500
        %v4902 = vsub.f32 %v4893, %v4901
        %v4903 = vmul.f32 %v4902, %v4902
        %v4904 = vsel %vm563, %v4903, 0.0
        %4905 = vadd.xlane.f32.xlu0 %v4904
        %v4906 = vpop.xlane.xlu0 %4905
        %v4907 = vmul.f32 %v4906, %v2500
        %v4908 = vadd.f32 %v4907, 1e-05
        %v4909 = vrsqrt.pop %v4908
        %v4910 = vmul.f32 %v4902, %v4909
        %v4912 = vlaneseq
        %v4913 = vshrl.u32 %v4912, 7
        %v4914 = vsub.s32 0, %v4913
        %v4915 = vrot.slane %v4895, %v4914
        %v4917 = vmul.f32 %v4910, %v4915
        %v4919 = vlaneseq
        %v4920 = vshrl.u32 %v4919, 7
        %v4921 = vsub.s32 0, %v4920
        %v4922 = vrot.slane %v4897, %v4921
        %v4924 = vadd.f32 %v4917, %v4922
        %4925 = vst.msk [vmem:[%s539] sm:$0xff] %vm563, %v4924
        %s4926 = sand.u32 %s401, 1
        %s4927 = scalar_lea.sflag [#allocation3], %s4926
        %s4928 = sand.u32 %s401, 1
        %s4929 = smul.addr %s4928, 8
        %s4930 = scalar_lea.vmem [#allocation2], %s4929
        // Predicated region
        $region89: #{tpu_custom_call.1} parent=87 // pred_check
          %p4931 = pneg %p411
        $region90: #{tpu_custom_call.1} parent=87 // pred_check_branch
          %4933 = sbr.rel (%p4931) target = $region92
        $region91: #{tpu_custom_call.1} parent=87 // pred_region
          %s4935 = ssub.s32 128, 128
          %4936 = vsyncadd %s4927, %s4935
          %s4937 = smul.addr %s31, 128
          %s4938 = scalar_lea.hbm %s17, %s4937
          %s4940 = sshll.u32 %s4930, 4
          %s4941 = int_to_ptr.vmem [resolvable:$true] %s4940
          %4943 = dma.vmem_to_hbm [thread:$0]  %s4941, 128, %s4938, %s4927
        $region92: #{tpu_custom_call.1} parent=87 // pred_fallthru
          _
      $region88: #{tpu_custom_call.1} parent=5 // pred_fallthru
        _
      %p4944 = scmp.le.s32.totalorder 2, %s26
      // Predicated region
      $region93: #{tpu_custom_call.1} parent=5 // pred_check
        %p4945 = pneg %p4944
      $region94: #{tpu_custom_call.1} parent=5 // pred_check_branch
        %4947 = sbr.rel (%p4945) target = $region96
      $region95: #{tpu_custom_call.1} parent=5 // pred_region
        %s4948 = ssub.s32 %s26, 2
        // Predicated region
        $region97: #{tpu_custom_call.1} parent=95 // pred_check
          %p4949 = pneg %p417
        $region98: #{tpu_custom_call.1} parent=95 // pred_check_branch
          %4951 = sbr.rel (%p4949) target = $region100
        $region99: #{tpu_custom_call.1} parent=95 // pred_region
          %s4952 = sand.u32 %s402, 1
          %s4953 = scalar_lea.sflag [#allocation3], %s4952
          %s4954 = sand.u32 %s402, 1
          %s4955 = smul.addr %s4954, 8
          %s4956 = scalar_lea.vmem [#allocation2], %s4955
          %4957 = dma.done %s4953, 128
        $region100: #{tpu_custom_call.1} parent=95 // pred_fallthru
          _
      $region96: #{tpu_custom_call.1} parent=5 // pred_fallthru
        _
    $region6: #{tpu_custom_call.1} parent=1 // loop_footer
      %s30 = sadd.s32 1, %s26
    $region7: #{tpu_custom_call.1} parent=1 // loop_footer_branch
      %25 = sbr.rel target = $region3
    $region8: #{tpu_custom_call.1} parent=1 // loop_exit
      _
    %4958 = vsyncpa [#allocation3], 1
    %s4959 = scalar_lea.sflag [#allocation3], 1
    %4960 = vsyncpa %s4959, 1

</llo_original>
